<compile_context>
chip_gen: v7x
topology: tpu7x:2x2x1
jax: 0.10.0
libtpu: 0.0.40
codegen_flags: <defaults>
</compile_context>

<pallas_src>
import jax
import jax.numpy as jnp
from jax.experimental import pallas as pl
from jax.experimental.pallas import tpu as pltpu

NUM_INPUT_DIM = 4
NUM_HIDDEN_DIM = 128
ROBERTA_HIDDEN = 768
FC3_DIM = 512
OUTPUT_DIM = 7
OUT_PAD = 128          # fc4 output padded to a full lane width
BN_EPS = 1e-5
MAX_TM = 512           # max batch-tile rows (VMEM stays well under 32 MiB)


def _round_up(x, m):
    return ((x + m - 1) // m) * m


def _choose_batch_tiling(batch):
    """Pick (tm, b_pad): tm is a multiple of 8, capped at MAX_TM, and the grid
    has >= 2 steps whenever the padded batch can be split — so both of v7x's
    TensorCores get work under dimension_semantics=("parallel",)."""
    b8 = _round_up(max(batch, 1), 8)
    if b8 <= 8:
        return b8, b8
    n_tiles = max(2, -(-b8 // MAX_TM))        # >= 2 tiles, <= MAX_TM rows/tile
    tm = _round_up(-(-b8 // n_tiles), 8)
    return tm, tm * n_tiles


def head_kernel(seq_ref, num_ref,
                wp_ref, bp_ref,
                w1_ref, b1_ref,
                w2_ref, b2_ref,
                w3a_ref, w3b_ref, b3_ref,
                w4_ref, b4_ref,
                out_ref):
    # --- RoBERTa pooler: tanh(dense(seq_repr)). tanh runs in bf16 so v6e/v7x
    #     use the bf16 EUP path and the result feeds the bf16 fc3 dot directly
    #     (v5e upcasts internally — still correct).
    pooled = jnp.tanh(
        (jnp.dot(seq_ref[...], wp_ref[...], preferred_element_type=jnp.float32)
         + bp_ref[...]).astype(jnp.bfloat16))            # [TM, 768] bf16

    # --- numerical branch: fc1 (eval-mode BatchNorm folded in) as 4 VPU
    #     broadcast-FMAs (K=4 is far too small for the MXU), ReLU, then fc2.
    num = num_ref[...]                                    # [TM, 4] f32
    w1 = w1_ref[...]                                      # [4, 128] f32 (BN-folded)
    h = num[:, 0:1] * w1[0:1, :]
    for k in range(1, NUM_INPUT_DIM):
        h = h + num[:, k:k + 1] * w1[k:k + 1, :]
    h = jnp.maximum(h + b1_ref[...], 0.0)                 # [TM, 128] f32

    num_feat = (jnp.dot(h.astype(jnp.bfloat16), w2_ref[...],
                        preferred_element_type=jnp.float32)
                + b2_ref[...])                            # [TM, 768] f32

    # --- fc3 on concat(pooled, num_feat) == pooled @ W3[:768] + num_feat @ W3[768:]
    #     (dropout p=0.5 is identity in eval mode)
    c = (jnp.dot(pooled, w3a_ref[...], preferred_element_type=jnp.float32)
         + jnp.dot(num_feat.astype(jnp.bfloat16), w3b_ref[...],
                   preferred_element_type=jnp.float32)
         + b3_ref[...])
    c = jnp.maximum(c, 0.0)                               # [TM, 512] f32

    # --- fc4 -> logits, padded to 128 lanes for lane-dense stores
    out_ref[...] = (jnp.dot(c.astype(jnp.bfloat16), w4_ref[...],
                            preferred_element_type=jnp.float32)
                    + b4_ref[...])


def roberta_with_numerical_forward(numerical_input, input_ids, attention_mask,
                                   params, tm=None):
    """Forward pass. numerical_input: [B,4] f32, input_ids: [B,S] i32,
    attention_mask: [B,S] {0,1}. tm: optional batch-tile override."""
    # ---- glue (plain JAX, jitted together): synthetic embedding + masked mean.
    #      Gather in bf16 (halves HBM traffic of the [B,S,768] intermediate),
    #      accumulate the masked sum in f32.
    # TODO(synk): full RoBERTa transformer encoder stack is not implemented.
    emb = jnp.take(params["embedding"].astype(jnp.bfloat16), input_ids, axis=0)
    mask_f32 = attention_mask.astype(jnp.float32)                 # [B, S]
    summed = jnp.einsum("bs,bsd->bd", mask_f32.astype(jnp.bfloat16), emb,
                        preferred_element_type=jnp.float32)       # [B, 768] f32
    denom = jnp.maximum(jnp.sum(mask_f32, axis=1, keepdims=True), 1.0)
    seq_repr = summed / denom                                     # [B, 768] f32

    B = numerical_input.shape[0]
    if tm is None:
        tm, B_pad = _choose_batch_tiling(B)
    else:
        B_pad = _round_up(B, tm)
    grid = (B_pad // tm,)

    # ---- parameter prep (folded into the jit): BN fold, bf16 casts, fc4 pad
    scale = params["bn_gamma"] * jax.lax.rsqrt(params["bn_var"] + BN_EPS)
    w1_eff = params["w1"] * scale                                  # [4, 128]
    b1_eff = (params["b1"] - params["bn_mean"]) * scale + params["bn_beta"]
    w4p = jnp.zeros((FC3_DIM, OUT_PAD), jnp.float32).at[:, :OUTPUT_DIM].set(
        params["w4"])
    b4p = jnp.zeros((1, OUT_PAD), jnp.float32).at[:, :OUTPUT_DIM].set(
        params["b4"])

    seq_p = jnp.pad(seq_repr, ((0, B_pad - B), (0, 0))).astype(jnp.bfloat16)
    num_p = jnp.pad(numerical_input.astype(jnp.float32),
                    ((0, B_pad - B), (0, 0)))

    kernel_inputs = (
        seq_p, num_p,
        params["wp"].astype(jnp.bfloat16), params["bp"],
        w1_eff, b1_eff,
        params["w2"].astype(jnp.bfloat16), params["b2"],
        params["w3a"].astype(jnp.bfloat16),
        params["w3b"].astype(jnp.bfloat16), params["b3"],
        w4p.astype(jnp.bfloat16), b4p,
    )

    def act_spec(width):
        return pl.BlockSpec((tm, width), lambda i: (i, 0))

    def weight_spec(shape):
        # constant index_map -> block index never changes -> DMA'd once and
        # kept VMEM-resident across all batch tiles.
        return pl.BlockSpec(shape, lambda i: (0, 0))

    in_specs = [
        act_spec(ROBERTA_HIDDEN),                           # seq_repr
        act_spec(NUM_INPUT_DIM),                            # numerical
        weight_spec((ROBERTA_HIDDEN, ROBERTA_HIDDEN)),      # wp
        weight_spec((1, ROBERTA_HIDDEN)),                   # bp
        weight_spec((NUM_INPUT_DIM, NUM_HIDDEN_DIM)),       # w1 (BN-folded)
        weight_spec((1, NUM_HIDDEN_DIM)),                   # b1 (BN-folded)
        weight_spec((NUM_HIDDEN_DIM, ROBERTA_HIDDEN)),      # w2
        weight_spec((1, ROBERTA_HIDDEN)),                   # b2
        weight_spec((ROBERTA_HIDDEN, FC3_DIM)),             # w3a
        weight_spec((ROBERTA_HIDDEN, FC3_DIM)),             # w3b
        weight_spec((1, FC3_DIM)),                          # b3
        weight_spec((FC3_DIM, OUT_PAD)),                    # w4 (padded)
        weight_spec((1, OUT_PAD)),                          # b4 (padded)
    ]

    flops = 2 * B_pad * (ROBERTA_HIDDEN * ROBERTA_HIDDEN
                         + NUM_INPUT_DIM * NUM_HIDDEN_DIM
                         + NUM_HIDDEN_DIM * ROBERTA_HIDDEN
                         + 2 * ROBERTA_HIDDEN * FC3_DIM
                         + FC3_DIM * OUT_PAD)
    bytes_accessed = int(sum(int(x.size) * x.dtype.itemsize
                             for x in kernel_inputs)
                         + B_pad * OUT_PAD * 4)
    cost = pl.CostEstimate(flops=int(flops),
                           transcendentals=int(B_pad * ROBERTA_HIDDEN),
                           bytes_accessed=bytes_accessed)

    logits_pad = pl.pallas_call(
        head_kernel,
        out_shape=jax.ShapeDtypeStruct((B_pad, OUT_PAD), jnp.float32),
        grid=grid,
        in_specs=in_specs,
        out_specs=pl.BlockSpec((tm, OUT_PAD), lambda i: (i, 0)),
        compiler_params=pltpu.CompilerParams(
            dimension_semantics=("parallel",),
            vmem_limit_bytes=32 << 20),
        cost_estimate=cost,
    )(*kernel_inputs)

    return logits_pad[:B, :OUTPUT_DIM]


def init_params(key, vocab_size=100):
    ks = jax.random.split(key, 12)

    def lin(k, fan_in, fan_out):
        scale = 1.0 / jnp.sqrt(fan_in)
        kw, kb = jax.random.split(k)
        w = jax.random.uniform(kw, (fan_in, fan_out), jnp.float32, -scale, scale)
        b = jax.random.uniform(kb, (1, fan_out), jnp.float32, -scale, scale)
        return w, b

    embedding = 0.02 * jax.random.normal(ks[0], (vocab_size, ROBERTA_HIDDEN),
                                         jnp.float32)
    wp, bp = lin(ks[1], ROBERTA_HIDDEN, ROBERTA_HIDDEN)      # roberta pooler dense
    w1, b1 = lin(ks[2], NUM_INPUT_DIM, NUM_HIDDEN_DIM)       # fc1
    w2, b2 = lin(ks[3], NUM_HIDDEN_DIM, ROBERTA_HIDDEN)      # fc2
    w3, b3 = lin(ks[4], 2 * ROBERTA_HIDDEN, FC3_DIM)         # fc3 (on concat)
    w4, b4 = lin(ks[5], FC3_DIM, OUTPUT_DIM)                 # fc4

    return dict(
        embedding=embedding,
        wp=wp, bp=bp,
        w1=w1, b1=b1,
        # BatchNorm1d defaults (PyTorch): gamma=1, beta=0, mean=0, var=1
        bn_gamma=jnp.ones((1, NUM_HIDDEN_DIM), jnp.float32),
        bn_beta=jnp.zeros((1, NUM_HIDDEN_DIM), jnp.float32),
        bn_mean=jnp.zeros((1, NUM_HIDDEN_DIM), jnp.float32),
        bn_var=jnp.ones((1, NUM_HIDDEN_DIM), jnp.float32),
        w2=w2, b2=b2,
        w3a=w3[:ROBERTA_HIDDEN, :], w3b=w3[ROBERTA_HIDDEN:, :], b3=b3,
        w4=w4, b4=b4,
    )


if __name__ == "__main__":
    key = jax.random.PRNGKey(0)
    k_param, k_num, k_ids = jax.random.split(key, 3)

    B, S = 2, 8
    params = init_params(k_param)

    numerical_input = jax.random.normal(k_num, (B, NUM_INPUT_DIM), jnp.float32)
    input_ids = jax.random.randint(k_ids, (B, S), 0, 100, dtype=jnp.int32)
    attention_mask = jnp.ones((B, S), jnp.float32)

    logits = jax.jit(roberta_with_numerical_forward)(
        numerical_input, input_ids, attention_mask, params)
    jax.block_until_ready(logits)
    assert logits.shape == (B, OUTPUT_DIM)
    assert bool(jnp.all(jnp.isfinite(logits)))
    print("KERNEL_OK")
</pallas_src>

<mosaic_0001>
module attributes {stable_mosaic.version = 11 : i64} {
  func.func @head_kernel(%arg0: i32, %arg1: memref<8x768xbf16, #tpu.memory_space<vmem>>, %arg2: memref<8x4xf32, #tpu.memory_space<vmem>>, %arg3: memref<768x768xbf16, #tpu.memory_space<vmem>>, %arg4: memref<1x768xf32, #tpu.memory_space<vmem>>, %arg5: memref<4x128xf32, #tpu.memory_space<vmem>>, %arg6: memref<1x128xf32, #tpu.memory_space<vmem>>, %arg7: memref<128x768xbf16, #tpu.memory_space<vmem>>, %arg8: memref<1x768xf32, #tpu.memory_space<vmem>>, %arg9: memref<768x512xbf16, #tpu.memory_space<vmem>>, %arg10: memref<768x512xbf16, #tpu.memory_space<vmem>>, %arg11: memref<1x512xf32, #tpu.memory_space<vmem>>, %arg12: memref<512x128xbf16, #tpu.memory_space<vmem>>, %arg13: memref<1x128xf32, #tpu.memory_space<vmem>>, %arg14: memref<8x128xf32, #tpu.memory_space<vmem>>) attributes {dimension_semantics = [#tpu.dimension_semantics<parallel>], iteration_bounds = array<i64: 1>, scalar_prefetch = 0 : i64, scratch_operands = 0 : i64, tpu.core_type = #tpu.core_type<tc>, window_params = [{transform_indices = @transform_0, window_bounds = array<i64: 8, 768>}, {transform_indices = @transform_1, window_bounds = array<i64: 8, 4>}, {pipeline_mode = #tpu.pipeline_mode<synchronous>, transform_indices = @transform_2, window_bounds = array<i64: 768, 768>}, {pipeline_mode = #tpu.pipeline_mode<synchronous>, transform_indices = @transform_3, window_bounds = array<i64: 1, 768>}, {pipeline_mode = #tpu.pipeline_mode<synchronous>, transform_indices = @transform_4, window_bounds = array<i64: 4, 128>}, {pipeline_mode = #tpu.pipeline_mode<synchronous>, transform_indices = @transform_5, window_bounds = array<i64: 1, 128>}, {pipeline_mode = #tpu.pipeline_mode<synchronous>, transform_indices = @transform_6, window_bounds = array<i64: 128, 768>}, {pipeline_mode = #tpu.pipeline_mode<synchronous>, transform_indices = @transform_7, window_bounds = array<i64: 1, 768>}, {pipeline_mode = #tpu.pipeline_mode<synchronous>, transform_indices = @transform_8, window_bounds = array<i64: 768, 512>}, {pipeline_mode = #tpu.pipeline_mode<synchronous>, transform_indices = @transform_9, window_bounds = array<i64: 768, 512>}, {pipeline_mode = #tpu.pipeline_mode<synchronous>, transform_indices = @transform_10, window_bounds = array<i64: 1, 512>}, {pipeline_mode = #tpu.pipeline_mode<synchronous>, transform_indices = @transform_11, window_bounds = array<i64: 512, 128>}, {pipeline_mode = #tpu.pipeline_mode<synchronous>, transform_indices = @transform_12, window_bounds = array<i64: 1, 128>}, {transform_indices = @transform_13, window_bounds = array<i64: 8, 128>}]} {
    %c0 = arith.constant 0 : index
    %c0_0 = arith.constant 0 : index
    %0 = vector.load %arg1[%c0, %c0_0] : memref<8x768xbf16, #tpu.memory_space<vmem>>, vector<8x768xbf16>
    %c0_1 = arith.constant 0 : index
    %c0_2 = arith.constant 0 : index
    %1 = vector.load %arg3[%c0_1, %c0_2] : memref<768x768xbf16, #tpu.memory_space<vmem>>, vector<768x768xbf16>
    %cst = arith.constant dense<0.000000e+00> : vector<8x768xf32>
    %2 = tpu.matmul %0, %1, %cst {dimension_numbers = #tpu.dot_dimension_numbers<[1], [0], [0], [1], [0, 0, 1, 1], [], []>} : vector<8x768xbf16>, vector<768x768xbf16>, vector<8x768xf32> -> vector<8x768xf32>
    %c0_3 = arith.constant 0 : index
    %c0_4 = arith.constant 0 : index
    %3 = vector.load %arg4[%c0_3, %c0_4] : memref<1x768xf32, #tpu.memory_space<vmem>>, vector<1x768xf32>
    %4 = vector.broadcast %3 : vector<1x768xf32> to vector<8x768xf32>
    %5 = arith.addf %2, %4 : vector<8x768xf32>
    %6 = arith.truncf %5 : vector<8x768xf32> to vector<8x768xbf16>
    %7 = math.tanh %6 : vector<8x768xbf16>
    %c0_5 = arith.constant 0 : index
    %c0_6 = arith.constant 0 : index
    %8 = vector.load %arg2[%c0_5, %c0_6] : memref<8x4xf32, #tpu.memory_space<vmem>>, vector<8x4xf32>
    %c0_7 = arith.constant 0 : index
    %c0_8 = arith.constant 0 : index
    %9 = vector.load %arg5[%c0_7, %c0_8] : memref<4x128xf32, #tpu.memory_space<vmem>>, vector<4x128xf32>
    %10 = vector.extract_strided_slice %8 {offsets = [0, 0], sizes = [8, 1], strides = [1, 1]} : vector<8x4xf32> to vector<8x1xf32>
    %11 = vector.extract_strided_slice %9 {offsets = [0, 0], sizes = [1, 128], strides = [1, 1]} : vector<4x128xf32> to vector<1x128xf32>
    %12 = vector.broadcast %10 : vector<8x1xf32> to vector<8x128xf32>
    %13 = vector.broadcast %11 : vector<1x128xf32> to vector<8x128xf32>
    %14 = arith.mulf %12, %13 : vector<8x128xf32>
    %15 = vector.extract_strided_slice %8 {offsets = [0, 1], sizes = [8, 1], strides = [1, 1]} : vector<8x4xf32> to vector<8x1xf32>
    %16 = vector.extract_strided_slice %9 {offsets = [1, 0], sizes = [1, 128], strides = [1, 1]} : vector<4x128xf32> to vector<1x128xf32>
    %17 = vector.broadcast %15 : vector<8x1xf32> to vector<8x128xf32>
    %18 = vector.broadcast %16 : vector<1x128xf32> to vector<8x128xf32>
    %19 = arith.mulf %17, %18 : vector<8x128xf32>
    %20 = arith.addf %14, %19 : vector<8x128xf32>
    %21 = vector.extract_strided_slice %8 {offsets = [0, 2], sizes = [8, 1], strides = [1, 1]} : vector<8x4xf32> to vector<8x1xf32>
    %22 = vector.extract_strided_slice %9 {offsets = [2, 0], sizes = [1, 128], strides = [1, 1]} : vector<4x128xf32> to vector<1x128xf32>
    %23 = vector.broadcast %21 : vector<8x1xf32> to vector<8x128xf32>
    %24 = vector.broadcast %22 : vector<1x128xf32> to vector<8x128xf32>
    %25 = arith.mulf %23, %24 : vector<8x128xf32>
    %26 = arith.addf %20, %25 : vector<8x128xf32>
    %27 = vector.extract_strided_slice %8 {offsets = [0, 3], sizes = [8, 1], strides = [1, 1]} : vector<8x4xf32> to vector<8x1xf32>
    %28 = vector.extract_strided_slice %9 {offsets = [3, 0], sizes = [1, 128], strides = [1, 1]} : vector<4x128xf32> to vector<1x128xf32>
    %29 = vector.broadcast %27 : vector<8x1xf32> to vector<8x128xf32>
    %30 = vector.broadcast %28 : vector<1x128xf32> to vector<8x128xf32>
    %31 = arith.mulf %29, %30 : vector<8x128xf32>
    %32 = arith.addf %26, %31 : vector<8x128xf32>
    %c0_9 = arith.constant 0 : index
    %c0_10 = arith.constant 0 : index
    %33 = vector.load %arg6[%c0_9, %c0_10] : memref<1x128xf32, #tpu.memory_space<vmem>>, vector<1x128xf32>
    %34 = vector.broadcast %33 : vector<1x128xf32> to vector<8x128xf32>
    %35 = arith.addf %32, %34 : vector<8x128xf32>
    %cst_11 = arith.constant 0.000000e+00 : f32
    %36 = vector.broadcast %cst_11 : f32 to vector<8x128xf32>
    %37 = arith.maximumf %35, %36 : vector<8x128xf32>
    %38 = arith.truncf %37 : vector<8x128xf32> to vector<8x128xbf16>
    %c0_12 = arith.constant 0 : index
    %c0_13 = arith.constant 0 : index
    %39 = vector.load %arg7[%c0_12, %c0_13] : memref<128x768xbf16, #tpu.memory_space<vmem>>, vector<128x768xbf16>
    %cst_14 = arith.constant dense<0.000000e+00> : vector<8x768xf32>
    %40 = tpu.matmul %38, %39, %cst_14 {dimension_numbers = #tpu.dot_dimension_numbers<[1], [0], [0], [1], [0, 0, 1, 1], [], []>} : vector<8x128xbf16>, vector<128x768xbf16>, vector<8x768xf32> -> vector<8x768xf32>
    %c0_15 = arith.constant 0 : index
    %c0_16 = arith.constant 0 : index
    %41 = vector.load %arg8[%c0_15, %c0_16] : memref<1x768xf32, #tpu.memory_space<vmem>>, vector<1x768xf32>
    %42 = vector.broadcast %41 : vector<1x768xf32> to vector<8x768xf32>
    %43 = arith.addf %40, %42 : vector<8x768xf32>
    %c0_17 = arith.constant 0 : index
    %c0_18 = arith.constant 0 : index
    %44 = vector.load %arg9[%c0_17, %c0_18] : memref<768x512xbf16, #tpu.memory_space<vmem>>, vector<768x512xbf16>
    %cst_19 = arith.constant dense<0.000000e+00> : vector<8x512xf32>
    %45 = tpu.matmul %7, %44, %cst_19 {dimension_numbers = #tpu.dot_dimension_numbers<[1], [0], [0], [1], [0, 0, 1, 1], [], []>} : vector<8x768xbf16>, vector<768x512xbf16>, vector<8x512xf32> -> vector<8x512xf32>
    %46 = arith.truncf %43 : vector<8x768xf32> to vector<8x768xbf16>
    %c0_20 = arith.constant 0 : index
    %c0_21 = arith.constant 0 : index
    %47 = vector.load %arg10[%c0_20, %c0_21] : memref<768x512xbf16, #tpu.memory_space<vmem>>, vector<768x512xbf16>
    %cst_22 = arith.constant dense<0.000000e+00> : vector<8x512xf32>
    %48 = tpu.matmul %46, %47, %cst_22 {dimension_numbers = #tpu.dot_dimension_numbers<[1], [0], [0], [1], [0, 0, 1, 1], [], []>} : vector<8x768xbf16>, vector<768x512xbf16>, vector<8x512xf32> -> vector<8x512xf32>
    %49 = arith.addf %45, %48 : vector<8x512xf32>
    %c0_23 = arith.constant 0 : index
    %c0_24 = arith.constant 0 : index
    %50 = vector.load %arg11[%c0_23, %c0_24] : memref<1x512xf32, #tpu.memory_space<vmem>>, vector<1x512xf32>
    %51 = vector.broadcast %50 : vector<1x512xf32> to vector<8x512xf32>
    %52 = arith.addf %49, %51 : vector<8x512xf32>
    %cst_25 = arith.constant 0.000000e+00 : f32
    %53 = vector.broadcast %cst_25 : f32 to vector<8x512xf32>
    %54 = arith.maximumf %52, %53 : vector<8x512xf32>
    %55 = arith.truncf %54 : vector<8x512xf32> to vector<8x512xbf16>
    %c0_26 = arith.constant 0 : index
    %c0_27 = arith.constant 0 : index
    %56 = vector.load %arg12[%c0_26, %c0_27] : memref<512x128xbf16, #tpu.memory_space<vmem>>, vector<512x128xbf16>
    %cst_28 = arith.constant dense<0.000000e+00> : vector<8x128xf32>
    %57 = tpu.matmul %55, %56, %cst_28 {dimension_numbers = #tpu.dot_dimension_numbers<[1], [0], [0], [1], [0, 0, 1, 1], [], []>} : vector<8x512xbf16>, vector<512x128xbf16>, vector<8x128xf32> -> vector<8x128xf32>
    %c0_29 = arith.constant 0 : index
    %c0_30 = arith.constant 0 : index
    %58 = vector.load %arg13[%c0_29, %c0_30] : memref<1x128xf32, #tpu.memory_space<vmem>>, vector<1x128xf32>
    %59 = vector.broadcast %58 : vector<1x128xf32> to vector<8x128xf32>
    %60 = arith.addf %57, %59 : vector<8x128xf32>
    %c0_31 = arith.constant 0 : index
    %c0_32 = arith.constant 0 : index
    %61 = vector.load %arg14[%c0_31, %c0_32] : memref<8x128xf32, #tpu.memory_space<vmem>>, vector<8x128xf32>
    tpu.vector_store %arg14[%c0_31, %c0_32], %60 {strides = array<i32>} : memref<8x128xf32, #tpu.memory_space<vmem>>, vector<8x128xf32>,
    return
  }
  func.func @transform_0(%arg0: i32) -> (i32, i32) {
    %c0_i32 = arith.constant 0 : i32
    %c0_i32_0 = arith.constant 0 : i32
    return %arg0, %c0_i32 : i32, i32
  }
  func.func @transform_1(%arg0: i32) -> (i32, i32) {
    %c0_i32 = arith.constant 0 : i32
    %c0_i32_0 = arith.constant 0 : i32
    return %arg0, %c0_i32 : i32, i32
  }
  func.func @transform_2(%arg0: i32) -> (i32, i32) {
    %c0_i32 = arith.constant 0 : i32
    %c0_i32_0 = arith.constant 0 : i32
    %c0_i32_1 = arith.constant 0 : i32
    return %c0_i32, %c0_i32_0 : i32, i32
  }
  func.func @transform_3(%arg0: i32) -> (i32, i32) {
    %c0_i32 = arith.constant 0 : i32
    %c0_i32_0 = arith.constant 0 : i32
    %c0_i32_1 = arith.constant 0 : i32
    return %c0_i32, %c0_i32_0 : i32, i32
  }
  func.func @transform_4(%arg0: i32) -> (i32, i32) {
    %c0_i32 = arith.constant 0 : i32
    %c0_i32_0 = arith.constant 0 : i32
    %c0_i32_1 = arith.constant 0 : i32
    return %c0_i32, %c0_i32_0 : i32, i32
  }
  func.func @transform_5(%arg0: i32) -> (i32, i32) {
    %c0_i32 = arith.constant 0 : i32
    %c0_i32_0 = arith.constant 0 : i32
    %c0_i32_1 = arith.constant 0 : i32
    return %c0_i32, %c0_i32_0 : i32, i32
  }
  func.func @transform_6(%arg0: i32) -> (i32, i32) {
    %c0_i32 = arith.constant 0 : i32
    %c0_i32_0 = arith.constant 0 : i32
    %c0_i32_1 = arith.constant 0 : i32
    return %c0_i32, %c0_i32_0 : i32, i32
  }
  func.func @transform_7(%arg0: i32) -> (i32, i32) {
    %c0_i32 = arith.constant 0 : i32
    %c0_i32_0 = arith.constant 0 : i32
    %c0_i32_1 = arith.constant 0 : i32
    return %c0_i32, %c0_i32_0 : i32, i32
  }
  func.func @transform_8(%arg0: i32) -> (i32, i32) {
    %c0_i32 = arith.constant 0 : i32
    %c0_i32_0 = arith.constant 0 : i32
    %c0_i32_1 = arith.constant 0 : i32
    return %c0_i32, %c0_i32_0 : i32, i32
  }
  func.func @transform_9(%arg0: i32) -> (i32, i32) {
    %c0_i32 = arith.constant 0 : i32
    %c0_i32_0 = arith.constant 0 : i32
    %c0_i32_1 = arith.constant 0 : i32
    return %c0_i32, %c0_i32_0 : i32, i32
  }
  func.func @transform_10(%arg0: i32) -> (i32, i32) {
    %c0_i32 = arith.constant 0 : i32
    %c0_i32_0 = arith.constant 0 : i32
    %c0_i32_1 = arith.constant 0 : i32
    return %c0_i32, %c0_i32_0 : i32, i32
  }
  func.func @transform_11(%arg0: i32) -> (i32, i32) {
    %c0_i32 = arith.constant 0 : i32
    %c0_i32_0 = arith.constant 0 : i32
    %c0_i32_1 = arith.constant 0 : i32
    return %c0_i32, %c0_i32_0 : i32, i32
  }
  func.func @transform_12(%arg0: i32) -> (i32, i32) {
    %c0_i32 = arith.constant 0 : i32
    %c0_i32_0 = arith.constant 0 : i32
    %c0_i32_1 = arith.constant 0 : i32
    return %c0_i32, %c0_i32_0 : i32, i32
  }
  func.func @transform_13(%arg0: i32) -> (i32, i32) {
    %c0_i32 = arith.constant 0 : i32
    %c0_i32_0 = arith.constant 0 : i32
    return %arg0, %c0_i32 : i32, i32
  }
}

</mosaic_0001>

<llo_original>
// kernel: roberta_with_numerical_forward.1
$region0: #{roberta_with_numerical_forward.1}
  #allocation0 [shape = 'u32[]', space=smem, size = 0x4, offset = 0x4, fixed_abs, tag = 'smem constant byte address 0x4 - core index']
  #allocation1 [shape = 'u32[144,128]{1,0:T(1,128)}', space=vmem, size = 0x12000, scoped, tag = 'internal scratch']
  %s0 = inlined_call_operand.vmem [shape: bf16[8,768], index: 0, kind: input, shape index: {}]
  %s1 = inlined_call_operand.vmem [shape: f32[8,4], index: 1, kind: input, shape index: {}]
  %s2 = inlined_call_operand.vmem [shape: bf16[768,768], index: 2, kind: input, shape index: {}]
  %s3 = inlined_call_operand.vmem [shape: f32[1,768], index: 3, kind: input, shape index: {}]
  %s4 = inlined_call_operand.vmem [shape: f32[4,128], index: 4, kind: input, shape index: {}]
  %s5 = inlined_call_operand.vmem [shape: f32[1,128], index: 5, kind: input, shape index: {}]
  %s6 = inlined_call_operand.vmem [shape: bf16[128,768], index: 6, kind: input, shape index: {}]
  %s7 = inlined_call_operand.vmem [shape: f32[1,768], index: 7, kind: input, shape index: {}]
  %s8 = inlined_call_operand.vmem [shape: bf16[768,512], index: 8, kind: input, shape index: {}]
  %s9 = inlined_call_operand.vmem [shape: bf16[768,512], index: 9, kind: input, shape index: {}]
  %s10 = inlined_call_operand.vmem [shape: f32[1,512], index: 10, kind: input, shape index: {}]
  %s11 = inlined_call_operand.vmem [shape: bf16[512,128], index: 11, kind: input, shape index: {}]
  %s12 = inlined_call_operand.vmem [shape: f32[1,128], index: 12, kind: input, shape index: {}]
  %s13 = inlined_call_operand.vmem [shape: f32[8,128], index: 13, kind: output, shape index: {}]
  %s14 = sld [smem:[#allocation0]]
  $region62: #{roberta_with_numerical_forward.1} parent=0
    _
  %s16 = ssub.s32 1, %s14
  %s17 = scalar_select 0, %s16, %s14
  // Predicated region
  $region2: #{roberta_with_numerical_forward.1} parent=0 // pred_check
    _
  $region3: #{roberta_with_numerical_forward.1} parent=0 // pred_check_branch
    %19 = sbr.rel (0) target = $region5
  $region4: #{roberta_with_numerical_forward.1} parent=0 // pred_region
    _
  $region5: #{roberta_with_numerical_forward.1} parent=0 // pred_fallthru
    _
  // Predicated region
  $region6: #{roberta_with_numerical_forward.1} parent=0 // pred_check
    _
  $region7: #{roberta_with_numerical_forward.1} parent=0 // pred_check_branch
    %21 = sbr.rel (0) target = $region9
  $region8: #{roberta_with_numerical_forward.1} parent=0 // pred_region
    _
  $region9: #{roberta_with_numerical_forward.1} parent=0 // pred_fallthru
    _
  // Predicated region
  $region10: #{roberta_with_numerical_forward.1} parent=0 // pred_check
    _
  $region11: #{roberta_with_numerical_forward.1} parent=0 // pred_check_branch
    %23 = sbr.rel (0) target = $region13
  $region12: #{roberta_with_numerical_forward.1} parent=0 // pred_region
    _
  $region13: #{roberta_with_numerical_forward.1} parent=0 // pred_fallthru
    _
  // Predicated region
  $region14: #{roberta_with_numerical_forward.1} parent=0 // pred_check
    _
  $region15: #{roberta_with_numerical_forward.1} parent=0 // pred_check_branch
    %25 = sbr.rel (0) target = $region17
  $region16: #{roberta_with_numerical_forward.1} parent=0 // pred_region
    _
  $region17: #{roberta_with_numerical_forward.1} parent=0 // pred_fallthru
    _
  // Predicated region
  $region18: #{roberta_with_numerical_forward.1} parent=0 // pred_check
    _
  $region19: #{roberta_with_numerical_forward.1} parent=0 // pred_check_branch
    %27 = sbr.rel (0) target = $region21
  $region20: #{roberta_with_numerical_forward.1} parent=0 // pred_region
    _
  $region21: #{roberta_with_numerical_forward.1} parent=0 // pred_fallthru
    _
  // Predicated region
  $region22: #{roberta_with_numerical_forward.1} parent=0 // pred_check
    _
  $region23: #{roberta_with_numerical_forward.1} parent=0 // pred_check_branch
    %29 = sbr.rel (0) target = $region25
  $region24: #{roberta_with_numerical_forward.1} parent=0 // pred_region
    _
  $region25: #{roberta_with_numerical_forward.1} parent=0 // pred_fallthru
    _
  // Predicated region
  $region26: #{roberta_with_numerical_forward.1} parent=0 // pred_check
    _
  $region27: #{roberta_with_numerical_forward.1} parent=0 // pred_check_branch
    %31 = sbr.rel (0) target = $region29
  $region28: #{roberta_with_numerical_forward.1} parent=0 // pred_region
    _
  $region29: #{roberta_with_numerical_forward.1} parent=0 // pred_fallthru
    _
  // Predicated region
  $region30: #{roberta_with_numerical_forward.1} parent=0 // pred_check
    _
  $region31: #{roberta_with_numerical_forward.1} parent=0 // pred_check_branch
    %33 = sbr.rel (0) target = $region33
  $region32: #{roberta_with_numerical_forward.1} parent=0 // pred_region
    _
  $region33: #{roberta_with_numerical_forward.1} parent=0 // pred_fallthru
    _
  // Predicated region
  $region34: #{roberta_with_numerical_forward.1} parent=0 // pred_check
    _
  $region35: #{roberta_with_numerical_forward.1} parent=0 // pred_check_branch
    %35 = sbr.rel (0) target = $region37
  $region36: #{roberta_with_numerical_forward.1} parent=0 // pred_region
    _
  $region37: #{roberta_with_numerical_forward.1} parent=0 // pred_fallthru
    _
  // Predicated region
  $region38: #{roberta_with_numerical_forward.1} parent=0 // pred_check
    _
  $region39: #{roberta_with_numerical_forward.1} parent=0 // pred_check_branch
    %37 = sbr.rel (0) target = $region41
  $region40: #{roberta_with_numerical_forward.1} parent=0 // pred_region
    _
  $region41: #{roberta_with_numerical_forward.1} parent=0 // pred_fallthru
    _
  // Predicated region
  $region42: #{roberta_with_numerical_forward.1} parent=0 // pred_check
    _
  $region43: #{roberta_with_numerical_forward.1} parent=0 // pred_check_branch
    %39 = sbr.rel (0) target = $region45
  $region44: #{roberta_with_numerical_forward.1} parent=0 // pred_region
    _
  $region45: #{roberta_with_numerical_forward.1} parent=0 // pred_fallthru
    _
  // Predicated region
  $region46: #{roberta_with_numerical_forward.1} parent=0 // pred_check
    _
  $region47: #{roberta_with_numerical_forward.1} parent=0 // pred_check_branch
    %41 = sbr.rel (0) target = $region49
  $region48: #{roberta_with_numerical_forward.1} parent=0 // pred_region
    _
  $region49: #{roberta_with_numerical_forward.1} parent=0 // pred_fallthru
    _
  // Predicated region
  $region50: #{roberta_with_numerical_forward.1} parent=0 // pred_check
    _
  $region51: #{roberta_with_numerical_forward.1} parent=0 // pred_check_branch
    %43 = sbr.rel (0) target = $region53
  $region52: #{roberta_with_numerical_forward.1} parent=0 // pred_region
    _
  $region53: #{roberta_with_numerical_forward.1} parent=0 // pred_fallthru
    _
  %v45 = vld [vmem:[%s0] sm:$0xff]
  %v46 = vld [vmem:[%s0 + $0x8] sm:$0xff]
  %v47 = vld [vmem:[%s0 + $0x10] sm:$0xff]
  %v48 = vld [vmem:[%s2] sm:$0xff]
  %v49 = vld [vmem:[%s2 + $0x8] sm:$0xff]
  %v50 = vld [vmem:[%s2 + $0x10] sm:$0xff]
  %v51 = vld [vmem:[%s2 + $0x18] sm:$0xff]
  %v52 = vld [vmem:[%s2 + $0x20] sm:$0xff]
  %v53 = vld [vmem:[%s2 + $0x28] sm:$0xff]
  %v54 = vld [vmem:[%s2 + $0x30] sm:$0xff]
  %v55 = vld [vmem:[%s2 + $0x38] sm:$0xff]
  %v56 = vld [vmem:[%s2 + $0x40] sm:$0xff]
  %v57 = vld [vmem:[%s2 + $0x48] sm:$0xff]
  %v58 = vld [vmem:[%s2 + $0x50] sm:$0xff]
  %v59 = vld [vmem:[%s2 + $0x58] sm:$0xff]
  %v60 = vld [vmem:[%s2 + $0x60] sm:$0xff]
  %v61 = vld [vmem:[%s2 + $0x68] sm:$0xff]
  %v62 = vld [vmem:[%s2 + $0x70] sm:$0xff]
  %v63 = vld [vmem:[%s2 + $0x78] sm:$0xff]
  %v64 = vld [vmem:[%s2 + $0x80] sm:$0xff]
  %v65 = vld [vmem:[%s2 + $0x88] sm:$0xff]
  %v66 = vld [vmem:[%s2 + $0x90] sm:$0xff]
  %v67 = vld [vmem:[%s2 + $0x98] sm:$0xff]
  %v68 = vld [vmem:[%s2 + $0xa0] sm:$0xff]
  %v69 = vld [vmem:[%s2 + $0xa8] sm:$0xff]
  %v70 = vld [vmem:[%s2 + $0xb0] sm:$0xff]
  %v71 = vld [vmem:[%s2 + $0xb8] sm:$0xff]
  %v72 = vld [vmem:[%s2 + $0xc0] sm:$0xff]
  %v73 = vld [vmem:[%s2 + $0xc8] sm:$0xff]
  %v74 = vld [vmem:[%s2 + $0xd0] sm:$0xff]
  %v75 = vld [vmem:[%s2 + $0xd8] sm:$0xff]
  %v76 = vld [vmem:[%s2 + $0xe0] sm:$0xff]
  %v77 = vld [vmem:[%s2 + $0xe8] sm:$0xff]
  %v78 = vld [vmem:[%s2 + $0xf0] sm:$0xff]
  %v79 = vld [vmem:[%s2 + $0xf8] sm:$0xff]
  %v80 = vld [vmem:[%s2 + $0x100] sm:$0xff]
  %v81 = vld [vmem:[%s2 + $0x108] sm:$0xff]
  %v82 = vld [vmem:[%s2 + $0x110] sm:$0xff]
  %v83 = vld [vmem:[%s2 + $0x118] sm:$0xff]
  %v84 = vld [vmem:[%s2 + $0x120] sm:$0xff]
  %v85 = vld [vmem:[%s2 + $0x128] sm:$0xff]
  %v86 = vld [vmem:[%s2 + $0x130] sm:$0xff]
  %v87 = vld [vmem:[%s2 + $0x138] sm:$0xff]
  %v88 = vld [vmem:[%s2 + $0x140] sm:$0xff]
  %v89 = vld [vmem:[%s2 + $0x148] sm:$0xff]
  %v90 = vld [vmem:[%s2 + $0x150] sm:$0xff]
  %v91 = vld [vmem:[%s2 + $0x158] sm:$0xff]
  %v92 = vld [vmem:[%s2 + $0x160] sm:$0xff]
  %v93 = vld [vmem:[%s2 + $0x168] sm:$0xff]
  %v94 = vld [vmem:[%s2 + $0x170] sm:$0xff]
  %v95 = vld [vmem:[%s2 + $0x178] sm:$0xff]
  %v96 = vld [vmem:[%s2 + $0x180] sm:$0xff]
  %v97 = vld [vmem:[%s2 + $0x188] sm:$0xff]
  %v98 = vld [vmem:[%s2 + $0x190] sm:$0xff]
  %v99 = vld [vmem:[%s2 + $0x198] sm:$0xff]
  %v100 = vld [vmem:[%s2 + $0x1a0] sm:$0xff]
  %v101 = vld [vmem:[%s2 + $0x1a8] sm:$0xff]
  %v102 = vld [vmem:[%s2 + $0x1b0] sm:$0xff]
  %v103 = vld [vmem:[%s2 + $0x1b8] sm:$0xff]
  %v104 = vld [vmem:[%s2 + $0x1c0] sm:$0xff]
  %v105 = vld [vmem:[%s2 + $0x1c8] sm:$0xff]
  %v106 = vld [vmem:[%s2 + $0x1d0] sm:$0xff]
  %v107 = vld [vmem:[%s2 + $0x1d8] sm:$0xff]
  %v108 = vld [vmem:[%s2 + $0x1e0] sm:$0xff]
  %v109 = vld [vmem:[%s2 + $0x1e8] sm:$0xff]
  %v110 = vld [vmem:[%s2 + $0x1f0] sm:$0xff]
  %v111 = vld [vmem:[%s2 + $0x1f8] sm:$0xff]
  %v112 = vld [vmem:[%s2 + $0x200] sm:$0xff]
  %v113 = vld [vmem:[%s2 + $0x208] sm:$0xff]
  %v114 = vld [vmem:[%s2 + $0x210] sm:$0xff]
  %v115 = vld [vmem:[%s2 + $0x218] sm:$0xff]
  %v116 = vld [vmem:[%s2 + $0x220] sm:$0xff]
  %v117 = vld [vmem:[%s2 + $0x228] sm:$0xff]
  %v118 = vld [vmem:[%s2 + $0x230] sm:$0xff]
  %v119 = vld [vmem:[%s2 + $0x238] sm:$0xff]
  %v120 = vld [vmem:[%s2 + $0x240] sm:$0xff]
  %v121 = vld [vmem:[%s2 + $0x248] sm:$0xff]
  %v122 = vld [vmem:[%s2 + $0x250] sm:$0xff]
  %v123 = vld [vmem:[%s2 + $0x258] sm:$0xff]
  %v124 = vld [vmem:[%s2 + $0x260] sm:$0xff]
  %v125 = vld [vmem:[%s2 + $0x268] sm:$0xff]
  %v126 = vld [vmem:[%s2 + $0x270] sm:$0xff]
  %v127 = vld [vmem:[%s2 + $0x278] sm:$0xff]
  %v128 = vld [vmem:[%s2 + $0x280] sm:$0xff]
  %v129 = vld [vmem:[%s2 + $0x288] sm:$0xff]
  %v130 = vld [vmem:[%s2 + $0x290] sm:$0xff]
  %v131 = vld [vmem:[%s2 + $0x298] sm:$0xff]
  %v132 = vld [vmem:[%s2 + $0x2a0] sm:$0xff]
  %v133 = vld [vmem:[%s2 + $0x2a8] sm:$0xff]
  %v134 = vld [vmem:[%s2 + $0x2b0] sm:$0xff]
  %v135 = vld [vmem:[%s2 + $0x2b8] sm:$0xff]
  %v136 = vld [vmem:[%s2 + $0x2c0] sm:$0xff]
  %v137 = vld [vmem:[%s2 + $0x2c8] sm:$0xff]
  %v138 = vld [vmem:[%s2 + $0x2d0] sm:$0xff]
  %v139 = vld [vmem:[%s2 + $0x2d8] sm:$0xff]
  %v140 = vld [vmem:[%s2 + $0x2e0] sm:$0xff]
  %v141 = vld [vmem:[%s2 + $0x2e8] sm:$0xff]
  %v142 = vld [vmem:[%s2 + $0x2f0] sm:$0xff]
  %v143 = vld [vmem:[%s2 + $0x2f8] sm:$0xff]
  %v144 = vld [vmem:[%s2 + $0x300] sm:$0xff]
  %v145 = vld [vmem:[%s2 + $0x308] sm:$0xff]
  %v146 = vld [vmem:[%s2 + $0x310] sm:$0xff]
  %v147 = vld [vmem:[%s2 + $0x318] sm:$0xff]
  %v148 = vld [vmem:[%s2 + $0x320] sm:$0xff]
  %v149 = vld [vmem:[%s2 + $0x328] sm:$0xff]
  %v150 = vld [vmem:[%s2 + $0x330] sm:$0xff]
  %v151 = vld [vmem:[%s2 + $0x338] sm:$0xff]
  %v152 = vld [vmem:[%s2 + $0x340] sm:$0xff]
  %v153 = vld [vmem:[%s2 + $0x348] sm:$0xff]
  %v154 = vld [vmem:[%s2 + $0x350] sm:$0xff]
  %v155 = vld [vmem:[%s2 + $0x358] sm:$0xff]
  %v156 = vld [vmem:[%s2 + $0x360] sm:$0xff]
  %v157 = vld [vmem:[%s2 + $0x368] sm:$0xff]
  %v158 = vld [vmem:[%s2 + $0x370] sm:$0xff]
  %v159 = vld [vmem:[%s2 + $0x378] sm:$0xff]
  %v160 = vld [vmem:[%s2 + $0x380] sm:$0xff]
  %v161 = vld [vmem:[%s2 + $0x388] sm:$0xff]
  %v162 = vld [vmem:[%s2 + $0x390] sm:$0xff]
  %v163 = vld [vmem:[%s2 + $0x398] sm:$0xff]
  %v164 = vld [vmem:[%s2 + $0x3a0] sm:$0xff]
  %v165 = vld [vmem:[%s2 + $0x3a8] sm:$0xff]
  %v166 = vld [vmem:[%s2 + $0x3b0] sm:$0xff]
  %v167 = vld [vmem:[%s2 + $0x3b8] sm:$0xff]
  %v168 = vld [vmem:[%s2 + $0x3c0] sm:$0xff]
  %v169 = vld [vmem:[%s2 + $0x3c8] sm:$0xff]
  %v170 = vld [vmem:[%s2 + $0x3d0] sm:$0xff]
  %v171 = vld [vmem:[%s2 + $0x3d8] sm:$0xff]
  %v172 = vld [vmem:[%s2 + $0x3e0] sm:$0xff]
  %v173 = vld [vmem:[%s2 + $0x3e8] sm:$0xff]
  %v174 = vld [vmem:[%s2 + $0x3f0] sm:$0xff]
  %v175 = vld [vmem:[%s2 + $0x3f8] sm:$0xff]
  %v176 = vld [vmem:[%s2 + $0x400] sm:$0xff]
  %v177 = vld [vmem:[%s2 + $0x408] sm:$0xff]
  %v178 = vld [vmem:[%s2 + $0x410] sm:$0xff]
  %v179 = vld [vmem:[%s2 + $0x418] sm:$0xff]
  %v180 = vld [vmem:[%s2 + $0x420] sm:$0xff]
  %v181 = vld [vmem:[%s2 + $0x428] sm:$0xff]
  %v182 = vld [vmem:[%s2 + $0x430] sm:$0xff]
  %v183 = vld [vmem:[%s2 + $0x438] sm:$0xff]
  %v184 = vld [vmem:[%s2 + $0x440] sm:$0xff]
  %v185 = vld [vmem:[%s2 + $0x448] sm:$0xff]
  %v186 = vld [vmem:[%s2 + $0x450] sm:$0xff]
  %v187 = vld [vmem:[%s2 + $0x458] sm:$0xff]
  %v188 = vld [vmem:[%s2 + $0x460] sm:$0xff]
  %v189 = vld [vmem:[%s2 + $0x468] sm:$0xff]
  %v190 = vld [vmem:[%s2 + $0x470] sm:$0xff]
  %v191 = vld [vmem:[%s2 + $0x478] sm:$0xff]
  %v192 = vld [vmem:[%s2 + $0x480] sm:$0xff]
  %v193 = vld [vmem:[%s2 + $0x488] sm:$0xff]
  %v194 = vld [vmem:[%s2 + $0x490] sm:$0xff]
  %v195 = vld [vmem:[%s2 + $0x498] sm:$0xff]
  %v196 = vld [vmem:[%s2 + $0x4a0] sm:$0xff]
  %v197 = vld [vmem:[%s2 + $0x4a8] sm:$0xff]
  %v198 = vld [vmem:[%s2 + $0x4b0] sm:$0xff]
  %v199 = vld [vmem:[%s2 + $0x4b8] sm:$0xff]
  %v200 = vld [vmem:[%s2 + $0x4c0] sm:$0xff]
  %v201 = vld [vmem:[%s2 + $0x4c8] sm:$0xff]
  %v202 = vld [vmem:[%s2 + $0x4d0] sm:$0xff]
  %v203 = vld [vmem:[%s2 + $0x4d8] sm:$0xff]
  %v204 = vld [vmem:[%s2 + $0x4e0] sm:$0xff]
  %v205 = vld [vmem:[%s2 + $0x4e8] sm:$0xff]
  %v206 = vld [vmem:[%s2 + $0x4f0] sm:$0xff]
  %v207 = vld [vmem:[%s2 + $0x4f8] sm:$0xff]
  %v208 = vld [vmem:[%s2 + $0x500] sm:$0xff]
  %v209 = vld [vmem:[%s2 + $0x508] sm:$0xff]
  %v210 = vld [vmem:[%s2 + $0x510] sm:$0xff]
  %v211 = vld [vmem:[%s2 + $0x518] sm:$0xff]
  %v212 = vld [vmem:[%s2 + $0x520] sm:$0xff]
  %v213 = vld [vmem:[%s2 + $0x528] sm:$0xff]
  %v214 = vld [vmem:[%s2 + $0x530] sm:$0xff]
  %v215 = vld [vmem:[%s2 + $0x538] sm:$0xff]
  %v216 = vld [vmem:[%s2 + $0x540] sm:$0xff]
  %v217 = vld [vmem:[%s2 + $0x548] sm:$0xff]
  %v218 = vld [vmem:[%s2 + $0x550] sm:$0xff]
  %v219 = vld [vmem:[%s2 + $0x558] sm:$0xff]
  %v220 = vld [vmem:[%s2 + $0x560] sm:$0xff]
  %v221 = vld [vmem:[%s2 + $0x568] sm:$0xff]
  %v222 = vld [vmem:[%s2 + $0x570] sm:$0xff]
  %v223 = vld [vmem:[%s2 + $0x578] sm:$0xff]
  %v224 = vld [vmem:[%s2 + $0x580] sm:$0xff]
  %v225 = vld [vmem:[%s2 + $0x588] sm:$0xff]
  %v226 = vld [vmem:[%s2 + $0x590] sm:$0xff]
  %v227 = vld [vmem:[%s2 + $0x598] sm:$0xff]
  %v228 = vld [vmem:[%s2 + $0x5a0] sm:$0xff]
  %v229 = vld [vmem:[%s2 + $0x5a8] sm:$0xff]
  %v230 = vld [vmem:[%s2 + $0x5b0] sm:$0xff]
  %v231 = vld [vmem:[%s2 + $0x5b8] sm:$0xff]
  %v232 = vld [vmem:[%s2 + $0x5c0] sm:$0xff]
  %v233 = vld [vmem:[%s2 + $0x5c8] sm:$0xff]
  %v234 = vld [vmem:[%s2 + $0x5d0] sm:$0xff]
  %v235 = vld [vmem:[%s2 + $0x5d8] sm:$0xff]
  %v236 = vld [vmem:[%s2 + $0x5e0] sm:$0xff]
  %v237 = vld [vmem:[%s2 + $0x5e8] sm:$0xff]
  %v238 = vld [vmem:[%s2 + $0x5f0] sm:$0xff]
  %v239 = vld [vmem:[%s2 + $0x5f8] sm:$0xff]
  %v240 = vld [vmem:[%s2 + $0x600] sm:$0xff]
  %v241 = vld [vmem:[%s2 + $0x608] sm:$0xff]
  %v242 = vld [vmem:[%s2 + $0x610] sm:$0xff]
  %v243 = vld [vmem:[%s2 + $0x618] sm:$0xff]
  %v244 = vld [vmem:[%s2 + $0x620] sm:$0xff]
  %v245 = vld [vmem:[%s2 + $0x628] sm:$0xff]
  %v246 = vld [vmem:[%s2 + $0x630] sm:$0xff]
  %v247 = vld [vmem:[%s2 + $0x638] sm:$0xff]
  %v248 = vld [vmem:[%s2 + $0x640] sm:$0xff]
  %v249 = vld [vmem:[%s2 + $0x648] sm:$0xff]
  %v250 = vld [vmem:[%s2 + $0x650] sm:$0xff]
  %v251 = vld [vmem:[%s2 + $0x658] sm:$0xff]
  %v252 = vld [vmem:[%s2 + $0x660] sm:$0xff]
  %v253 = vld [vmem:[%s2 + $0x668] sm:$0xff]
  %v254 = vld [vmem:[%s2 + $0x670] sm:$0xff]
  %v255 = vld [vmem:[%s2 + $0x678] sm:$0xff]
  %v256 = vld [vmem:[%s2 + $0x680] sm:$0xff]
  %v257 = vld [vmem:[%s2 + $0x688] sm:$0xff]
  %v258 = vld [vmem:[%s2 + $0x690] sm:$0xff]
  %v259 = vld [vmem:[%s2 + $0x698] sm:$0xff]
  %v260 = vld [vmem:[%s2 + $0x6a0] sm:$0xff]
  %v261 = vld [vmem:[%s2 + $0x6a8] sm:$0xff]
  %v262 = vld [vmem:[%s2 + $0x6b0] sm:$0xff]
  %v263 = vld [vmem:[%s2 + $0x6b8] sm:$0xff]
  %v264 = vld [vmem:[%s2 + $0x6c0] sm:$0xff]
  %v265 = vld [vmem:[%s2 + $0x6c8] sm:$0xff]
  %v266 = vld [vmem:[%s2 + $0x6d0] sm:$0xff]
  %v267 = vld [vmem:[%s2 + $0x6d8] sm:$0xff]
  %v268 = vld [vmem:[%s2 + $0x6e0] sm:$0xff]
  %v269 = vld [vmem:[%s2 + $0x6e8] sm:$0xff]
  %v270 = vld [vmem:[%s2 + $0x6f0] sm:$0xff]
  %v271 = vld [vmem:[%s2 + $0x6f8] sm:$0xff]
  %v272 = vld [vmem:[%s2 + $0x700] sm:$0xff]
  %v273 = vld [vmem:[%s2 + $0x708] sm:$0xff]
  %v274 = vld [vmem:[%s2 + $0x710] sm:$0xff]
  %v275 = vld [vmem:[%s2 + $0x718] sm:$0xff]
  %v276 = vld [vmem:[%s2 + $0x720] sm:$0xff]
  %v277 = vld [vmem:[%s2 + $0x728] sm:$0xff]
  %v278 = vld [vmem:[%s2 + $0x730] sm:$0xff]
  %v279 = vld [vmem:[%s2 + $0x738] sm:$0xff]
  %v280 = vld [vmem:[%s2 + $0x740] sm:$0xff]
  %v281 = vld [vmem:[%s2 + $0x748] sm:$0xff]
  %v282 = vld [vmem:[%s2 + $0x750] sm:$0xff]
  %v283 = vld [vmem:[%s2 + $0x758] sm:$0xff]
  %v284 = vld [vmem:[%s2 + $0x760] sm:$0xff]
  %v285 = vld [vmem:[%s2 + $0x768] sm:$0xff]
  %v286 = vld [vmem:[%s2 + $0x770] sm:$0xff]
  %v287 = vld [vmem:[%s2 + $0x778] sm:$0xff]
  %v288 = vld [vmem:[%s2 + $0x780] sm:$0xff]
  %v289 = vld [vmem:[%s2 + $0x788] sm:$0xff]
  %v290 = vld [vmem:[%s2 + $0x790] sm:$0xff]
  %v291 = vld [vmem:[%s2 + $0x798] sm:$0xff]
  %v292 = vld [vmem:[%s2 + $0x7a0] sm:$0xff]
  %v293 = vld [vmem:[%s2 + $0x7a8] sm:$0xff]
  %v294 = vld [vmem:[%s2 + $0x7b0] sm:$0xff]
  %v295 = vld [vmem:[%s2 + $0x7b8] sm:$0xff]
  %v296 = vld [vmem:[%s2 + $0x7c0] sm:$0xff]
  %v297 = vld [vmem:[%s2 + $0x7c8] sm:$0xff]
  %v298 = vld [vmem:[%s2 + $0x7d0] sm:$0xff]
  %v299 = vld [vmem:[%s2 + $0x7d8] sm:$0xff]
  %v300 = vld [vmem:[%s2 + $0x7e0] sm:$0xff]
  %v301 = vld [vmem:[%s2 + $0x7e8] sm:$0xff]
  %v302 = vld [vmem:[%s2 + $0x7f0] sm:$0xff]
  %v303 = vld [vmem:[%s2 + $0x7f8] sm:$0xff]
  %v304 = vld [vmem:[%s2 + $0x800] sm:$0xff]
  %v305 = vld [vmem:[%s2 + $0x808] sm:$0xff]
  %v306 = vld [vmem:[%s2 + $0x810] sm:$0xff]
  %v307 = vld [vmem:[%s2 + $0x818] sm:$0xff]
  %v308 = vld [vmem:[%s2 + $0x820] sm:$0xff]
  %v309 = vld [vmem:[%s2 + $0x828] sm:$0xff]
  %v310 = vld [vmem:[%s2 + $0x830] sm:$0xff]
  %v311 = vld [vmem:[%s2 + $0x838] sm:$0xff]
  %v312 = vld [vmem:[%s2 + $0x840] sm:$0xff]
  %v313 = vld [vmem:[%s2 + $0x848] sm:$0xff]
  %v314 = vld [vmem:[%s2 + $0x850] sm:$0xff]
  %v315 = vld [vmem:[%s2 + $0x858] sm:$0xff]
  %v316 = vld [vmem:[%s2 + $0x860] sm:$0xff]
  %v317 = vld [vmem:[%s2 + $0x868] sm:$0xff]
  %v318 = vld [vmem:[%s2 + $0x870] sm:$0xff]
  %v319 = vld [vmem:[%s2 + $0x878] sm:$0xff]
  %v320 = vld [vmem:[%s2 + $0x880] sm:$0xff]
  %v321 = vld [vmem:[%s2 + $0x888] sm:$0xff]
  %v322 = vld [vmem:[%s2 + $0x890] sm:$0xff]
  %v323 = vld [vmem:[%s2 + $0x898] sm:$0xff]
  %v324 = vld [vmem:[%s2 + $0x8a0] sm:$0xff]
  %v325 = vld [vmem:[%s2 + $0x8a8] sm:$0xff]
  %v326 = vld [vmem:[%s2 + $0x8b0] sm:$0xff]
  %v327 = vld [vmem:[%s2 + $0x8b8] sm:$0xff]
  %v328 = vld [vmem:[%s2 + $0x8c0] sm:$0xff]
  %v329 = vld [vmem:[%s2 + $0x8c8] sm:$0xff]
  %v330 = vld [vmem:[%s2 + $0x8d0] sm:$0xff]
  %v331 = vld [vmem:[%s2 + $0x8d8] sm:$0xff]
  %v332 = vld [vmem:[%s2 + $0x8e0] sm:$0xff]
  %v333 = vld [vmem:[%s2 + $0x8e8] sm:$0xff]
  %v334 = vld [vmem:[%s2 + $0x8f0] sm:$0xff]
  %v335 = vld [vmem:[%s2 + $0x8f8] sm:$0xff]
  %v336 = vld [vmem:[%s3] sm:$0x3f]
  %v338 = vlaneseq
  %v339 = vshrl.u32 %v338, 7
  %v340 = vsub.s32 0, %v339
  %v341 = vrot.slane %v336, %v340
  %v342 = vlaneseq
  %v343 = vshrl.u32 %v342, 7
  %v344 = vsub.s32 1, %v343
  %v345 = vrot.slane %v336, %v344
  %v346 = vlaneseq
  %v347 = vshrl.u32 %v346, 7
  %v348 = vsub.s32 2, %v347
  %v349 = vrot.slane %v336, %v348
  %v350 = vlaneseq
  %v351 = vshrl.u32 %v350, 7
  %v352 = vsub.s32 3, %v351
  %v353 = vrot.slane %v336, %v352
  %v354 = vlaneseq
  %v355 = vshrl.u32 %v354, 7
  %v356 = vsub.s32 4, %v355
  %v357 = vrot.slane %v336, %v356
  %v358 = vlaneseq
  %v359 = vshrl.u32 %v358, 7
  %v360 = vsub.s32 5, %v359
  %v361 = vrot.slane %v336, %v360
  %v371 = vunpack.c.l.b16 %v45
  %v372 = vunpack.c.h.b16 %v45
  %v373 = vunpack.c.l.b16 %v46
  %v374 = vunpack.c.h.b16 %v46
  %v375 = vunpack.c.l.b16 %v47
  %v376 = vunpack.c.h.b16 %v47
  %v377 = vpack.c.b16 %v371, %v371
  %v378 = vpack.c.b16 %v372, %v372
  %v379 = vpack.c.b16 %v373, %v373
  %v380 = vpack.c.b16 %v374, %v374
  %v381 = vpack.c.b16 %v375, %v375
  %v382 = vpack.c.b16 %v376, %v376
  %v677 = vunpack.c.l.b16 %v48
  %v678 = vunpack.c.h.b16 %v48
  %v679 = vunpack.c.l.b16 %v49
  %v680 = vunpack.c.h.b16 %v49
  %v681 = vunpack.c.l.b16 %v50
  %v682 = vunpack.c.h.b16 %v50
  %v683 = vunpack.c.l.b16 %v51
  %v684 = vunpack.c.h.b16 %v51
  %v685 = vunpack.c.l.b16 %v52
  %v686 = vunpack.c.h.b16 %v52
  %v687 = vunpack.c.l.b16 %v53
  %v688 = vunpack.c.h.b16 %v53
  %v689 = vunpack.c.l.b16 %v54
  %v690 = vunpack.c.h.b16 %v54
  %v691 = vunpack.c.l.b16 %v55
  %v692 = vunpack.c.h.b16 %v55
  %v693 = vunpack.c.l.b16 %v56
  %v694 = vunpack.c.h.b16 %v56
  %v695 = vunpack.c.l.b16 %v57
  %v696 = vunpack.c.h.b16 %v57
  %v697 = vunpack.c.l.b16 %v58
  %v698 = vunpack.c.h.b16 %v58
  %v699 = vunpack.c.l.b16 %v59
  %v700 = vunpack.c.h.b16 %v59
  %v701 = vunpack.c.l.b16 %v60
  %v702 = vunpack.c.h.b16 %v60
  %v703 = vunpack.c.l.b16 %v61
  %v704 = vunpack.c.h.b16 %v61
  %v705 = vunpack.c.l.b16 %v62
  %v706 = vunpack.c.h.b16 %v62
  %v707 = vunpack.c.l.b16 %v63
  %v708 = vunpack.c.h.b16 %v63
  %v709 = vunpack.c.l.b16 %v64
  %v710 = vunpack.c.h.b16 %v64
  %v711 = vunpack.c.l.b16 %v65
  %v712 = vunpack.c.h.b16 %v65
  %v713 = vunpack.c.l.b16 %v66
  %v714 = vunpack.c.h.b16 %v66
  %v715 = vunpack.c.l.b16 %v67
  %v716 = vunpack.c.h.b16 %v67
  %v717 = vunpack.c.l.b16 %v68
  %v718 = vunpack.c.h.b16 %v68
  %v719 = vunpack.c.l.b16 %v69
  %v720 = vunpack.c.h.b16 %v69
  %v721 = vunpack.c.l.b16 %v70
  %v722 = vunpack.c.h.b16 %v70
  %v723 = vunpack.c.l.b16 %v71
  %v724 = vunpack.c.h.b16 %v71
  %v725 = vunpack.c.l.b16 %v72
  %v726 = vunpack.c.h.b16 %v72
  %v727 = vunpack.c.l.b16 %v73
  %v728 = vunpack.c.h.b16 %v73
  %v729 = vunpack.c.l.b16 %v74
  %v730 = vunpack.c.h.b16 %v74
  %v731 = vunpack.c.l.b16 %v75
  %v732 = vunpack.c.h.b16 %v75
  %v733 = vunpack.c.l.b16 %v76
  %v734 = vunpack.c.h.b16 %v76
  %v735 = vunpack.c.l.b16 %v77
  %v736 = vunpack.c.h.b16 %v77
  %v737 = vunpack.c.l.b16 %v78
  %v738 = vunpack.c.h.b16 %v78
  %v739 = vunpack.c.l.b16 %v79
  %v740 = vunpack.c.h.b16 %v79
  %v741 = vunpack.c.l.b16 %v80
  %v742 = vunpack.c.h.b16 %v80
  %v743 = vunpack.c.l.b16 %v81
  %v744 = vunpack.c.h.b16 %v81
  %v745 = vunpack.c.l.b16 %v82
  %v746 = vunpack.c.h.b16 %v82
  %v747 = vunpack.c.l.b16 %v83
  %v748 = vunpack.c.h.b16 %v83
  %v749 = vunpack.c.l.b16 %v84
  %v750 = vunpack.c.h.b16 %v84
  %v751 = vunpack.c.l.b16 %v85
  %v752 = vunpack.c.h.b16 %v85
  %v753 = vunpack.c.l.b16 %v86
  %v754 = vunpack.c.h.b16 %v86
  %v755 = vunpack.c.l.b16 %v87
  %v756 = vunpack.c.h.b16 %v87
  %v757 = vunpack.c.l.b16 %v88
  %v758 = vunpack.c.h.b16 %v88
  %v759 = vunpack.c.l.b16 %v89
  %v760 = vunpack.c.h.b16 %v89
  %v761 = vunpack.c.l.b16 %v90
  %v762 = vunpack.c.h.b16 %v90
  %v763 = vunpack.c.l.b16 %v91
  %v764 = vunpack.c.h.b16 %v91
  %v765 = vunpack.c.l.b16 %v92
  %v766 = vunpack.c.h.b16 %v92
  %v767 = vunpack.c.l.b16 %v93
  %v768 = vunpack.c.h.b16 %v93
  %v769 = vunpack.c.l.b16 %v94
  %v770 = vunpack.c.h.b16 %v94
  %v771 = vunpack.c.l.b16 %v95
  %v772 = vunpack.c.h.b16 %v95
  %v773 = vunpack.c.l.b16 %v96
  %v774 = vunpack.c.h.b16 %v96
  %v775 = vunpack.c.l.b16 %v97
  %v776 = vunpack.c.h.b16 %v97
  %v777 = vunpack.c.l.b16 %v98
  %v778 = vunpack.c.h.b16 %v98
  %v779 = vunpack.c.l.b16 %v99
  %v780 = vunpack.c.h.b16 %v99
  %v781 = vunpack.c.l.b16 %v100
  %v782 = vunpack.c.h.b16 %v100
  %v783 = vunpack.c.l.b16 %v101
  %v784 = vunpack.c.h.b16 %v101
  %v785 = vunpack.c.l.b16 %v102
  %v786 = vunpack.c.h.b16 %v102
  %v787 = vunpack.c.l.b16 %v103
  %v788 = vunpack.c.h.b16 %v103
  %v789 = vunpack.c.l.b16 %v104
  %v790 = vunpack.c.h.b16 %v104
  %v791 = vunpack.c.l.b16 %v105
  %v792 = vunpack.c.h.b16 %v105
  %v793 = vunpack.c.l.b16 %v106
  %v794 = vunpack.c.h.b16 %v106
  %v795 = vunpack.c.l.b16 %v107
  %v796 = vunpack.c.h.b16 %v107
  %v797 = vunpack.c.l.b16 %v108
  %v798 = vunpack.c.h.b16 %v108
  %v799 = vunpack.c.l.b16 %v109
  %v800 = vunpack.c.h.b16 %v109
  %v801 = vunpack.c.l.b16 %v110
  %v802 = vunpack.c.h.b16 %v110
  %v803 = vunpack.c.l.b16 %v111
  %v804 = vunpack.c.h.b16 %v111
  %v805 = vunpack.c.l.b16 %v112
  %v806 = vunpack.c.h.b16 %v112
  %v807 = vunpack.c.l.b16 %v113
  %v808 = vunpack.c.h.b16 %v113
  %v809 = vunpack.c.l.b16 %v114
  %v810 = vunpack.c.h.b16 %v114
  %v811 = vunpack.c.l.b16 %v115
  %v812 = vunpack.c.h.b16 %v115
  %v813 = vunpack.c.l.b16 %v116
  %v814 = vunpack.c.h.b16 %v116
  %v815 = vunpack.c.l.b16 %v117
  %v816 = vunpack.c.h.b16 %v117
  %v817 = vunpack.c.l.b16 %v118
  %v818 = vunpack.c.h.b16 %v118
  %v819 = vunpack.c.l.b16 %v119
  %v820 = vunpack.c.h.b16 %v119
  %v821 = vunpack.c.l.b16 %v120
  %v822 = vunpack.c.h.b16 %v120
  %v823 = vunpack.c.l.b16 %v121
  %v824 = vunpack.c.h.b16 %v121
  %v825 = vunpack.c.l.b16 %v122
  %v826 = vunpack.c.h.b16 %v122
  %v827 = vunpack.c.l.b16 %v123
  %v828 = vunpack.c.h.b16 %v123
  %v829 = vunpack.c.l.b16 %v124
  %v830 = vunpack.c.h.b16 %v124
  %v831 = vunpack.c.l.b16 %v125
  %v832 = vunpack.c.h.b16 %v125
  %v833 = vunpack.c.l.b16 %v126
  %v834 = vunpack.c.h.b16 %v126
  %v835 = vunpack.c.l.b16 %v127
  %v836 = vunpack.c.h.b16 %v127
  %v837 = vunpack.c.l.b16 %v128
  %v838 = vunpack.c.h.b16 %v128
  %v839 = vunpack.c.l.b16 %v129
  %v840 = vunpack.c.h.b16 %v129
  %v841 = vunpack.c.l.b16 %v130
  %v842 = vunpack.c.h.b16 %v130
  %v843 = vunpack.c.l.b16 %v131
  %v844 = vunpack.c.h.b16 %v131
  %v845 = vunpack.c.l.b16 %v132
  %v846 = vunpack.c.h.b16 %v132
  %v847 = vunpack.c.l.b16 %v133
  %v848 = vunpack.c.h.b16 %v133
  %v849 = vunpack.c.l.b16 %v134
  %v850 = vunpack.c.h.b16 %v134
  %v851 = vunpack.c.l.b16 %v135
  %v852 = vunpack.c.h.b16 %v135
  %v853 = vunpack.c.l.b16 %v136
  %v854 = vunpack.c.h.b16 %v136
  %v855 = vunpack.c.l.b16 %v137
  %v856 = vunpack.c.h.b16 %v137
  %v857 = vunpack.c.l.b16 %v138
  %v858 = vunpack.c.h.b16 %v138
  %v859 = vunpack.c.l.b16 %v139
  %v860 = vunpack.c.h.b16 %v139
  %v861 = vunpack.c.l.b16 %v140
  %v862 = vunpack.c.h.b16 %v140
  %v863 = vunpack.c.l.b16 %v141
  %v864 = vunpack.c.h.b16 %v141
  %v865 = vunpack.c.l.b16 %v142
  %v866 = vunpack.c.h.b16 %v142
  %v867 = vunpack.c.l.b16 %v143
  %v868 = vunpack.c.h.b16 %v143
  %v869 = vunpack.c.l.b16 %v144
  %v870 = vunpack.c.h.b16 %v144
  %v871 = vunpack.c.l.b16 %v145
  %v872 = vunpack.c.h.b16 %v145
  %v873 = vunpack.c.l.b16 %v146
  %v874 = vunpack.c.h.b16 %v146
  %v875 = vunpack.c.l.b16 %v147
  %v876 = vunpack.c.h.b16 %v147
  %v877 = vunpack.c.l.b16 %v148
  %v878 = vunpack.c.h.b16 %v148
  %v879 = vunpack.c.l.b16 %v149
  %v880 = vunpack.c.h.b16 %v149
  %v881 = vunpack.c.l.b16 %v150
  %v882 = vunpack.c.h.b16 %v150
  %v883 = vunpack.c.l.b16 %v151
  %v884 = vunpack.c.h.b16 %v151
  %v885 = vunpack.c.l.b16 %v152
  %v886 = vunpack.c.h.b16 %v152
  %v887 = vunpack.c.l.b16 %v153
  %v888 = vunpack.c.h.b16 %v153
  %v889 = vunpack.c.l.b16 %v154
  %v890 = vunpack.c.h.b16 %v154
  %v891 = vunpack.c.l.b16 %v155
  %v892 = vunpack.c.h.b16 %v155
  %v893 = vunpack.c.l.b16 %v156
  %v894 = vunpack.c.h.b16 %v156
  %v895 = vunpack.c.l.b16 %v157
  %v896 = vunpack.c.h.b16 %v157
  %v897 = vunpack.c.l.b16 %v158
  %v898 = vunpack.c.h.b16 %v158
  %v899 = vunpack.c.l.b16 %v159
  %v900 = vunpack.c.h.b16 %v159
  %v901 = vunpack.c.l.b16 %v160
  %v902 = vunpack.c.h.b16 %v160
  %v903 = vunpack.c.l.b16 %v161
  %v904 = vunpack.c.h.b16 %v161
  %v905 = vunpack.c.l.b16 %v162
  %v906 = vunpack.c.h.b16 %v162
  %v907 = vunpack.c.l.b16 %v163
  %v908 = vunpack.c.h.b16 %v163
  %v909 = vunpack.c.l.b16 %v164
  %v910 = vunpack.c.h.b16 %v164
  %v911 = vunpack.c.l.b16 %v165
  %v912 = vunpack.c.h.b16 %v165
  %v913 = vunpack.c.l.b16 %v166
  %v914 = vunpack.c.h.b16 %v166
  %v915 = vunpack.c.l.b16 %v167
  %v916 = vunpack.c.h.b16 %v167
  %v917 = vunpack.c.l.b16 %v168
  %v918 = vunpack.c.h.b16 %v168
  %v919 = vunpack.c.l.b16 %v169
  %v920 = vunpack.c.h.b16 %v169
  %v921 = vunpack.c.l.b16 %v170
  %v922 = vunpack.c.h.b16 %v170
  %v923 = vunpack.c.l.b16 %v171
  %v924 = vunpack.c.h.b16 %v171
  %v925 = vunpack.c.l.b16 %v172
  %v926 = vunpack.c.h.b16 %v172
  %v927 = vunpack.c.l.b16 %v173
  %v928 = vunpack.c.h.b16 %v173
  %v929 = vunpack.c.l.b16 %v174
  %v930 = vunpack.c.h.b16 %v174
  %v931 = vunpack.c.l.b16 %v175
  %v932 = vunpack.c.h.b16 %v175
  %v933 = vunpack.c.l.b16 %v176
  %v934 = vunpack.c.h.b16 %v176
  %v935 = vunpack.c.l.b16 %v177
  %v936 = vunpack.c.h.b16 %v177
  %v937 = vunpack.c.l.b16 %v178
  %v938 = vunpack.c.h.b16 %v178
  %v939 = vunpack.c.l.b16 %v179
  %v940 = vunpack.c.h.b16 %v179
  %v941 = vunpack.c.l.b16 %v180
  %v942 = vunpack.c.h.b16 %v180
  %v943 = vunpack.c.l.b16 %v181
  %v944 = vunpack.c.h.b16 %v181
  %v945 = vunpack.c.l.b16 %v182
  %v946 = vunpack.c.h.b16 %v182
  %v947 = vunpack.c.l.b16 %v183
  %v948 = vunpack.c.h.b16 %v183
  %v949 = vunpack.c.l.b16 %v184
  %v950 = vunpack.c.h.b16 %v184
  %v951 = vunpack.c.l.b16 %v185
  %v952 = vunpack.c.h.b16 %v185
  %v953 = vunpack.c.l.b16 %v186
  %v954 = vunpack.c.h.b16 %v186
  %v955 = vunpack.c.l.b16 %v187
  %v956 = vunpack.c.h.b16 %v187
  %v957 = vunpack.c.l.b16 %v188
  %v958 = vunpack.c.h.b16 %v188
  %v959 = vunpack.c.l.b16 %v189
  %v960 = vunpack.c.h.b16 %v189
  %v961 = vunpack.c.l.b16 %v190
  %v962 = vunpack.c.h.b16 %v190
  %v963 = vunpack.c.l.b16 %v191
  %v964 = vunpack.c.h.b16 %v191
  %v965 = vunpack.c.l.b16 %v192
  %v966 = vunpack.c.h.b16 %v192
  %v967 = vunpack.c.l.b16 %v193
  %v968 = vunpack.c.h.b16 %v193
  %v969 = vunpack.c.l.b16 %v194
  %v970 = vunpack.c.h.b16 %v194
  %v971 = vunpack.c.l.b16 %v195
  %v972 = vunpack.c.h.b16 %v195
  %v973 = vunpack.c.l.b16 %v196
  %v974 = vunpack.c.h.b16 %v196
  %v975 = vunpack.c.l.b16 %v197
  %v976 = vunpack.c.h.b16 %v197
  %v977 = vunpack.c.l.b16 %v198
  %v978 = vunpack.c.h.b16 %v198
  %v979 = vunpack.c.l.b16 %v199
  %v980 = vunpack.c.h.b16 %v199
  %v981 = vunpack.c.l.b16 %v200
  %v982 = vunpack.c.h.b16 %v200
  %v983 = vunpack.c.l.b16 %v201
  %v984 = vunpack.c.h.b16 %v201
  %v985 = vunpack.c.l.b16 %v202
  %v986 = vunpack.c.h.b16 %v202
  %v987 = vunpack.c.l.b16 %v203
  %v988 = vunpack.c.h.b16 %v203
  %v989 = vunpack.c.l.b16 %v204
  %v990 = vunpack.c.h.b16 %v204
  %v991 = vunpack.c.l.b16 %v205
  %v992 = vunpack.c.h.b16 %v205
  %v993 = vunpack.c.l.b16 %v206
  %v994 = vunpack.c.h.b16 %v206
  %v995 = vunpack.c.l.b16 %v207
  %v996 = vunpack.c.h.b16 %v207
  %v997 = vunpack.c.l.b16 %v208
  %v998 = vunpack.c.h.b16 %v208
  %v999 = vunpack.c.l.b16 %v209
  %v1000 = vunpack.c.h.b16 %v209
  %v1001 = vunpack.c.l.b16 %v210
  %v1002 = vunpack.c.h.b16 %v210
  %v1003 = vunpack.c.l.b16 %v211
  %v1004 = vunpack.c.h.b16 %v211
  %v1005 = vunpack.c.l.b16 %v212
  %v1006 = vunpack.c.h.b16 %v212
  %v1007 = vunpack.c.l.b16 %v213
  %v1008 = vunpack.c.h.b16 %v213
  %v1009 = vunpack.c.l.b16 %v214
  %v1010 = vunpack.c.h.b16 %v214
  %v1011 = vunpack.c.l.b16 %v215
  %v1012 = vunpack.c.h.b16 %v215
  %v1013 = vunpack.c.l.b16 %v216
  %v1014 = vunpack.c.h.b16 %v216
  %v1015 = vunpack.c.l.b16 %v217
  %v1016 = vunpack.c.h.b16 %v217
  %v1017 = vunpack.c.l.b16 %v218
  %v1018 = vunpack.c.h.b16 %v218
  %v1019 = vunpack.c.l.b16 %v219
  %v1020 = vunpack.c.h.b16 %v219
  %v1021 = vunpack.c.l.b16 %v220
  %v1022 = vunpack.c.h.b16 %v220
  %v1023 = vunpack.c.l.b16 %v221
  %v1024 = vunpack.c.h.b16 %v221
  %v1025 = vunpack.c.l.b16 %v222
  %v1026 = vunpack.c.h.b16 %v222
  %v1027 = vunpack.c.l.b16 %v223
  %v1028 = vunpack.c.h.b16 %v223
  %v1029 = vunpack.c.l.b16 %v224
  %v1030 = vunpack.c.h.b16 %v224
  %v1031 = vunpack.c.l.b16 %v225
  %v1032 = vunpack.c.h.b16 %v225
  %v1033 = vunpack.c.l.b16 %v226
  %v1034 = vunpack.c.h.b16 %v226
  %v1035 = vunpack.c.l.b16 %v227
  %v1036 = vunpack.c.h.b16 %v227
  %v1037 = vunpack.c.l.b16 %v228
  %v1038 = vunpack.c.h.b16 %v228
  %v1039 = vunpack.c.l.b16 %v229
  %v1040 = vunpack.c.h.b16 %v229
  %v1041 = vunpack.c.l.b16 %v230
  %v1042 = vunpack.c.h.b16 %v230
  %v1043 = vunpack.c.l.b16 %v231
  %v1044 = vunpack.c.h.b16 %v231
  %v1045 = vunpack.c.l.b16 %v232
  %v1046 = vunpack.c.h.b16 %v232
  %v1047 = vunpack.c.l.b16 %v233
  %v1048 = vunpack.c.h.b16 %v233
  %v1049 = vunpack.c.l.b16 %v234
  %v1050 = vunpack.c.h.b16 %v234
  %v1051 = vunpack.c.l.b16 %v235
  %v1052 = vunpack.c.h.b16 %v235
  %v1053 = vunpack.c.l.b16 %v236
  %v1054 = vunpack.c.h.b16 %v236
  %v1055 = vunpack.c.l.b16 %v237
  %v1056 = vunpack.c.h.b16 %v237
  %v1057 = vunpack.c.l.b16 %v238
  %v1058 = vunpack.c.h.b16 %v238
  %v1059 = vunpack.c.l.b16 %v239
  %v1060 = vunpack.c.h.b16 %v239
  %v1061 = vunpack.c.l.b16 %v240
  %v1062 = vunpack.c.h.b16 %v240
  %v1063 = vunpack.c.l.b16 %v241
  %v1064 = vunpack.c.h.b16 %v241
  %v1065 = vunpack.c.l.b16 %v242
  %v1066 = vunpack.c.h.b16 %v242
  %v1067 = vunpack.c.l.b16 %v243
  %v1068 = vunpack.c.h.b16 %v243
  %v1069 = vunpack.c.l.b16 %v244
  %v1070 = vunpack.c.h.b16 %v244
  %v1071 = vunpack.c.l.b16 %v245
  %v1072 = vunpack.c.h.b16 %v245
  %v1073 = vunpack.c.l.b16 %v246
  %v1074 = vunpack.c.h.b16 %v246
  %v1075 = vunpack.c.l.b16 %v247
  %v1076 = vunpack.c.h.b16 %v247
  %v1077 = vunpack.c.l.b16 %v248
  %v1078 = vunpack.c.h.b16 %v248
  %v1079 = vunpack.c.l.b16 %v249
  %v1080 = vunpack.c.h.b16 %v249
  %v1081 = vunpack.c.l.b16 %v250
  %v1082 = vunpack.c.h.b16 %v250
  %v1083 = vunpack.c.l.b16 %v251
  %v1084 = vunpack.c.h.b16 %v251
  %v1085 = vunpack.c.l.b16 %v252
  %v1086 = vunpack.c.h.b16 %v252
  %v1087 = vunpack.c.l.b16 %v253
  %v1088 = vunpack.c.h.b16 %v253
  %v1089 = vunpack.c.l.b16 %v254
  %v1090 = vunpack.c.h.b16 %v254
  %v1091 = vunpack.c.l.b16 %v255
  %v1092 = vunpack.c.h.b16 %v255
  %v1093 = vunpack.c.l.b16 %v256
  %v1094 = vunpack.c.h.b16 %v256
  %v1095 = vunpack.c.l.b16 %v257
  %v1096 = vunpack.c.h.b16 %v257
  %v1097 = vunpack.c.l.b16 %v258
  %v1098 = vunpack.c.h.b16 %v258
  %v1099 = vunpack.c.l.b16 %v259
  %v1100 = vunpack.c.h.b16 %v259
  %v1101 = vunpack.c.l.b16 %v260
  %v1102 = vunpack.c.h.b16 %v260
  %v1103 = vunpack.c.l.b16 %v261
  %v1104 = vunpack.c.h.b16 %v261
  %v1105 = vunpack.c.l.b16 %v262
  %v1106 = vunpack.c.h.b16 %v262
  %v1107 = vunpack.c.l.b16 %v263
  %v1108 = vunpack.c.h.b16 %v263
  %v1109 = vunpack.c.l.b16 %v264
  %v1110 = vunpack.c.h.b16 %v264
  %v1111 = vunpack.c.l.b16 %v265
  %v1112 = vunpack.c.h.b16 %v265
  %v1113 = vunpack.c.l.b16 %v266
  %v1114 = vunpack.c.h.b16 %v266
  %v1115 = vunpack.c.l.b16 %v267
  %v1116 = vunpack.c.h.b16 %v267
  %v1117 = vunpack.c.l.b16 %v268
  %v1118 = vunpack.c.h.b16 %v268
  %v1119 = vunpack.c.l.b16 %v269
  %v1120 = vunpack.c.h.b16 %v269
  %v1121 = vunpack.c.l.b16 %v270
  %v1122 = vunpack.c.h.b16 %v270
  %v1123 = vunpack.c.l.b16 %v271
  %v1124 = vunpack.c.h.b16 %v271
  %v1125 = vunpack.c.l.b16 %v272
  %v1126 = vunpack.c.h.b16 %v272
  %v1127 = vunpack.c.l.b16 %v273
  %v1128 = vunpack.c.h.b16 %v273
  %v1129 = vunpack.c.l.b16 %v274
  %v1130 = vunpack.c.h.b16 %v274
  %v1131 = vunpack.c.l.b16 %v275
  %v1132 = vunpack.c.h.b16 %v275
  %v1133 = vunpack.c.l.b16 %v276
  %v1134 = vunpack.c.h.b16 %v276
  %v1135 = vunpack.c.l.b16 %v277
  %v1136 = vunpack.c.h.b16 %v277
  %v1137 = vunpack.c.l.b16 %v278
  %v1138 = vunpack.c.h.b16 %v278
  %v1139 = vunpack.c.l.b16 %v279
  %v1140 = vunpack.c.h.b16 %v279
  %v1141 = vunpack.c.l.b16 %v280
  %v1142 = vunpack.c.h.b16 %v280
  %v1143 = vunpack.c.l.b16 %v281
  %v1144 = vunpack.c.h.b16 %v281
  %v1145 = vunpack.c.l.b16 %v282
  %v1146 = vunpack.c.h.b16 %v282
  %v1147 = vunpack.c.l.b16 %v283
  %v1148 = vunpack.c.h.b16 %v283
  %v1149 = vunpack.c.l.b16 %v284
  %v1150 = vunpack.c.h.b16 %v284
  %v1151 = vunpack.c.l.b16 %v285
  %v1152 = vunpack.c.h.b16 %v285
  %v1153 = vunpack.c.l.b16 %v286
  %v1154 = vunpack.c.h.b16 %v286
  %v1155 = vunpack.c.l.b16 %v287
  %v1156 = vunpack.c.h.b16 %v287
  %v1157 = vunpack.c.l.b16 %v288
  %v1158 = vunpack.c.h.b16 %v288
  %v1159 = vunpack.c.l.b16 %v289
  %v1160 = vunpack.c.h.b16 %v289
  %v1161 = vunpack.c.l.b16 %v290
  %v1162 = vunpack.c.h.b16 %v290
  %v1163 = vunpack.c.l.b16 %v291
  %v1164 = vunpack.c.h.b16 %v291
  %v1165 = vunpack.c.l.b16 %v292
  %v1166 = vunpack.c.h.b16 %v292
  %v1167 = vunpack.c.l.b16 %v293
  %v1168 = vunpack.c.h.b16 %v293
  %v1169 = vunpack.c.l.b16 %v294
  %v1170 = vunpack.c.h.b16 %v294
  %v1171 = vunpack.c.l.b16 %v295
  %v1172 = vunpack.c.h.b16 %v295
  %v1173 = vunpack.c.l.b16 %v296
  %v1174 = vunpack.c.h.b16 %v296
  %v1175 = vunpack.c.l.b16 %v297
  %v1176 = vunpack.c.h.b16 %v297
  %v1177 = vunpack.c.l.b16 %v298
  %v1178 = vunpack.c.h.b16 %v298
  %v1179 = vunpack.c.l.b16 %v299
  %v1180 = vunpack.c.h.b16 %v299
  %v1181 = vunpack.c.l.b16 %v300
  %v1182 = vunpack.c.h.b16 %v300
  %v1183 = vunpack.c.l.b16 %v301
  %v1184 = vunpack.c.h.b16 %v301
  %v1185 = vunpack.c.l.b16 %v302
  %v1186 = vunpack.c.h.b16 %v302
  %v1187 = vunpack.c.l.b16 %v303
  %v1188 = vunpack.c.h.b16 %v303
  %v1189 = vunpack.c.l.b16 %v304
  %v1190 = vunpack.c.h.b16 %v304
  %v1191 = vunpack.c.l.b16 %v305
  %v1192 = vunpack.c.h.b16 %v305
  %v1193 = vunpack.c.l.b16 %v306
  %v1194 = vunpack.c.h.b16 %v306
  %v1195 = vunpack.c.l.b16 %v307
  %v1196 = vunpack.c.h.b16 %v307
  %v1197 = vunpack.c.l.b16 %v308
  %v1198 = vunpack.c.h.b16 %v308
  %v1199 = vunpack.c.l.b16 %v309
  %v1200 = vunpack.c.h.b16 %v309
  %v1201 = vunpack.c.l.b16 %v310
  %v1202 = vunpack.c.h.b16 %v310
  %v1203 = vunpack.c.l.b16 %v311
  %v1204 = vunpack.c.h.b16 %v311
  %v1205 = vunpack.c.l.b16 %v312
  %v1206 = vunpack.c.h.b16 %v312
  %v1207 = vunpack.c.l.b16 %v313
  %v1208 = vunpack.c.h.b16 %v313
  %v1209 = vunpack.c.l.b16 %v314
  %v1210 = vunpack.c.h.b16 %v314
  %v1211 = vunpack.c.l.b16 %v315
  %v1212 = vunpack.c.h.b16 %v315
  %v1213 = vunpack.c.l.b16 %v316
  %v1214 = vunpack.c.h.b16 %v316
  %v1215 = vunpack.c.l.b16 %v317
  %v1216 = vunpack.c.h.b16 %v317
  %v1217 = vunpack.c.l.b16 %v318
  %v1218 = vunpack.c.h.b16 %v318
  %v1219 = vunpack.c.l.b16 %v319
  %v1220 = vunpack.c.h.b16 %v319
  %v1221 = vunpack.c.l.b16 %v320
  %v1222 = vunpack.c.h.b16 %v320
  %v1223 = vunpack.c.l.b16 %v321
  %v1224 = vunpack.c.h.b16 %v321
  %v1225 = vunpack.c.l.b16 %v322
  %v1226 = vunpack.c.h.b16 %v322
  %v1227 = vunpack.c.l.b16 %v323
  %v1228 = vunpack.c.h.b16 %v323
  %v1229 = vunpack.c.l.b16 %v324
  %v1230 = vunpack.c.h.b16 %v324
  %v1231 = vunpack.c.l.b16 %v325
  %v1232 = vunpack.c.h.b16 %v325
  %v1233 = vunpack.c.l.b16 %v326
  %v1234 = vunpack.c.h.b16 %v326
  %v1235 = vunpack.c.l.b16 %v327
  %v1236 = vunpack.c.h.b16 %v327
  %v1237 = vunpack.c.l.b16 %v328
  %v1238 = vunpack.c.h.b16 %v328
  %v1239 = vunpack.c.l.b16 %v329
  %v1240 = vunpack.c.h.b16 %v329
  %v1241 = vunpack.c.l.b16 %v330
  %v1242 = vunpack.c.h.b16 %v330
  %v1243 = vunpack.c.l.b16 %v331
  %v1244 = vunpack.c.h.b16 %v331
  %v1245 = vunpack.c.l.b16 %v332
  %v1246 = vunpack.c.h.b16 %v332
  %v1247 = vunpack.c.l.b16 %v333
  %v1248 = vunpack.c.h.b16 %v333
  %v1249 = vunpack.c.l.b16 %v334
  %v1250 = vunpack.c.h.b16 %v334
  %v1251 = vunpack.c.l.b16 %v335
  %v1252 = vunpack.c.h.b16 %v335
  %v1253 = vpack.c.b16 %v683, %v677
  %v1254 = vpack.c.b16 %v684, %v678
  %v1255 = vpack.c.b16 %v685, %v679
  %v1256 = vpack.c.b16 %v686, %v680
  %v1257 = vpack.c.b16 %v687, %v681
  %v1258 = vpack.c.b16 %v688, %v682
  %v1259 = vpack.c.b16 %v695, %v689
  %v1260 = vpack.c.b16 %v696, %v690
  %v1261 = vpack.c.b16 %v697, %v691
  %v1262 = vpack.c.b16 %v698, %v692
  %v1263 = vpack.c.b16 %v699, %v693
  %v1264 = vpack.c.b16 %v700, %v694
  %v1265 = vpack.c.b16 %v707, %v701
  %v1266 = vpack.c.b16 %v708, %v702
  %v1267 = vpack.c.b16 %v709, %v703
  %v1268 = vpack.c.b16 %v710, %v704
  %v1269 = vpack.c.b16 %v711, %v705
  %v1270 = vpack.c.b16 %v712, %v706
  %v1271 = vpack.c.b16 %v719, %v713
  %v1272 = vpack.c.b16 %v720, %v714
  %v1273 = vpack.c.b16 %v721, %v715
  %v1274 = vpack.c.b16 %v722, %v716
  %v1275 = vpack.c.b16 %v723, %v717
  %v1276 = vpack.c.b16 %v724, %v718
  %v1277 = vpack.c.b16 %v731, %v725
  %v1278 = vpack.c.b16 %v732, %v726
  %v1279 = vpack.c.b16 %v733, %v727
  %v1280 = vpack.c.b16 %v734, %v728
  %v1281 = vpack.c.b16 %v735, %v729
  %v1282 = vpack.c.b16 %v736, %v730
  %v1283 = vpack.c.b16 %v743, %v737
  %v1284 = vpack.c.b16 %v744, %v738
  %v1285 = vpack.c.b16 %v745, %v739
  %v1286 = vpack.c.b16 %v746, %v740
  %v1287 = vpack.c.b16 %v747, %v741
  %v1288 = vpack.c.b16 %v748, %v742
  %v1289 = vpack.c.b16 %v755, %v749
  %v1290 = vpack.c.b16 %v756, %v750
  %v1291 = vpack.c.b16 %v757, %v751
  %v1292 = vpack.c.b16 %v758, %v752
  %v1293 = vpack.c.b16 %v759, %v753
  %v1294 = vpack.c.b16 %v760, %v754
  %v1295 = vpack.c.b16 %v767, %v761
  %v1296 = vpack.c.b16 %v768, %v762
  %v1297 = vpack.c.b16 %v769, %v763
  %v1298 = vpack.c.b16 %v770, %v764
  %v1299 = vpack.c.b16 %v771, %v765
  %v1300 = vpack.c.b16 %v772, %v766
  %v1301 = vpack.c.b16 %v779, %v773
  %v1302 = vpack.c.b16 %v780, %v774
  %v1303 = vpack.c.b16 %v781, %v775
  %v1304 = vpack.c.b16 %v782, %v776
  %v1305 = vpack.c.b16 %v783, %v777
  %v1306 = vpack.c.b16 %v784, %v778
  %v1307 = vpack.c.b16 %v791, %v785
  %v1308 = vpack.c.b16 %v792, %v786
  %v1309 = vpack.c.b16 %v793, %v787
  %v1310 = vpack.c.b16 %v794, %v788
  %v1311 = vpack.c.b16 %v795, %v789
  %v1312 = vpack.c.b16 %v796, %v790
  %v1313 = vpack.c.b16 %v803, %v797
  %v1314 = vpack.c.b16 %v804, %v798
  %v1315 = vpack.c.b16 %v805, %v799
  %v1316 = vpack.c.b16 %v806, %v800
  %v1317 = vpack.c.b16 %v807, %v801
  %v1318 = vpack.c.b16 %v808, %v802
  %v1319 = vpack.c.b16 %v815, %v809
  %v1320 = vpack.c.b16 %v816, %v810
  %v1321 = vpack.c.b16 %v817, %v811
  %v1322 = vpack.c.b16 %v818, %v812
  %v1323 = vpack.c.b16 %v819, %v813
  %v1324 = vpack.c.b16 %v820, %v814
  %v1325 = vpack.c.b16 %v827, %v821
  %v1326 = vpack.c.b16 %v828, %v822
  %v1327 = vpack.c.b16 %v829, %v823
  %v1328 = vpack.c.b16 %v830, %v824
  %v1329 = vpack.c.b16 %v831, %v825
  %v1330 = vpack.c.b16 %v832, %v826
  %v1331 = vpack.c.b16 %v839, %v833
  %v1332 = vpack.c.b16 %v840, %v834
  %v1333 = vpack.c.b16 %v841, %v835
  %v1334 = vpack.c.b16 %v842, %v836
  %v1335 = vpack.c.b16 %v843, %v837
  %v1336 = vpack.c.b16 %v844, %v838
  %v1337 = vpack.c.b16 %v851, %v845
  %v1338 = vpack.c.b16 %v852, %v846
  %v1339 = vpack.c.b16 %v853, %v847
  %v1340 = vpack.c.b16 %v854, %v848
  %v1341 = vpack.c.b16 %v855, %v849
  %v1342 = vpack.c.b16 %v856, %v850
  %v1343 = vpack.c.b16 %v863, %v857
  %v1344 = vpack.c.b16 %v864, %v858
  %v1345 = vpack.c.b16 %v865, %v859
  %v1346 = vpack.c.b16 %v866, %v860
  %v1347 = vpack.c.b16 %v867, %v861
  %v1348 = vpack.c.b16 %v868, %v862
  %v1349 = vpack.c.b16 %v875, %v869
  %v1350 = vpack.c.b16 %v876, %v870
  %v1351 = vpack.c.b16 %v877, %v871
  %v1352 = vpack.c.b16 %v878, %v872
  %v1353 = vpack.c.b16 %v879, %v873
  %v1354 = vpack.c.b16 %v880, %v874
  %v1355 = vpack.c.b16 %v887, %v881
  %v1356 = vpack.c.b16 %v888, %v882
  %v1357 = vpack.c.b16 %v889, %v883
  %v1358 = vpack.c.b16 %v890, %v884
  %v1359 = vpack.c.b16 %v891, %v885
  %v1360 = vpack.c.b16 %v892, %v886
  %v1361 = vpack.c.b16 %v899, %v893
  %v1362 = vpack.c.b16 %v900, %v894
  %v1363 = vpack.c.b16 %v901, %v895
  %v1364 = vpack.c.b16 %v902, %v896
  %v1365 = vpack.c.b16 %v903, %v897
  %v1366 = vpack.c.b16 %v904, %v898
  %v1367 = vpack.c.b16 %v911, %v905
  %v1368 = vpack.c.b16 %v912, %v906
  %v1369 = vpack.c.b16 %v913, %v907
  %v1370 = vpack.c.b16 %v914, %v908
  %v1371 = vpack.c.b16 %v915, %v909
  %v1372 = vpack.c.b16 %v916, %v910
  %v1373 = vpack.c.b16 %v923, %v917
  %v1374 = vpack.c.b16 %v924, %v918
  %v1375 = vpack.c.b16 %v925, %v919
  %v1376 = vpack.c.b16 %v926, %v920
  %v1377 = vpack.c.b16 %v927, %v921
  %v1378 = vpack.c.b16 %v928, %v922
  %v1379 = vpack.c.b16 %v935, %v929
  %v1380 = vpack.c.b16 %v936, %v930
  %v1381 = vpack.c.b16 %v937, %v931
  %v1382 = vpack.c.b16 %v938, %v932
  %v1383 = vpack.c.b16 %v939, %v933
  %v1384 = vpack.c.b16 %v940, %v934
  %v1385 = vpack.c.b16 %v947, %v941
  %v1386 = vpack.c.b16 %v948, %v942
  %v1387 = vpack.c.b16 %v949, %v943
  %v1388 = vpack.c.b16 %v950, %v944
  %v1389 = vpack.c.b16 %v951, %v945
  %v1390 = vpack.c.b16 %v952, %v946
  %v1391 = vpack.c.b16 %v959, %v953
  %v1392 = vpack.c.b16 %v960, %v954
  %v1393 = vpack.c.b16 %v961, %v955
  %v1394 = vpack.c.b16 %v962, %v956
  %v1395 = vpack.c.b16 %v963, %v957
  %v1396 = vpack.c.b16 %v964, %v958
  %v1397 = vpack.c.b16 %v971, %v965
  %v1398 = vpack.c.b16 %v972, %v966
  %v1399 = vpack.c.b16 %v973, %v967
  %v1400 = vpack.c.b16 %v974, %v968
  %v1401 = vpack.c.b16 %v975, %v969
  %v1402 = vpack.c.b16 %v976, %v970
  %v1403 = vpack.c.b16 %v983, %v977
  %v1404 = vpack.c.b16 %v984, %v978
  %v1405 = vpack.c.b16 %v985, %v979
  %v1406 = vpack.c.b16 %v986, %v980
  %v1407 = vpack.c.b16 %v987, %v981
  %v1408 = vpack.c.b16 %v988, %v982
  %v1409 = vpack.c.b16 %v995, %v989
  %v1410 = vpack.c.b16 %v996, %v990
  %v1411 = vpack.c.b16 %v997, %v991
  %v1412 = vpack.c.b16 %v998, %v992
  %v1413 = vpack.c.b16 %v999, %v993
  %v1414 = vpack.c.b16 %v1000, %v994
  %v1415 = vpack.c.b16 %v1007, %v1001
  %v1416 = vpack.c.b16 %v1008, %v1002
  %v1417 = vpack.c.b16 %v1009, %v1003
  %v1418 = vpack.c.b16 %v1010, %v1004
  %v1419 = vpack.c.b16 %v1011, %v1005
  %v1420 = vpack.c.b16 %v1012, %v1006
  %v1421 = vpack.c.b16 %v1019, %v1013
  %v1422 = vpack.c.b16 %v1020, %v1014
  %v1423 = vpack.c.b16 %v1021, %v1015
  %v1424 = vpack.c.b16 %v1022, %v1016
  %v1425 = vpack.c.b16 %v1023, %v1017
  %v1426 = vpack.c.b16 %v1024, %v1018
  %v1427 = vpack.c.b16 %v1031, %v1025
  %v1428 = vpack.c.b16 %v1032, %v1026
  %v1429 = vpack.c.b16 %v1033, %v1027
  %v1430 = vpack.c.b16 %v1034, %v1028
  %v1431 = vpack.c.b16 %v1035, %v1029
  %v1432 = vpack.c.b16 %v1036, %v1030
  %v1433 = vpack.c.b16 %v1043, %v1037
  %v1434 = vpack.c.b16 %v1044, %v1038
  %v1435 = vpack.c.b16 %v1045, %v1039
  %v1436 = vpack.c.b16 %v1046, %v1040
  %v1437 = vpack.c.b16 %v1047, %v1041
  %v1438 = vpack.c.b16 %v1048, %v1042
  %v1439 = vpack.c.b16 %v1055, %v1049
  %v1440 = vpack.c.b16 %v1056, %v1050
  %v1441 = vpack.c.b16 %v1057, %v1051
  %v1442 = vpack.c.b16 %v1058, %v1052
  %v1443 = vpack.c.b16 %v1059, %v1053
  %v1444 = vpack.c.b16 %v1060, %v1054
  %v1445 = vpack.c.b16 %v1067, %v1061
  %v1446 = vpack.c.b16 %v1068, %v1062
  %v1447 = vpack.c.b16 %v1069, %v1063
  %v1448 = vpack.c.b16 %v1070, %v1064
  %v1449 = vpack.c.b16 %v1071, %v1065
  %v1450 = vpack.c.b16 %v1072, %v1066
  %v1451 = vpack.c.b16 %v1079, %v1073
  %v1452 = vpack.c.b16 %v1080, %v1074
  %v1453 = vpack.c.b16 %v1081, %v1075
  %v1454 = vpack.c.b16 %v1082, %v1076
  %v1455 = vpack.c.b16 %v1083, %v1077
  %v1456 = vpack.c.b16 %v1084, %v1078
  %v1457 = vpack.c.b16 %v1091, %v1085
  %v1458 = vpack.c.b16 %v1092, %v1086
  %v1459 = vpack.c.b16 %v1093, %v1087
  %v1460 = vpack.c.b16 %v1094, %v1088
  %v1461 = vpack.c.b16 %v1095, %v1089
  %v1462 = vpack.c.b16 %v1096, %v1090
  %v1463 = vpack.c.b16 %v1103, %v1097
  %v1464 = vpack.c.b16 %v1104, %v1098
  %v1465 = vpack.c.b16 %v1105, %v1099
  %v1466 = vpack.c.b16 %v1106, %v1100
  %v1467 = vpack.c.b16 %v1107, %v1101
  %v1468 = vpack.c.b16 %v1108, %v1102
  %v1469 = vpack.c.b16 %v1115, %v1109
  %v1470 = vpack.c.b16 %v1116, %v1110
  %v1471 = vpack.c.b16 %v1117, %v1111
  %v1472 = vpack.c.b16 %v1118, %v1112
  %v1473 = vpack.c.b16 %v1119, %v1113
  %v1474 = vpack.c.b16 %v1120, %v1114
  %v1475 = vpack.c.b16 %v1127, %v1121
  %v1476 = vpack.c.b16 %v1128, %v1122
  %v1477 = vpack.c.b16 %v1129, %v1123
  %v1478 = vpack.c.b16 %v1130, %v1124
  %v1479 = vpack.c.b16 %v1131, %v1125
  %v1480 = vpack.c.b16 %v1132, %v1126
  %v1481 = vpack.c.b16 %v1139, %v1133
  %v1482 = vpack.c.b16 %v1140, %v1134
  %v1483 = vpack.c.b16 %v1141, %v1135
  %v1484 = vpack.c.b16 %v1142, %v1136
  %v1485 = vpack.c.b16 %v1143, %v1137
  %v1486 = vpack.c.b16 %v1144, %v1138
  %v1487 = vpack.c.b16 %v1151, %v1145
  %v1488 = vpack.c.b16 %v1152, %v1146
  %v1489 = vpack.c.b16 %v1153, %v1147
  %v1490 = vpack.c.b16 %v1154, %v1148
  %v1491 = vpack.c.b16 %v1155, %v1149
  %v1492 = vpack.c.b16 %v1156, %v1150
  %v1493 = vpack.c.b16 %v1163, %v1157
  %v1494 = vpack.c.b16 %v1164, %v1158
  %v1495 = vpack.c.b16 %v1165, %v1159
  %v1496 = vpack.c.b16 %v1166, %v1160
  %v1497 = vpack.c.b16 %v1167, %v1161
  %v1498 = vpack.c.b16 %v1168, %v1162
  %v1499 = vpack.c.b16 %v1175, %v1169
  %v1500 = vpack.c.b16 %v1176, %v1170
  %v1501 = vpack.c.b16 %v1177, %v1171
  %v1502 = vpack.c.b16 %v1178, %v1172
  %v1503 = vpack.c.b16 %v1179, %v1173
  %v1504 = vpack.c.b16 %v1180, %v1174
  %v1505 = vpack.c.b16 %v1187, %v1181
  %v1506 = vpack.c.b16 %v1188, %v1182
  %v1507 = vpack.c.b16 %v1189, %v1183
  %v1508 = vpack.c.b16 %v1190, %v1184
  %v1509 = vpack.c.b16 %v1191, %v1185
  %v1510 = vpack.c.b16 %v1192, %v1186
  %v1511 = vpack.c.b16 %v1199, %v1193
  %v1512 = vpack.c.b16 %v1200, %v1194
  %v1513 = vpack.c.b16 %v1201, %v1195
  %v1514 = vpack.c.b16 %v1202, %v1196
  %v1515 = vpack.c.b16 %v1203, %v1197
  %v1516 = vpack.c.b16 %v1204, %v1198
  %v1517 = vpack.c.b16 %v1211, %v1205
  %v1518 = vpack.c.b16 %v1212, %v1206
  %v1519 = vpack.c.b16 %v1213, %v1207
  %v1520 = vpack.c.b16 %v1214, %v1208
  %v1521 = vpack.c.b16 %v1215, %v1209
  %v1522 = vpack.c.b16 %v1216, %v1210
  %v1523 = vpack.c.b16 %v1223, %v1217
  %v1524 = vpack.c.b16 %v1224, %v1218
  %v1525 = vpack.c.b16 %v1225, %v1219
  %v1526 = vpack.c.b16 %v1226, %v1220
  %v1527 = vpack.c.b16 %v1227, %v1221
  %v1528 = vpack.c.b16 %v1228, %v1222
  %v1529 = vpack.c.b16 %v1235, %v1229
  %v1530 = vpack.c.b16 %v1236, %v1230
  %v1531 = vpack.c.b16 %v1237, %v1231
  %v1532 = vpack.c.b16 %v1238, %v1232
  %v1533 = vpack.c.b16 %v1239, %v1233
  %v1534 = vpack.c.b16 %v1240, %v1234
  %v1535 = vpack.c.b16 %v1247, %v1241
  %v1536 = vpack.c.b16 %v1248, %v1242
  %v1537 = vpack.c.b16 %v1249, %v1243
  %v1538 = vpack.c.b16 %v1250, %v1244
  %v1539 = vpack.c.b16 %v1251, %v1245
  %v1540 = vpack.c.b16 %v1252, %v1246
  %1829 = vmatprep.subr.bf16.mxu0 %v1254
  %1830 = vmatpush1.bf16.msra.mxu0 %v1253
  %1831 = vmatprep.subr.bf16.mxu0 %v1260
  %1832 = vmatpush1.bf16.msra.mxu0 %v1259
  %1833 = vmatprep.subr.bf16.mxu0 %v1266
  %1834 = vmatpush1.bf16.msra.mxu0 %v1265
  %1835 = vmatprep.subr.bf16.mxu0 %v1272
  %1836 = vmatpush1.bf16.msra.mxu0 %v1271
  %1837 = vmatprep.subr.bf16.mxu0 %v1278
  %1838 = vmatpush1.bf16.msra.mxu0 %v1277
  %1839 = vmatprep.subr.bf16.mxu0 %v1284
  %1840 = vmatpush1.bf16.msra.mxu0 %v1283
  %1841 = vmatprep.subr.bf16.mxu0 %v1290
  %1842 = vmatpush1.bf16.msra.mxu0 %v1289
  %1843 = vmatprep.subr.bf16.mxu0 %v1296
  %1844 = vmatpush1.bf16.msra.mxu0 %v1295
  %1845 = vmatprep.subr.bf16.mxu0 %v1302
  %1846 = vmatpush1.bf16.msra.mxu0 %v1301
  %1847 = vmatprep.subr.bf16.mxu0 %v1308
  %1848 = vmatpush1.bf16.msra.mxu0 %v1307
  %1849 = vmatprep.subr.bf16.mxu0 %v1314
  %1850 = vmatpush1.bf16.msra.mxu0 %v1313
  %1851 = vmatprep.subr.bf16.mxu0 %v1320
  %1852 = vmatpush1.bf16.msra.mxu0 %v1319
  %1853 = vmatprep.subr.bf16.mxu0 %v1326
  %1854 = vmatpush1.bf16.msra.mxu0 %v1325
  %1855 = vmatprep.subr.bf16.mxu0 %v1332
  %1856 = vmatpush1.bf16.msra.mxu0 %v1331
  %1857 = vmatprep.subr.bf16.mxu0 %v1338
  %1858 = vmatpush1.bf16.msra.mxu0 %v1337
  %1859 = vmatprep.subr.bf16.mxu0 %v1344
  %1860 = vmatpush1.bf16.msra.mxu0 %v1343
  %1861 = vmatprep.mubr.bf16.mxu0 %v378
  %1862 = vmatmul.mubr.bf16.gmra.mrb[0].mxu0 %v377
  %v1863 = vpop.f32.mrb[0].mxu0
  %v1864 = vadd.f32 %v341, %v1863
  %v1865 = vpop.f32.mrb[0].mxu0
  %v1866 = vadd.f32 %v345, %v1865
  %v1867 = vpop.f32.mrb[0].mxu0
  %v1868 = vpop.f32.mrb[0].mxu0
  %1869 = vdwg.mxu0
  %1870 = vmatprep.subr.bf16.mxu0 %v1350
  %1871 = vmatpush1.bf16.msra.mxu0 %v1349
  %1872 = vmatprep.subr.bf16.mxu0 %v1356
  %1873 = vmatpush1.bf16.msra.mxu0 %v1355
  %1874 = vmatprep.subr.bf16.mxu0 %v1362
  %1875 = vmatpush1.bf16.msra.mxu0 %v1361
  %1876 = vmatprep.subr.bf16.mxu0 %v1368
  %1877 = vmatpush1.bf16.msra.mxu0 %v1367
  %1878 = vmatprep.subr.bf16.mxu0 %v1374
  %1879 = vmatpush1.bf16.msra.mxu0 %v1373
  %1880 = vmatprep.subr.bf16.mxu0 %v1380
  %1881 = vmatpush1.bf16.msra.mxu0 %v1379
  %1882 = vmatprep.subr.bf16.mxu0 %v1386
  %1883 = vmatpush1.bf16.msra.mxu0 %v1385
  %1884 = vmatprep.subr.bf16.mxu0 %v1392
  %1885 = vmatpush1.bf16.msra.mxu0 %v1391
  %1886 = vmatprep.subr.bf16.mxu0 %v1398
  %1887 = vmatpush1.bf16.msra.mxu0 %v1397
  %1888 = vmatprep.subr.bf16.mxu0 %v1404
  %1889 = vmatpush1.bf16.msra.mxu0 %v1403
  %1890 = vmatprep.subr.bf16.mxu0 %v1410
  %1891 = vmatpush1.bf16.msra.mxu0 %v1409
  %1892 = vmatprep.subr.bf16.mxu0 %v1416
  %1893 = vmatpush1.bf16.msra.mxu0 %v1415
  %1894 = vmatprep.subr.bf16.mxu0 %v1422
  %1895 = vmatpush1.bf16.msra.mxu0 %v1421
  %1896 = vmatprep.subr.bf16.mxu0 %v1428
  %1897 = vmatpush1.bf16.msra.mxu0 %v1427
  %1898 = vmatprep.subr.bf16.mxu0 %v1434
  %1899 = vmatpush1.bf16.msra.mxu0 %v1433
  %1900 = vmatprep.subr.bf16.mxu0 %v1440
  %1901 = vmatpush1.bf16.msra.mxu0 %v1439
  %1902 = vmatprep.mubr.bf16.mxu0 %v380
  %1903 = vmatmul.mubr.bf16.gmra.mrb[0].mxu0 %v379
  %v1904 = vpop.f32.mrb[0].mxu0
  %v1905 = vadd.f32 %v1864, %v1904
  %v1906 = vpop.f32.mrb[0].mxu0
  %v1907 = vadd.f32 %v1866, %v1906
  %v1908 = vpop.f32.mrb[0].mxu0
  %v1909 = vpop.f32.mrb[0].mxu0
  %1910 = vdwg.mxu0
  %1911 = vmatprep.subr.bf16.mxu0 %v1446
  %1912 = vmatpush1.bf16.msra.mxu0 %v1445
  %1913 = vmatprep.subr.bf16.mxu0 %v1452
  %1914 = vmatpush1.bf16.msra.mxu0 %v1451
  %1915 = vmatprep.subr.bf16.mxu0 %v1458
  %1916 = vmatpush1.bf16.msra.mxu0 %v1457
  %1917 = vmatprep.subr.bf16.mxu0 %v1464
  %1918 = vmatpush1.bf16.msra.mxu0 %v1463
  %1919 = vmatprep.subr.bf16.mxu0 %v1470
  %1920 = vmatpush1.bf16.msra.mxu0 %v1469
  %1921 = vmatprep.subr.bf16.mxu0 %v1476
  %1922 = vmatpush1.bf16.msra.mxu0 %v1475
  %1923 = vmatprep.subr.bf16.mxu0 %v1482
  %1924 = vmatpush1.bf16.msra.mxu0 %v1481
  %1925 = vmatprep.subr.bf16.mxu0 %v1488
  %1926 = vmatpush1.bf16.msra.mxu0 %v1487
  %1927 = vmatprep.subr.bf16.mxu0 %v1494
  %1928 = vmatpush1.bf16.msra.mxu0 %v1493
  %1929 = vmatprep.subr.bf16.mxu0 %v1500
  %1930 = vmatpush1.bf16.msra.mxu0 %v1499
  %1931 = vmatprep.subr.bf16.mxu0 %v1506
  %1932 = vmatpush1.bf16.msra.mxu0 %v1505
  %1933 = vmatprep.subr.bf16.mxu0 %v1512
  %1934 = vmatpush1.bf16.msra.mxu0 %v1511
  %1935 = vmatprep.subr.bf16.mxu0 %v1518
  %1936 = vmatpush1.bf16.msra.mxu0 %v1517
  %1937 = vmatprep.subr.bf16.mxu0 %v1524
  %1938 = vmatpush1.bf16.msra.mxu0 %v1523
  %1939 = vmatprep.subr.bf16.mxu0 %v1530
  %1940 = vmatpush1.bf16.msra.mxu0 %v1529
  %1941 = vmatprep.subr.bf16.mxu0 %v1536
  %1942 = vmatpush1.bf16.msra.mxu0 %v1535
  %1943 = vmatprep.mubr.bf16.mxu0 %v382
  %1944 = vmatmul.mubr.bf16.gmra.mrb[0].mxu0 %v381
  %v1945 = vpop.f32.mrb[0].mxu0
  %v1946 = vadd.f32 %v1905, %v1945
  %v1947 = vpop.f32.mrb[0].mxu0
  %v1948 = vadd.f32 %v1907, %v1947
  %v1949 = vpop.f32.mrb[0].mxu0
  %v1950 = vpop.f32.mrb[0].mxu0
  %1951 = vdwg.mxu0
  %1952 = vmatprep.subr.bf16.mxu0 %v1256
  %1953 = vmatpush1.bf16.msra.mxu0 %v1255
  %1954 = vmatprep.subr.bf16.mxu0 %v1262
  %1955 = vmatpush1.bf16.msra.mxu0 %v1261
  %1956 = vmatprep.subr.bf16.mxu0 %v1268
  %1957 = vmatpush1.bf16.msra.mxu0 %v1267
  %1958 = vmatprep.subr.bf16.mxu0 %v1274
  %1959 = vmatpush1.bf16.msra.mxu0 %v1273
  %1960 = vmatprep.subr.bf16.mxu0 %v1280
  %1961 = vmatpush1.bf16.msra.mxu0 %v1279
  %1962 = vmatprep.subr.bf16.mxu0 %v1286
  %1963 = vmatpush1.bf16.msra.mxu0 %v1285
  %1964 = vmatprep.subr.bf16.mxu0 %v1292
  %1965 = vmatpush1.bf16.msra.mxu0 %v1291
  %1966 = vmatprep.subr.bf16.mxu0 %v1298
  %1967 = vmatpush1.bf16.msra.mxu0 %v1297
  %1968 = vmatprep.subr.bf16.mxu0 %v1304
  %1969 = vmatpush1.bf16.msra.mxu0 %v1303
  %1970 = vmatprep.subr.bf16.mxu0 %v1310
  %1971 = vmatpush1.bf16.msra.mxu0 %v1309
  %1972 = vmatprep.subr.bf16.mxu0 %v1316
  %1973 = vmatpush1.bf16.msra.mxu0 %v1315
  %1974 = vmatprep.subr.bf16.mxu0 %v1322
  %1975 = vmatpush1.bf16.msra.mxu0 %v1321
  %1976 = vmatprep.subr.bf16.mxu0 %v1328
  %1977 = vmatpush1.bf16.msra.mxu0 %v1327
  %1978 = vmatprep.subr.bf16.mxu0 %v1334
  %1979 = vmatpush1.bf16.msra.mxu0 %v1333
  %1980 = vmatprep.subr.bf16.mxu0 %v1340
  %1981 = vmatpush1.bf16.msra.mxu0 %v1339
  %1982 = vmatprep.subr.bf16.mxu0 %v1346
  %1983 = vmatpush1.bf16.msra.mxu0 %v1345
  %1984 = vmatprep.mubr.bf16.mxu0 %v378
  %1985 = vmatmul.mubr.bf16.gmra.mrb[0].mxu0 %v377
  %v1986 = vpop.f32.mrb[0].mxu0
  %v1987 = vadd.f32 %v349, %v1986
  %v1988 = vpop.f32.mrb[0].mxu0
  %v1989 = vadd.f32 %v353, %v1988
  %v1990 = vpop.f32.mrb[0].mxu0
  %v1991 = vpop.f32.mrb[0].mxu0
  %1992 = vdwg.mxu0
  %1993 = vmatprep.subr.bf16.mxu0 %v1352
  %1994 = vmatpush1.bf16.msra.mxu0 %v1351
  %1995 = vmatprep.subr.bf16.mxu0 %v1358
  %1996 = vmatpush1.bf16.msra.mxu0 %v1357
  %1997 = vmatprep.subr.bf16.mxu0 %v1364
  %1998 = vmatpush1.bf16.msra.mxu0 %v1363
  %1999 = vmatprep.subr.bf16.mxu0 %v1370
  %2000 = vmatpush1.bf16.msra.mxu0 %v1369
  %2001 = vmatprep.subr.bf16.mxu0 %v1376
  %2002 = vmatpush1.bf16.msra.mxu0 %v1375
  %2003 = vmatprep.subr.bf16.mxu0 %v1382
  %2004 = vmatpush1.bf16.msra.mxu0 %v1381
  %2005 = vmatprep.subr.bf16.mxu0 %v1388
  %2006 = vmatpush1.bf16.msra.mxu0 %v1387
  %2007 = vmatprep.subr.bf16.mxu0 %v1394
  %2008 = vmatpush1.bf16.msra.mxu0 %v1393
  %2009 = vmatprep.subr.bf16.mxu0 %v1400
  %2010 = vmatpush1.bf16.msra.mxu0 %v1399
  %2011 = vmatprep.subr.bf16.mxu0 %v1406
  %2012 = vmatpush1.bf16.msra.mxu0 %v1405
  %2013 = vmatprep.subr.bf16.mxu0 %v1412
  %2014 = vmatpush1.bf16.msra.mxu0 %v1411
  %2015 = vmatprep.subr.bf16.mxu0 %v1418
  %2016 = vmatpush1.bf16.msra.mxu0 %v1417
  %2017 = vmatprep.subr.bf16.mxu0 %v1424
  %2018 = vmatpush1.bf16.msra.mxu0 %v1423
  %2019 = vmatprep.subr.bf16.mxu0 %v1430
  %2020 = vmatpush1.bf16.msra.mxu0 %v1429
  %2021 = vmatprep.subr.bf16.mxu0 %v1436
  %2022 = vmatpush1.bf16.msra.mxu0 %v1435
  %2023 = vmatprep.subr.bf16.mxu0 %v1442
  %2024 = vmatpush1.bf16.msra.mxu0 %v1441
  %2025 = vmatprep.mubr.bf16.mxu0 %v380
  %2026 = vmatmul.mubr.bf16.gmra.mrb[0].mxu0 %v379
  %v2027 = vpop.f32.mrb[0].mxu0
  %v2028 = vadd.f32 %v1987, %v2027
  %v2029 = vpop.f32.mrb[0].mxu0
  %v2030 = vadd.f32 %v1989, %v2029
  %v2031 = vpop.f32.mrb[0].mxu0
  %v2032 = vpop.f32.mrb[0].mxu0
  %2033 = vdwg.mxu0
  %2034 = vmatprep.subr.bf16.mxu0 %v1448
  %2035 = vmatpush1.bf16.msra.mxu0 %v1447
  %2036 = vmatprep.subr.bf16.mxu0 %v1454
  %2037 = vmatpush1.bf16.msra.mxu0 %v1453
  %2038 = vmatprep.subr.bf16.mxu0 %v1460
  %2039 = vmatpush1.bf16.msra.mxu0 %v1459
  %2040 = vmatprep.subr.bf16.mxu0 %v1466
  %2041 = vmatpush1.bf16.msra.mxu0 %v1465
  %2042 = vmatprep.subr.bf16.mxu0 %v1472
  %2043 = vmatpush1.bf16.msra.mxu0 %v1471
  %2044 = vmatprep.subr.bf16.mxu0 %v1478
  %2045 = vmatpush1.bf16.msra.mxu0 %v1477
  %2046 = vmatprep.subr.bf16.mxu0 %v1484
  %2047 = vmatpush1.bf16.msra.mxu0 %v1483
  %2048 = vmatprep.subr.bf16.mxu0 %v1490
  %2049 = vmatpush1.bf16.msra.mxu0 %v1489
  %2050 = vmatprep.subr.bf16.mxu0 %v1496
  %2051 = vmatpush1.bf16.msra.mxu0 %v1495
  %2052 = vmatprep.subr.bf16.mxu0 %v1502
  %2053 = vmatpush1.bf16.msra.mxu0 %v1501
  %2054 = vmatprep.subr.bf16.mxu0 %v1508
  %2055 = vmatpush1.bf16.msra.mxu0 %v1507
  %2056 = vmatprep.subr.bf16.mxu0 %v1514
  %2057 = vmatpush1.bf16.msra.mxu0 %v1513
  %2058 = vmatprep.subr.bf16.mxu0 %v1520
  %2059 = vmatpush1.bf16.msra.mxu0 %v1519
  %2060 = vmatprep.subr.bf16.mxu0 %v1526
  %2061 = vmatpush1.bf16.msra.mxu0 %v1525
  %2062 = vmatprep.subr.bf16.mxu0 %v1532
  %2063 = vmatpush1.bf16.msra.mxu0 %v1531
  %2064 = vmatprep.subr.bf16.mxu0 %v1538
  %2065 = vmatpush1.bf16.msra.mxu0 %v1537
  %2066 = vmatprep.mubr.bf16.mxu0 %v382
  %2067 = vmatmul.mubr.bf16.gmra.mrb[0].mxu0 %v381
  %v2068 = vpop.f32.mrb[0].mxu0
  %v2069 = vadd.f32 %v2028, %v2068
  %v2070 = vpop.f32.mrb[0].mxu0
  %v2071 = vadd.f32 %v2030, %v2070
  %v2072 = vpop.f32.mrb[0].mxu0
  %v2073 = vpop.f32.mrb[0].mxu0
  %2074 = vdwg.mxu0
  %2075 = vmatprep.subr.bf16.mxu0 %v1258
  %2076 = vmatpush1.bf16.msra.mxu0 %v1257
  %2077 = vmatprep.subr.bf16.mxu0 %v1264
  %2078 = vmatpush1.bf16.msra.mxu0 %v1263
  %2079 = vmatprep.subr.bf16.mxu0 %v1270
  %2080 = vmatpush1.bf16.msra.mxu0 %v1269
  %2081 = vmatprep.subr.bf16.mxu0 %v1276
  %2082 = vmatpush1.bf16.msra.mxu0 %v1275
  %2083 = vmatprep.subr.bf16.mxu0 %v1282
  %2084 = vmatpush1.bf16.msra.mxu0 %v1281
  %2085 = vmatprep.subr.bf16.mxu0 %v1288
  %2086 = vmatpush1.bf16.msra.mxu0 %v1287
  %2087 = vmatprep.subr.bf16.mxu0 %v1294
  %2088 = vmatpush1.bf16.msra.mxu0 %v1293
  %2089 = vmatprep.subr.bf16.mxu0 %v1300
  %2090 = vmatpush1.bf16.msra.mxu0 %v1299
  %2091 = vmatprep.subr.bf16.mxu0 %v1306
  %2092 = vmatpush1.bf16.msra.mxu0 %v1305
  %2093 = vmatprep.subr.bf16.mxu0 %v1312
  %2094 = vmatpush1.bf16.msra.mxu0 %v1311
  %2095 = vmatprep.subr.bf16.mxu0 %v1318
  %2096 = vmatpush1.bf16.msra.mxu0 %v1317
  %2097 = vmatprep.subr.bf16.mxu0 %v1324
  %2098 = vmatpush1.bf16.msra.mxu0 %v1323
  %2099 = vmatprep.subr.bf16.mxu0 %v1330
  %2100 = vmatpush1.bf16.msra.mxu0 %v1329
  %2101 = vmatprep.subr.bf16.mxu0 %v1336
  %2102 = vmatpush1.bf16.msra.mxu0 %v1335
  %2103 = vmatprep.subr.bf16.mxu0 %v1342
  %2104 = vmatpush1.bf16.msra.mxu0 %v1341
  %2105 = vmatprep.subr.bf16.mxu0 %v1348
  %2106 = vmatpush1.bf16.msra.mxu0 %v1347
  %2107 = vmatprep.mubr.bf16.mxu0 %v378
  %2108 = vmatmul.mubr.bf16.gmra.mrb[0].mxu0 %v377
  %v2109 = vpop.f32.mrb[0].mxu0
  %v2110 = vadd.f32 %v357, %v2109
  %v2111 = vpop.f32.mrb[0].mxu0
  %v2112 = vadd.f32 %v361, %v2111
  %v2113 = vpop.f32.mrb[0].mxu0
  %v2114 = vpop.f32.mrb[0].mxu0
  %2115 = vdwg.mxu0
  %2116 = vmatprep.subr.bf16.mxu0 %v1354
  %2117 = vmatpush1.bf16.msra.mxu0 %v1353
  %2118 = vmatprep.subr.bf16.mxu0 %v1360
  %2119 = vmatpush1.bf16.msra.mxu0 %v1359
  %2120 = vmatprep.subr.bf16.mxu0 %v1366
  %2121 = vmatpush1.bf16.msra.mxu0 %v1365
  %2122 = vmatprep.subr.bf16.mxu0 %v1372
  %2123 = vmatpush1.bf16.msra.mxu0 %v1371
  %2124 = vmatprep.subr.bf16.mxu0 %v1378
  %2125 = vmatpush1.bf16.msra.mxu0 %v1377
  %2126 = vmatprep.subr.bf16.mxu0 %v1384
  %2127 = vmatpush1.bf16.msra.mxu0 %v1383
  %2128 = vmatprep.subr.bf16.mxu0 %v1390
  %2129 = vmatpush1.bf16.msra.mxu0 %v1389
  %2130 = vmatprep.subr.bf16.mxu0 %v1396
  %2131 = vmatpush1.bf16.msra.mxu0 %v1395
  %2132 = vmatprep.subr.bf16.mxu0 %v1402
  %2133 = vmatpush1.bf16.msra.mxu0 %v1401
  %2134 = vmatprep.subr.bf16.mxu0 %v1408
  %2135 = vmatpush1.bf16.msra.mxu0 %v1407
  %2136 = vmatprep.subr.bf16.mxu0 %v1414
  %2137 = vmatpush1.bf16.msra.mxu0 %v1413
  %2138 = vmatprep.subr.bf16.mxu0 %v1420
  %2139 = vmatpush1.bf16.msra.mxu0 %v1419
  %2140 = vmatprep.subr.bf16.mxu0 %v1426
  %2141 = vmatpush1.bf16.msra.mxu0 %v1425
  %2142 = vmatprep.subr.bf16.mxu0 %v1432
  %2143 = vmatpush1.bf16.msra.mxu0 %v1431
  %2144 = vmatprep.subr.bf16.mxu0 %v1438
  %2145 = vmatpush1.bf16.msra.mxu0 %v1437
  %2146 = vmatprep.subr.bf16.mxu0 %v1444
  %2147 = vmatpush1.bf16.msra.mxu0 %v1443
  %2148 = vmatprep.mubr.bf16.mxu0 %v380
  %2149 = vmatmul.mubr.bf16.gmra.mrb[0].mxu0 %v379
  %v2150 = vpop.f32.mrb[0].mxu0
  %v2151 = vadd.f32 %v2110, %v2150
  %v2152 = vpop.f32.mrb[0].mxu0
  %v2153 = vadd.f32 %v2112, %v2152
  %v2154 = vpop.f32.mrb[0].mxu0
  %v2155 = vpop.f32.mrb[0].mxu0
  %2156 = vdwg.mxu0
  %2157 = vmatprep.subr.bf16.mxu0 %v1450
  %2158 = vmatpush1.bf16.msra.mxu0 %v1449
  %2159 = vmatprep.subr.bf16.mxu0 %v1456
  %2160 = vmatpush1.bf16.msra.mxu0 %v1455
  %2161 = vmatprep.subr.bf16.mxu0 %v1462
  %2162 = vmatpush1.bf16.msra.mxu0 %v1461
  %2163 = vmatprep.subr.bf16.mxu0 %v1468
  %2164 = vmatpush1.bf16.msra.mxu0 %v1467
  %2165 = vmatprep.subr.bf16.mxu0 %v1474
  %2166 = vmatpush1.bf16.msra.mxu0 %v1473
  %2167 = vmatprep.subr.bf16.mxu0 %v1480
  %2168 = vmatpush1.bf16.msra.mxu0 %v1479
  %2169 = vmatprep.subr.bf16.mxu0 %v1486
  %2170 = vmatpush1.bf16.msra.mxu0 %v1485
  %2171 = vmatprep.subr.bf16.mxu0 %v1492
  %2172 = vmatpush1.bf16.msra.mxu0 %v1491
  %2173 = vmatprep.subr.bf16.mxu0 %v1498
  %2174 = vmatpush1.bf16.msra.mxu0 %v1497
  %2175 = vmatprep.subr.bf16.mxu0 %v1504
  %2176 = vmatpush1.bf16.msra.mxu0 %v1503
  %2177 = vmatprep.subr.bf16.mxu0 %v1510
  %2178 = vmatpush1.bf16.msra.mxu0 %v1509
  %2179 = vmatprep.subr.bf16.mxu0 %v1516
  %2180 = vmatpush1.bf16.msra.mxu0 %v1515
  %2181 = vmatprep.subr.bf16.mxu0 %v1522
  %2182 = vmatpush1.bf16.msra.mxu0 %v1521
  %2183 = vmatprep.subr.bf16.mxu0 %v1528
  %2184 = vmatpush1.bf16.msra.mxu0 %v1527
  %2185 = vmatprep.subr.bf16.mxu0 %v1534
  %2186 = vmatpush1.bf16.msra.mxu0 %v1533
  %2187 = vmatprep.subr.bf16.mxu0 %v1540
  %2188 = vmatpush1.bf16.msra.mxu0 %v1539
  %2189 = vmatprep.mubr.bf16.mxu0 %v382
  %2190 = vmatmul.mubr.bf16.gmra.mrb[0].mxu0 %v381
  %v2191 = vpop.f32.mrb[0].mxu0
  %v2192 = vadd.f32 %v2151, %v2191
  %v2193 = vpop.f32.mrb[0].mxu0
  %v2194 = vadd.f32 %v2153, %v2193
  %v2195 = vpop.f32.mrb[0].mxu0
  %v2196 = vpop.f32.mrb[0].mxu0
  %2197 = vdwg.mxu0
  %v2198 = vpack.c.bf16 %v1946, %v1946
  %v2199 = vpack.c.bf16 %v1948, %v1948
  %v2200 = vpack.c.bf16 %v2069, %v2069
  %v2201 = vpack.c.bf16 %v2071, %v2071
  %v2202 = vpack.c.bf16 %v2192, %v2192
  %v2203 = vpack.c.bf16 %v2194, %v2194
  %v2204 = vtanh.bf16.pop %v2198
  %v2205 = vtanh.bf16.pop %v2199
  %v2206 = vtanh.bf16.pop %v2200
  %v2207 = vtanh.bf16.pop %v2201
  %v2208 = vtanh.bf16.pop %v2202
  %v2209 = vtanh.bf16.pop %v2203
  %v2210 = vld [vmem:[%s1] sm:$0xff]
  %v2211 = vld [vmem:[%s4] sm:$0xf]
  %2213 = vset.pattern.permute.xlu0 0
  %2214 = vperm.xlu0 %2213, %v2210
  %v2215 = vpop.permute.xlu0 %2214
  %v2217 = vlaneseq
  %v2218 = vshrl.u32 %v2217, 7
  %v2219 = vsub.s32 0, %v2218
  %v2220 = vrot.slane %v2211, %v2219
  %v2221 = vmul.f32 %v2215, %v2220
  %2222 = vset.pattern.permute.xlu0 1
  %2223 = vperm.xlu0 %2222, %v2210
  %v2224 = vpop.permute.xlu0 %2223
  %v2226 = vlaneseq
  %v2227 = vshrl.u32 %v2226, 7
  %v2228 = vsub.s32 1, %v2227
  %v2229 = vrot.slane %v2211, %v2228
  %v2230 = vmul.f32 %v2224, %v2229
  %v2231 = vadd.f32 %v2221, %v2230
  %2232 = vset.pattern.permute.xlu0 2
  %2233 = vperm.xlu0 %2232, %v2210
  %v2234 = vpop.permute.xlu0 %2233
  %v2236 = vlaneseq
  %v2237 = vshrl.u32 %v2236, 7
  %v2238 = vsub.s32 2, %v2237
  %v2239 = vrot.slane %v2211, %v2238
  %v2240 = vmul.f32 %v2234, %v2239
  %v2241 = vadd.f32 %v2231, %v2240
  %2242 = vset.pattern.permute.xlu0 3
  %2243 = vperm.xlu0 %2242, %v2210
  %v2244 = vpop.permute.xlu0 %2243
  %v2246 = vlaneseq
  %v2247 = vshrl.u32 %v2246, 7
  %v2248 = vsub.s32 3, %v2247
  %v2249 = vrot.slane %v2211, %v2248
  %v2250 = vmul.f32 %v2244, %v2249
  %v2251 = vadd.f32 %v2241, %v2250
  %v2252 = vld [vmem:[%s5] sm:$0x1]
  %v2254 = vlaneseq
  %v2255 = vshrl.u32 %v2254, 7
  %v2256 = vsub.s32 0, %v2255
  %v2257 = vrot.slane %v2252, %v2256
  %v2259 = vadd.f32 %v2251, %v2257
  %v2260 = vmax.f32 %v2259, 0.0
  %v2261 = vpack.c.bf16 %v2260, %v2260
  %v2262 = vld [vmem:[%s6] sm:$0xff]
  %v2263 = vld [vmem:[%s6 + $0x8] sm:$0xff]
  %v2264 = vld [vmem:[%s6 + $0x10] sm:$0xff]
  %v2265 = vld [vmem:[%s6 + $0x18] sm:$0xff]
  %v2266 = vld [vmem:[%s6 + $0x20] sm:$0xff]
  %v2267 = vld [vmem:[%s6 + $0x28] sm:$0xff]
  %v2268 = vld [vmem:[%s6 + $0x30] sm:$0xff]
  %v2269 = vld [vmem:[%s6 + $0x38] sm:$0xff]
  %v2270 = vld [vmem:[%s6 + $0x40] sm:$0xff]
  %v2271 = vld [vmem:[%s6 + $0x48] sm:$0xff]
  %v2272 = vld [vmem:[%s6 + $0x50] sm:$0xff]
  %v2273 = vld [vmem:[%s6 + $0x58] sm:$0xff]
  %v2274 = vld [vmem:[%s6 + $0x60] sm:$0xff]
  %v2275 = vld [vmem:[%s6 + $0x68] sm:$0xff]
  %v2276 = vld [vmem:[%s6 + $0x70] sm:$0xff]
  %v2277 = vld [vmem:[%s6 + $0x78] sm:$0xff]
  %v2278 = vld [vmem:[%s6 + $0x80] sm:$0xff]
  %v2279 = vld [vmem:[%s6 + $0x88] sm:$0xff]
  %v2280 = vld [vmem:[%s6 + $0x90] sm:$0xff]
  %v2281 = vld [vmem:[%s6 + $0x98] sm:$0xff]
  %v2282 = vld [vmem:[%s6 + $0xa0] sm:$0xff]
  %v2283 = vld [vmem:[%s6 + $0xa8] sm:$0xff]
  %v2284 = vld [vmem:[%s6 + $0xb0] sm:$0xff]
  %v2285 = vld [vmem:[%s6 + $0xb8] sm:$0xff]
  %v2286 = vld [vmem:[%s6 + $0xc0] sm:$0xff]
  %v2287 = vld [vmem:[%s6 + $0xc8] sm:$0xff]
  %v2288 = vld [vmem:[%s6 + $0xd0] sm:$0xff]
  %v2289 = vld [vmem:[%s6 + $0xd8] sm:$0xff]
  %v2290 = vld [vmem:[%s6 + $0xe0] sm:$0xff]
  %v2291 = vld [vmem:[%s6 + $0xe8] sm:$0xff]
  %v2292 = vld [vmem:[%s6 + $0xf0] sm:$0xff]
  %v2293 = vld [vmem:[%s6 + $0xf8] sm:$0xff]
  %v2294 = vld [vmem:[%s6 + $0x100] sm:$0xff]
  %v2295 = vld [vmem:[%s6 + $0x108] sm:$0xff]
  %v2296 = vld [vmem:[%s6 + $0x110] sm:$0xff]
  %v2297 = vld [vmem:[%s6 + $0x118] sm:$0xff]
  %v2298 = vld [vmem:[%s6 + $0x120] sm:$0xff]
  %v2299 = vld [vmem:[%s6 + $0x128] sm:$0xff]
  %v2300 = vld [vmem:[%s6 + $0x130] sm:$0xff]
  %v2301 = vld [vmem:[%s6 + $0x138] sm:$0xff]
  %v2302 = vld [vmem:[%s6 + $0x140] sm:$0xff]
  %v2303 = vld [vmem:[%s6 + $0x148] sm:$0xff]
  %v2304 = vld [vmem:[%s6 + $0x150] sm:$0xff]
  %v2305 = vld [vmem:[%s6 + $0x158] sm:$0xff]
  %v2306 = vld [vmem:[%s6 + $0x160] sm:$0xff]
  %v2307 = vld [vmem:[%s6 + $0x168] sm:$0xff]
  %v2308 = vld [vmem:[%s6 + $0x170] sm:$0xff]
  %v2309 = vld [vmem:[%s6 + $0x178] sm:$0xff]
  %v2310 = vld [vmem:[%s7] sm:$0x3f]
  %v2312 = vlaneseq
  %v2313 = vshrl.u32 %v2312, 7
  %v2314 = vsub.s32 0, %v2313
  %v2315 = vrot.slane %v2310, %v2314
  %v2316 = vlaneseq
  %v2317 = vshrl.u32 %v2316, 7
  %v2318 = vsub.s32 1, %v2317
  %v2319 = vrot.slane %v2310, %v2318
  %v2320 = vlaneseq
  %v2321 = vshrl.u32 %v2320, 7
  %v2322 = vsub.s32 2, %v2321
  %v2323 = vrot.slane %v2310, %v2322
  %v2324 = vlaneseq
  %v2325 = vshrl.u32 %v2324, 7
  %v2326 = vsub.s32 3, %v2325
  %v2327 = vrot.slane %v2310, %v2326
  %v2328 = vlaneseq
  %v2329 = vshrl.u32 %v2328, 7
  %v2330 = vsub.s32 4, %v2329
  %v2331 = vrot.slane %v2310, %v2330
  %v2332 = vlaneseq
  %v2333 = vshrl.u32 %v2332, 7
  %v2334 = vsub.s32 5, %v2333
  %v2335 = vrot.slane %v2310, %v2334
  %v2390 = vunpack.c.l.b16 %v2262
  %v2391 = vunpack.c.h.b16 %v2262
  %v2392 = vunpack.c.l.b16 %v2263
  %v2393 = vunpack.c.h.b16 %v2263
  %v2394 = vunpack.c.l.b16 %v2264
  %v2395 = vunpack.c.h.b16 %v2264
  %v2396 = vunpack.c.l.b16 %v2265
  %v2397 = vunpack.c.h.b16 %v2265
  %v2398 = vunpack.c.l.b16 %v2266
  %v2399 = vunpack.c.h.b16 %v2266
  %v2400 = vunpack.c.l.b16 %v2267
  %v2401 = vunpack.c.h.b16 %v2267
  %v2402 = vunpack.c.l.b16 %v2268
  %v2403 = vunpack.c.h.b16 %v2268
  %v2404 = vunpack.c.l.b16 %v2269
  %v2405 = vunpack.c.h.b16 %v2269
  %v2406 = vunpack.c.l.b16 %v2270
  %v2407 = vunpack.c.h.b16 %v2270
  %v2408 = vunpack.c.l.b16 %v2271
  %v2409 = vunpack.c.h.b16 %v2271
  %v2410 = vunpack.c.l.b16 %v2272
  %v2411 = vunpack.c.h.b16 %v2272
  %v2412 = vunpack.c.l.b16 %v2273
  %v2413 = vunpack.c.h.b16 %v2273
  %v2414 = vunpack.c.l.b16 %v2274
  %v2415 = vunpack.c.h.b16 %v2274
  %v2416 = vunpack.c.l.b16 %v2275
  %v2417 = vunpack.c.h.b16 %v2275
  %v2418 = vunpack.c.l.b16 %v2276
  %v2419 = vunpack.c.h.b16 %v2276
  %v2420 = vunpack.c.l.b16 %v2277
  %v2421 = vunpack.c.h.b16 %v2277
  %v2422 = vunpack.c.l.b16 %v2278
  %v2423 = vunpack.c.h.b16 %v2278
  %v2424 = vunpack.c.l.b16 %v2279
  %v2425 = vunpack.c.h.b16 %v2279
  %v2426 = vunpack.c.l.b16 %v2280
  %v2427 = vunpack.c.h.b16 %v2280
  %v2428 = vunpack.c.l.b16 %v2281
  %v2429 = vunpack.c.h.b16 %v2281
  %v2430 = vunpack.c.l.b16 %v2282
  %v2431 = vunpack.c.h.b16 %v2282
  %v2432 = vunpack.c.l.b16 %v2283
  %v2433 = vunpack.c.h.b16 %v2283
  %v2434 = vunpack.c.l.b16 %v2284
  %v2435 = vunpack.c.h.b16 %v2284
  %v2436 = vunpack.c.l.b16 %v2285
  %v2437 = vunpack.c.h.b16 %v2285
  %v2438 = vunpack.c.l.b16 %v2286
  %v2439 = vunpack.c.h.b16 %v2286
  %v2440 = vunpack.c.l.b16 %v2287
  %v2441 = vunpack.c.h.b16 %v2287
  %v2442 = vunpack.c.l.b16 %v2288
  %v2443 = vunpack.c.h.b16 %v2288
  %v2444 = vunpack.c.l.b16 %v2289
  %v2445 = vunpack.c.h.b16 %v2289
  %v2446 = vunpack.c.l.b16 %v2290
  %v2447 = vunpack.c.h.b16 %v2290
  %v2448 = vunpack.c.l.b16 %v2291
  %v2449 = vunpack.c.h.b16 %v2291
  %v2450 = vunpack.c.l.b16 %v2292
  %v2451 = vunpack.c.h.b16 %v2292
  %v2452 = vunpack.c.l.b16 %v2293
  %v2453 = vunpack.c.h.b16 %v2293
  %v2454 = vunpack.c.l.b16 %v2294
  %v2455 = vunpack.c.h.b16 %v2294
  %v2456 = vunpack.c.l.b16 %v2295
  %v2457 = vunpack.c.h.b16 %v2295
  %v2458 = vunpack.c.l.b16 %v2296
  %v2459 = vunpack.c.h.b16 %v2296
  %v2460 = vunpack.c.l.b16 %v2297
  %v2461 = vunpack.c.h.b16 %v2297
  %v2462 = vunpack.c.l.b16 %v2298
  %v2463 = vunpack.c.h.b16 %v2298
  %v2464 = vunpack.c.l.b16 %v2299
  %v2465 = vunpack.c.h.b16 %v2299
  %v2466 = vunpack.c.l.b16 %v2300
  %v2467 = vunpack.c.h.b16 %v2300
  %v2468 = vunpack.c.l.b16 %v2301
  %v2469 = vunpack.c.h.b16 %v2301
  %v2470 = vunpack.c.l.b16 %v2302
  %v2471 = vunpack.c.h.b16 %v2302
  %v2472 = vunpack.c.l.b16 %v2303
  %v2473 = vunpack.c.h.b16 %v2303
  %v2474 = vunpack.c.l.b16 %v2304
  %v2475 = vunpack.c.h.b16 %v2304
  %v2476 = vunpack.c.l.b16 %v2305
  %v2477 = vunpack.c.h.b16 %v2305
  %v2478 = vunpack.c.l.b16 %v2306
  %v2479 = vunpack.c.h.b16 %v2306
  %v2480 = vunpack.c.l.b16 %v2307
  %v2481 = vunpack.c.h.b16 %v2307
  %v2482 = vunpack.c.l.b16 %v2308
  %v2483 = vunpack.c.h.b16 %v2308
  %v2484 = vunpack.c.l.b16 %v2309
  %v2485 = vunpack.c.h.b16 %v2309
  %v2486 = vpack.c.b16 %v2396, %v2390
  %v2487 = vpack.c.b16 %v2397, %v2391
  %v2488 = vpack.c.b16 %v2398, %v2392
  %v2489 = vpack.c.b16 %v2399, %v2393
  %v2490 = vpack.c.b16 %v2400, %v2394
  %v2491 = vpack.c.b16 %v2401, %v2395
  %v2492 = vpack.c.b16 %v2408, %v2402
  %v2493 = vpack.c.b16 %v2409, %v2403
  %v2494 = vpack.c.b16 %v2410, %v2404
  %v2495 = vpack.c.b16 %v2411, %v2405
  %v2496 = vpack.c.b16 %v2412, %v2406
  %v2497 = vpack.c.b16 %v2413, %v2407
  %v2498 = vpack.c.b16 %v2420, %v2414
  %v2499 = vpack.c.b16 %v2421, %v2415
  %v2500 = vpack.c.b16 %v2422, %v2416
  %v2501 = vpack.c.b16 %v2423, %v2417
  %v2502 = vpack.c.b16 %v2424, %v2418
  %v2503 = vpack.c.b16 %v2425, %v2419
  %v2504 = vpack.c.b16 %v2432, %v2426
  %v2505 = vpack.c.b16 %v2433, %v2427
  %v2506 = vpack.c.b16 %v2434, %v2428
  %v2507 = vpack.c.b16 %v2435, %v2429
  %v2508 = vpack.c.b16 %v2436, %v2430
  %v2509 = vpack.c.b16 %v2437, %v2431
  %v2510 = vpack.c.b16 %v2444, %v2438
  %v2511 = vpack.c.b16 %v2445, %v2439
  %v2512 = vpack.c.b16 %v2446, %v2440
  %v2513 = vpack.c.b16 %v2447, %v2441
  %v2514 = vpack.c.b16 %v2448, %v2442
  %v2515 = vpack.c.b16 %v2449, %v2443
  %v2516 = vpack.c.b16 %v2456, %v2450
  %v2517 = vpack.c.b16 %v2457, %v2451
  %v2518 = vpack.c.b16 %v2458, %v2452
  %v2519 = vpack.c.b16 %v2459, %v2453
  %v2520 = vpack.c.b16 %v2460, %v2454
  %v2521 = vpack.c.b16 %v2461, %v2455
  %v2522 = vpack.c.b16 %v2468, %v2462
  %v2523 = vpack.c.b16 %v2469, %v2463
  %v2524 = vpack.c.b16 %v2470, %v2464
  %v2525 = vpack.c.b16 %v2471, %v2465
  %v2526 = vpack.c.b16 %v2472, %v2466
  %v2527 = vpack.c.b16 %v2473, %v2467
  %v2528 = vpack.c.b16 %v2480, %v2474
  %v2529 = vpack.c.b16 %v2481, %v2475
  %v2530 = vpack.c.b16 %v2482, %v2476
  %v2531 = vpack.c.b16 %v2483, %v2477
  %v2532 = vpack.c.b16 %v2484, %v2478
  %v2533 = vpack.c.b16 %v2485, %v2479
  %2582 = vmatprep.subr.bf16.mxu0 %v2487
  %2583 = vmatpush1.bf16.msra.mxu0 %v2486
  %2584 = vmatprep.subr.bf16.mxu0 %v2493
  %2585 = vmatpush1.bf16.msra.mxu0 %v2492
  %2586 = vmatprep.subr.bf16.mxu0 %v2499
  %2587 = vmatpush1.bf16.msra.mxu0 %v2498
  %2588 = vmatprep.subr.bf16.mxu0 %v2505
  %2589 = vmatpush1.bf16.msra.mxu0 %v2504
  %2590 = vmatprep.subr.bf16.mxu0 %v2511
  %2591 = vmatpush1.bf16.msra.mxu0 %v2510
  %2592 = vmatprep.subr.bf16.mxu0 %v2517
  %2593 = vmatpush1.bf16.msra.mxu0 %v2516
  %2594 = vmatprep.subr.bf16.mxu0 %v2523
  %2595 = vmatpush1.bf16.msra.mxu0 %v2522
  %2596 = vmatprep.subr.bf16.mxu0 %v2529
  %2597 = vmatpush1.bf16.msra.mxu0 %v2528
  %2598 = vmatprep.subr.bf16.mxu0 0
  %2599 = vmatpush1.bf16.msra.mxu0 0
  %2600 = vmatprep.subr.bf16.mxu0 0
  %2601 = vmatpush1.bf16.msra.mxu0 0
  %2602 = vmatprep.subr.bf16.mxu0 0
  %2603 = vmatpush1.bf16.msra.mxu0 0
  %2604 = vmatprep.subr.bf16.mxu0 0
  %2605 = vmatpush1.bf16.msra.mxu0 0
  %2606 = vmatprep.subr.bf16.mxu0 0
  %2607 = vmatpush1.bf16.msra.mxu0 0
  %2608 = vmatprep.subr.bf16.mxu0 0
  %2609 = vmatpush1.bf16.msra.mxu0 0
  %2610 = vmatprep.subr.bf16.mxu0 0
  %2611 = vmatpush1.bf16.msra.mxu0 0
  %2612 = vmatprep.subr.bf16.mxu0 0
  %2613 = vmatpush1.bf16.msra.mxu0 0
  %2614 = vmatprep.mubr.bf16.mxu0 0
  %2615 = vmatmul.mubr.bf16.gmra.mrb[0].mxu0 %v2261
  %v2616 = vpop.f32.mrb[0].mxu0
  %v2617 = vadd.f32 %v2315, %v2616
  %v2618 = vpop.f32.mrb[0].mxu0
  %v2619 = vadd.f32 %v2319, %v2618
  %v2620 = vpop.f32.mrb[0].mxu0
  %v2621 = vpop.f32.mrb[0].mxu0
  %2622 = vdwg.mxu0
  %2623 = vmatprep.subr.bf16.mxu0 %v2489
  %2624 = vmatpush1.bf16.msra.mxu0 %v2488
  %2625 = vmatprep.subr.bf16.mxu0 %v2495
  %2626 = vmatpush1.bf16.msra.mxu0 %v2494
  %2627 = vmatprep.subr.bf16.mxu0 %v2501
  %2628 = vmatpush1.bf16.msra.mxu0 %v2500
  %2629 = vmatprep.subr.bf16.mxu0 %v2507
  %2630 = vmatpush1.bf16.msra.mxu0 %v2506
  %2631 = vmatprep.subr.bf16.mxu0 %v2513
  %2632 = vmatpush1.bf16.msra.mxu0 %v2512
  %2633 = vmatprep.subr.bf16.mxu0 %v2519
  %2634 = vmatpush1.bf16.msra.mxu0 %v2518
  %2635 = vmatprep.subr.bf16.mxu0 %v2525
  %2636 = vmatpush1.bf16.msra.mxu0 %v2524
  %2637 = vmatprep.subr.bf16.mxu0 %v2531
  %2638 = vmatpush1.bf16.msra.mxu0 %v2530
  %2639 = vmatprep.subr.bf16.mxu0 0
  %2640 = vmatpush1.bf16.msra.mxu0 0
  %2641 = vmatprep.subr.bf16.mxu0 0
  %2642 = vmatpush1.bf16.msra.mxu0 0
  %2643 = vmatprep.subr.bf16.mxu0 0
  %2644 = vmatpush1.bf16.msra.mxu0 0
  %2645 = vmatprep.subr.bf16.mxu0 0
  %2646 = vmatpush1.bf16.msra.mxu0 0
  %2647 = vmatprep.subr.bf16.mxu0 0
  %2648 = vmatpush1.bf16.msra.mxu0 0
  %2649 = vmatprep.subr.bf16.mxu0 0
  %2650 = vmatpush1.bf16.msra.mxu0 0
  %2651 = vmatprep.subr.bf16.mxu0 0
  %2652 = vmatpush1.bf16.msra.mxu0 0
  %2653 = vmatprep.subr.bf16.mxu0 0
  %2654 = vmatpush1.bf16.msra.mxu0 0
  %2655 = vmatprep.mubr.bf16.mxu0 0
  %2656 = vmatmul.mubr.bf16.gmra.mrb[0].mxu0 %v2261
  %v2657 = vpop.f32.mrb[0].mxu0
  %v2658 = vadd.f32 %v2323, %v2657
  %v2659 = vpop.f32.mrb[0].mxu0
  %v2660 = vadd.f32 %v2327, %v2659
  %v2661 = vpop.f32.mrb[0].mxu0
  %v2662 = vpop.f32.mrb[0].mxu0
  %2663 = vdwg.mxu0
  %2664 = vmatprep.subr.bf16.mxu0 %v2491
  %2665 = vmatpush1.bf16.msra.mxu0 %v2490
  %2666 = vmatprep.subr.bf16.mxu0 %v2497
  %2667 = vmatpush1.bf16.msra.mxu0 %v2496
  %2668 = vmatprep.subr.bf16.mxu0 %v2503
  %2669 = vmatpush1.bf16.msra.mxu0 %v2502
  %2670 = vmatprep.subr.bf16.mxu0 %v2509
  %2671 = vmatpush1.bf16.msra.mxu0 %v2508
  %2672 = vmatprep.subr.bf16.mxu0 %v2515
  %2673 = vmatpush1.bf16.msra.mxu0 %v2514
  %2674 = vmatprep.subr.bf16.mxu0 %v2521
  %2675 = vmatpush1.bf16.msra.mxu0 %v2520
  %2676 = vmatprep.subr.bf16.mxu0 %v2527
  %2677 = vmatpush1.bf16.msra.mxu0 %v2526
  %2678 = vmatprep.subr.bf16.mxu0 %v2533
  %2679 = vmatpush1.bf16.msra.mxu0 %v2532
  %2680 = vmatprep.subr.bf16.mxu0 0
  %2681 = vmatpush1.bf16.msra.mxu0 0
  %2682 = vmatprep.subr.bf16.mxu0 0
  %2683 = vmatpush1.bf16.msra.mxu0 0
  %2684 = vmatprep.subr.bf16.mxu0 0
  %2685 = vmatpush1.bf16.msra.mxu0 0
  %2686 = vmatprep.subr.bf16.mxu0 0
  %2687 = vmatpush1.bf16.msra.mxu0 0
  %2688 = vmatprep.subr.bf16.mxu0 0
  %2689 = vmatpush1.bf16.msra.mxu0 0
  %2690 = vmatprep.subr.bf16.mxu0 0
  %2691 = vmatpush1.bf16.msra.mxu0 0
  %2692 = vmatprep.subr.bf16.mxu0 0
  %2693 = vmatpush1.bf16.msra.mxu0 0
  %2694 = vmatprep.subr.bf16.mxu0 0
  %2695 = vmatpush1.bf16.msra.mxu0 0
  %2696 = vmatprep.mubr.bf16.mxu0 0
  %2697 = vmatmul.mubr.bf16.gmra.mrb[0].mxu0 %v2261
  %v2698 = vpop.f32.mrb[0].mxu0
  %v2699 = vadd.f32 %v2331, %v2698
  %v2700 = vpop.f32.mrb[0].mxu0
  %v2701 = vadd.f32 %v2335, %v2700
  %v2702 = vpop.f32.mrb[0].mxu0
  %v2703 = vpop.f32.mrb[0].mxu0
  %2704 = vdwg.mxu0
  %v2705 = vld [vmem:[%s8] sm:$0xff]
  %v2706 = vld [vmem:[%s8 + $0x8] sm:$0xff]
  %v2707 = vld [vmem:[%s8 + $0x10] sm:$0xff]
  %v2708 = vld [vmem:[%s8 + $0x18] sm:$0xff]
  %v2709 = vld [vmem:[%s8 + $0x20] sm:$0xff]
  %v2710 = vld [vmem:[%s8 + $0x28] sm:$0xff]
  %v2711 = vld [vmem:[%s8 + $0x30] sm:$0xff]
  %v2712 = vld [vmem:[%s8 + $0x38] sm:$0xff]
  %v2713 = vld [vmem:[%s8 + $0x40] sm:$0xff]
  %v2714 = vld [vmem:[%s8 + $0x48] sm:$0xff]
  %v2715 = vld [vmem:[%s8 + $0x50] sm:$0xff]
  %v2716 = vld [vmem:[%s8 + $0x58] sm:$0xff]
  %v2717 = vld [vmem:[%s8 + $0x60] sm:$0xff]
  %v2718 = vld [vmem:[%s8 + $0x68] sm:$0xff]
  %v2719 = vld [vmem:[%s8 + $0x70] sm:$0xff]
  %v2720 = vld [vmem:[%s8 + $0x78] sm:$0xff]
  %v2721 = vld [vmem:[%s8 + $0x80] sm:$0xff]
  %v2722 = vld [vmem:[%s8 + $0x88] sm:$0xff]
  %v2723 = vld [vmem:[%s8 + $0x90] sm:$0xff]
  %v2724 = vld [vmem:[%s8 + $0x98] sm:$0xff]
  %v2725 = vld [vmem:[%s8 + $0xa0] sm:$0xff]
  %v2726 = vld [vmem:[%s8 + $0xa8] sm:$0xff]
  %v2727 = vld [vmem:[%s8 + $0xb0] sm:$0xff]
  %v2728 = vld [vmem:[%s8 + $0xb8] sm:$0xff]
  %v2729 = vld [vmem:[%s8 + $0xc0] sm:$0xff]
  %v2730 = vld [vmem:[%s8 + $0xc8] sm:$0xff]
  %v2731 = vld [vmem:[%s8 + $0xd0] sm:$0xff]
  %v2732 = vld [vmem:[%s8 + $0xd8] sm:$0xff]
  %v2733 = vld [vmem:[%s8 + $0xe0] sm:$0xff]
  %v2734 = vld [vmem:[%s8 + $0xe8] sm:$0xff]
  %v2735 = vld [vmem:[%s8 + $0xf0] sm:$0xff]
  %v2736 = vld [vmem:[%s8 + $0xf8] sm:$0xff]
  %v2737 = vld [vmem:[%s8 + $0x100] sm:$0xff]
  %v2738 = vld [vmem:[%s8 + $0x108] sm:$0xff]
  %v2739 = vld [vmem:[%s8 + $0x110] sm:$0xff]
  %v2740 = vld [vmem:[%s8 + $0x118] sm:$0xff]
  %v2741 = vld [vmem:[%s8 + $0x120] sm:$0xff]
  %v2742 = vld [vmem:[%s8 + $0x128] sm:$0xff]
  %v2743 = vld [vmem:[%s8 + $0x130] sm:$0xff]
  %v2744 = vld [vmem:[%s8 + $0x138] sm:$0xff]
  %v2745 = vld [vmem:[%s8 + $0x140] sm:$0xff]
  %v2746 = vld [vmem:[%s8 + $0x148] sm:$0xff]
  %v2747 = vld [vmem:[%s8 + $0x150] sm:$0xff]
  %v2748 = vld [vmem:[%s8 + $0x158] sm:$0xff]
  %v2749 = vld [vmem:[%s8 + $0x160] sm:$0xff]
  %v2750 = vld [vmem:[%s8 + $0x168] sm:$0xff]
  %v2751 = vld [vmem:[%s8 + $0x170] sm:$0xff]
  %v2752 = vld [vmem:[%s8 + $0x178] sm:$0xff]
  %v2753 = vld [vmem:[%s8 + $0x180] sm:$0xff]
  %v2754 = vld [vmem:[%s8 + $0x188] sm:$0xff]
  %v2755 = vld [vmem:[%s8 + $0x190] sm:$0xff]
  %v2756 = vld [vmem:[%s8 + $0x198] sm:$0xff]
  %v2757 = vld [vmem:[%s8 + $0x1a0] sm:$0xff]
  %v2758 = vld [vmem:[%s8 + $0x1a8] sm:$0xff]
  %v2759 = vld [vmem:[%s8 + $0x1b0] sm:$0xff]
  %v2760 = vld [vmem:[%s8 + $0x1b8] sm:$0xff]
  %v2761 = vld [vmem:[%s8 + $0x1c0] sm:$0xff]
  %v2762 = vld [vmem:[%s8 + $0x1c8] sm:$0xff]
  %v2763 = vld [vmem:[%s8 + $0x1d0] sm:$0xff]
  %v2764 = vld [vmem:[%s8 + $0x1d8] sm:$0xff]
  %v2765 = vld [vmem:[%s8 + $0x1e0] sm:$0xff]
  %v2766 = vld [vmem:[%s8 + $0x1e8] sm:$0xff]
  %v2767 = vld [vmem:[%s8 + $0x1f0] sm:$0xff]
  %v2768 = vld [vmem:[%s8 + $0x1f8] sm:$0xff]
  %v2769 = vld [vmem:[%s8 + $0x200] sm:$0xff]
  %v2770 = vld [vmem:[%s8 + $0x208] sm:$0xff]
  %v2771 = vld [vmem:[%s8 + $0x210] sm:$0xff]
  %v2772 = vld [vmem:[%s8 + $0x218] sm:$0xff]
  %v2773 = vld [vmem:[%s8 + $0x220] sm:$0xff]
  %v2774 = vld [vmem:[%s8 + $0x228] sm:$0xff]
  %v2775 = vld [vmem:[%s8 + $0x230] sm:$0xff]
  %v2776 = vld [vmem:[%s8 + $0x238] sm:$0xff]
  %v2777 = vld [vmem:[%s8 + $0x240] sm:$0xff]
  %v2778 = vld [vmem:[%s8 + $0x248] sm:$0xff]
  %v2779 = vld [vmem:[%s8 + $0x250] sm:$0xff]
  %v2780 = vld [vmem:[%s8 + $0x258] sm:$0xff]
  %v2781 = vld [vmem:[%s8 + $0x260] sm:$0xff]
  %v2782 = vld [vmem:[%s8 + $0x268] sm:$0xff]
  %v2783 = vld [vmem:[%s8 + $0x270] sm:$0xff]
  %v2784 = vld [vmem:[%s8 + $0x278] sm:$0xff]
  %v2785 = vld [vmem:[%s8 + $0x280] sm:$0xff]
  %v2786 = vld [vmem:[%s8 + $0x288] sm:$0xff]
  %v2787 = vld [vmem:[%s8 + $0x290] sm:$0xff]
  %v2788 = vld [vmem:[%s8 + $0x298] sm:$0xff]
  %v2789 = vld [vmem:[%s8 + $0x2a0] sm:$0xff]
  %v2790 = vld [vmem:[%s8 + $0x2a8] sm:$0xff]
  %v2791 = vld [vmem:[%s8 + $0x2b0] sm:$0xff]
  %v2792 = vld [vmem:[%s8 + $0x2b8] sm:$0xff]
  %v2793 = vld [vmem:[%s8 + $0x2c0] sm:$0xff]
  %v2794 = vld [vmem:[%s8 + $0x2c8] sm:$0xff]
  %v2795 = vld [vmem:[%s8 + $0x2d0] sm:$0xff]
  %v2796 = vld [vmem:[%s8 + $0x2d8] sm:$0xff]
  %v2797 = vld [vmem:[%s8 + $0x2e0] sm:$0xff]
  %v2798 = vld [vmem:[%s8 + $0x2e8] sm:$0xff]
  %v2799 = vld [vmem:[%s8 + $0x2f0] sm:$0xff]
  %v2800 = vld [vmem:[%s8 + $0x2f8] sm:$0xff]
  %v2801 = vld [vmem:[%s8 + $0x300] sm:$0xff]
  %v2802 = vld [vmem:[%s8 + $0x308] sm:$0xff]
  %v2803 = vld [vmem:[%s8 + $0x310] sm:$0xff]
  %v2804 = vld [vmem:[%s8 + $0x318] sm:$0xff]
  %v2805 = vld [vmem:[%s8 + $0x320] sm:$0xff]
  %v2806 = vld [vmem:[%s8 + $0x328] sm:$0xff]
  %v2807 = vld [vmem:[%s8 + $0x330] sm:$0xff]
  %v2808 = vld [vmem:[%s8 + $0x338] sm:$0xff]
  %v2809 = vld [vmem:[%s8 + $0x340] sm:$0xff]
  %v2810 = vld [vmem:[%s8 + $0x348] sm:$0xff]
  %v2811 = vld [vmem:[%s8 + $0x350] sm:$0xff]
  %v2812 = vld [vmem:[%s8 + $0x358] sm:$0xff]
  %v2813 = vld [vmem:[%s8 + $0x360] sm:$0xff]
  %v2814 = vld [vmem:[%s8 + $0x368] sm:$0xff]
  %v2815 = vld [vmem:[%s8 + $0x370] sm:$0xff]
  %v2816 = vld [vmem:[%s8 + $0x378] sm:$0xff]
  %v2817 = vld [vmem:[%s8 + $0x380] sm:$0xff]
  %v2818 = vld [vmem:[%s8 + $0x388] sm:$0xff]
  %v2819 = vld [vmem:[%s8 + $0x390] sm:$0xff]
  %v2820 = vld [vmem:[%s8 + $0x398] sm:$0xff]
  %v2821 = vld [vmem:[%s8 + $0x3a0] sm:$0xff]
  %v2822 = vld [vmem:[%s8 + $0x3a8] sm:$0xff]
  %v2823 = vld [vmem:[%s8 + $0x3b0] sm:$0xff]
  %v2824 = vld [vmem:[%s8 + $0x3b8] sm:$0xff]
  %v2825 = vld [vmem:[%s8 + $0x3c0] sm:$0xff]
  %v2826 = vld [vmem:[%s8 + $0x3c8] sm:$0xff]
  %v2827 = vld [vmem:[%s8 + $0x3d0] sm:$0xff]
  %v2828 = vld [vmem:[%s8 + $0x3d8] sm:$0xff]
  %v2829 = vld [vmem:[%s8 + $0x3e0] sm:$0xff]
  %v2830 = vld [vmem:[%s8 + $0x3e8] sm:$0xff]
  %v2831 = vld [vmem:[%s8 + $0x3f0] sm:$0xff]
  %v2832 = vld [vmem:[%s8 + $0x3f8] sm:$0xff]
  %v2833 = vld [vmem:[%s8 + $0x400] sm:$0xff]
  %v2834 = vld [vmem:[%s8 + $0x408] sm:$0xff]
  %v2835 = vld [vmem:[%s8 + $0x410] sm:$0xff]
  %v2836 = vld [vmem:[%s8 + $0x418] sm:$0xff]
  %v2837 = vld [vmem:[%s8 + $0x420] sm:$0xff]
  %v2838 = vld [vmem:[%s8 + $0x428] sm:$0xff]
  %v2839 = vld [vmem:[%s8 + $0x430] sm:$0xff]
  %v2840 = vld [vmem:[%s8 + $0x438] sm:$0xff]
  %v2841 = vld [vmem:[%s8 + $0x440] sm:$0xff]
  %v2842 = vld [vmem:[%s8 + $0x448] sm:$0xff]
  %v2843 = vld [vmem:[%s8 + $0x450] sm:$0xff]
  %v2844 = vld [vmem:[%s8 + $0x458] sm:$0xff]
  %v2845 = vld [vmem:[%s8 + $0x460] sm:$0xff]
  %v2846 = vld [vmem:[%s8 + $0x468] sm:$0xff]
  %v2847 = vld [vmem:[%s8 + $0x470] sm:$0xff]
  %v2848 = vld [vmem:[%s8 + $0x478] sm:$0xff]
  %v2849 = vld [vmem:[%s8 + $0x480] sm:$0xff]
  %v2850 = vld [vmem:[%s8 + $0x488] sm:$0xff]
  %v2851 = vld [vmem:[%s8 + $0x490] sm:$0xff]
  %v2852 = vld [vmem:[%s8 + $0x498] sm:$0xff]
  %v2853 = vld [vmem:[%s8 + $0x4a0] sm:$0xff]
  %v2854 = vld [vmem:[%s8 + $0x4a8] sm:$0xff]
  %v2855 = vld [vmem:[%s8 + $0x4b0] sm:$0xff]
  %v2856 = vld [vmem:[%s8 + $0x4b8] sm:$0xff]
  %v2857 = vld [vmem:[%s8 + $0x4c0] sm:$0xff]
  %v2858 = vld [vmem:[%s8 + $0x4c8] sm:$0xff]
  %v2859 = vld [vmem:[%s8 + $0x4d0] sm:$0xff]
  %v2860 = vld [vmem:[%s8 + $0x4d8] sm:$0xff]
  %v2861 = vld [vmem:[%s8 + $0x4e0] sm:$0xff]
  %v2862 = vld [vmem:[%s8 + $0x4e8] sm:$0xff]
  %v2863 = vld [vmem:[%s8 + $0x4f0] sm:$0xff]
  %v2864 = vld [vmem:[%s8 + $0x4f8] sm:$0xff]
  %v2865 = vld [vmem:[%s8 + $0x500] sm:$0xff]
  %v2866 = vld [vmem:[%s8 + $0x508] sm:$0xff]
  %v2867 = vld [vmem:[%s8 + $0x510] sm:$0xff]
  %v2868 = vld [vmem:[%s8 + $0x518] sm:$0xff]
  %v2869 = vld [vmem:[%s8 + $0x520] sm:$0xff]
  %v2870 = vld [vmem:[%s8 + $0x528] sm:$0xff]
  %v2871 = vld [vmem:[%s8 + $0x530] sm:$0xff]
  %v2872 = vld [vmem:[%s8 + $0x538] sm:$0xff]
  %v2873 = vld [vmem:[%s8 + $0x540] sm:$0xff]
  %v2874 = vld [vmem:[%s8 + $0x548] sm:$0xff]
  %v2875 = vld [vmem:[%s8 + $0x550] sm:$0xff]
  %v2876 = vld [vmem:[%s8 + $0x558] sm:$0xff]
  %v2877 = vld [vmem:[%s8 + $0x560] sm:$0xff]
  %v2878 = vld [vmem:[%s8 + $0x568] sm:$0xff]
  %v2879 = vld [vmem:[%s8 + $0x570] sm:$0xff]
  %v2880 = vld [vmem:[%s8 + $0x578] sm:$0xff]
  %v2881 = vld [vmem:[%s8 + $0x580] sm:$0xff]
  %v2882 = vld [vmem:[%s8 + $0x588] sm:$0xff]
  %v2883 = vld [vmem:[%s8 + $0x590] sm:$0xff]
  %v2884 = vld [vmem:[%s8 + $0x598] sm:$0xff]
  %v2885 = vld [vmem:[%s8 + $0x5a0] sm:$0xff]
  %v2886 = vld [vmem:[%s8 + $0x5a8] sm:$0xff]
  %v2887 = vld [vmem:[%s8 + $0x5b0] sm:$0xff]
  %v2888 = vld [vmem:[%s8 + $0x5b8] sm:$0xff]
  %v2889 = vld [vmem:[%s8 + $0x5c0] sm:$0xff]
  %v2890 = vld [vmem:[%s8 + $0x5c8] sm:$0xff]
  %v2891 = vld [vmem:[%s8 + $0x5d0] sm:$0xff]
  %v2892 = vld [vmem:[%s8 + $0x5d8] sm:$0xff]
  %v2893 = vld [vmem:[%s8 + $0x5e0] sm:$0xff]
  %v2894 = vld [vmem:[%s8 + $0x5e8] sm:$0xff]
  %v2895 = vld [vmem:[%s8 + $0x5f0] sm:$0xff]
  %v2896 = vld [vmem:[%s8 + $0x5f8] sm:$0xff]
  %v2897 = vpack.c.bf16 %v2617, %v2617
  %v2898 = vpack.c.bf16 %v2619, %v2619
  %v2899 = vpack.c.bf16 %v2658, %v2658
  %v2900 = vpack.c.bf16 %v2660, %v2660
  %v2901 = vpack.c.bf16 %v2699, %v2699
  %v2902 = vpack.c.bf16 %v2701, %v2701
  %v2903 = vld [vmem:[%s9] sm:$0xff]
  %v2904 = vld [vmem:[%s9 + $0x8] sm:$0xff]
  %v2905 = vld [vmem:[%s9 + $0x10] sm:$0xff]
  %v2906 = vld [vmem:[%s9 + $0x18] sm:$0xff]
  %v2907 = vld [vmem:[%s9 + $0x20] sm:$0xff]
  %v2908 = vld [vmem:[%s9 + $0x28] sm:$0xff]
  %v2909 = vld [vmem:[%s9 + $0x30] sm:$0xff]
  %v2910 = vld [vmem:[%s9 + $0x38] sm:$0xff]
  %v2911 = vld [vmem:[%s9 + $0x40] sm:$0xff]
  %v2912 = vld [vmem:[%s9 + $0x48] sm:$0xff]
  %v2913 = vld [vmem:[%s9 + $0x50] sm:$0xff]
  %v2914 = vld [vmem:[%s9 + $0x58] sm:$0xff]
  %v2915 = vld [vmem:[%s9 + $0x60] sm:$0xff]
  %v2916 = vld [vmem:[%s9 + $0x68] sm:$0xff]
  %v2917 = vld [vmem:[%s9 + $0x70] sm:$0xff]
  %v2918 = vld [vmem:[%s9 + $0x78] sm:$0xff]
  %v2919 = vld [vmem:[%s9 + $0x80] sm:$0xff]
  %v2920 = vld [vmem:[%s9 + $0x88] sm:$0xff]
  %v2921 = vld [vmem:[%s9 + $0x90] sm:$0xff]
  %v2922 = vld [vmem:[%s9 + $0x98] sm:$0xff]
  %v2923 = vld [vmem:[%s9 + $0xa0] sm:$0xff]
  %v2924 = vld [vmem:[%s9 + $0xa8] sm:$0xff]
  %v2925 = vld [vmem:[%s9 + $0xb0] sm:$0xff]
  %v2926 = vld [vmem:[%s9 + $0xb8] sm:$0xff]
  %v2927 = vld [vmem:[%s9 + $0xc0] sm:$0xff]
  %v2928 = vld [vmem:[%s9 + $0xc8] sm:$0xff]
  %v2929 = vld [vmem:[%s9 + $0xd0] sm:$0xff]
  %v2930 = vld [vmem:[%s9 + $0xd8] sm:$0xff]
  %v2931 = vld [vmem:[%s9 + $0xe0] sm:$0xff]
  %v2932 = vld [vmem:[%s9 + $0xe8] sm:$0xff]
  %v2933 = vld [vmem:[%s9 + $0xf0] sm:$0xff]
  %v2934 = vld [vmem:[%s9 + $0xf8] sm:$0xff]
  %v2935 = vld [vmem:[%s9 + $0x100] sm:$0xff]
  %v2936 = vld [vmem:[%s9 + $0x108] sm:$0xff]
  %v2937 = vld [vmem:[%s9 + $0x110] sm:$0xff]
  %v2938 = vld [vmem:[%s9 + $0x118] sm:$0xff]
  %v2939 = vld [vmem:[%s9 + $0x120] sm:$0xff]
  %v2940 = vld [vmem:[%s9 + $0x128] sm:$0xff]
  %v2941 = vld [vmem:[%s9 + $0x130] sm:$0xff]
  %v2942 = vld [vmem:[%s9 + $0x138] sm:$0xff]
  %v2943 = vld [vmem:[%s9 + $0x140] sm:$0xff]
  %v2944 = vld [vmem:[%s9 + $0x148] sm:$0xff]
  %v2945 = vld [vmem:[%s9 + $0x150] sm:$0xff]
  %v2946 = vld [vmem:[%s9 + $0x158] sm:$0xff]
  %v2947 = vld [vmem:[%s9 + $0x160] sm:$0xff]
  %v2948 = vld [vmem:[%s9 + $0x168] sm:$0xff]
  %v2949 = vld [vmem:[%s9 + $0x170] sm:$0xff]
  %v2950 = vld [vmem:[%s9 + $0x178] sm:$0xff]
  %v2951 = vld [vmem:[%s9 + $0x180] sm:$0xff]
  %v2952 = vld [vmem:[%s9 + $0x188] sm:$0xff]
  %v2953 = vld [vmem:[%s9 + $0x190] sm:$0xff]
  %v2954 = vld [vmem:[%s9 + $0x198] sm:$0xff]
  %v2955 = vld [vmem:[%s9 + $0x1a0] sm:$0xff]
  %v2956 = vld [vmem:[%s9 + $0x1a8] sm:$0xff]
  %v2957 = vld [vmem:[%s9 + $0x1b0] sm:$0xff]
  %v2958 = vld [vmem:[%s9 + $0x1b8] sm:$0xff]
  %v2959 = vld [vmem:[%s9 + $0x1c0] sm:$0xff]
  %v2960 = vld [vmem:[%s9 + $0x1c8] sm:$0xff]
  %v2961 = vld [vmem:[%s9 + $0x1d0] sm:$0xff]
  %v2962 = vld [vmem:[%s9 + $0x1d8] sm:$0xff]
  %v2963 = vld [vmem:[%s9 + $0x1e0] sm:$0xff]
  %v2964 = vld [vmem:[%s9 + $0x1e8] sm:$0xff]
  %v2965 = vld [vmem:[%s9 + $0x1f0] sm:$0xff]
  %v2966 = vld [vmem:[%s9 + $0x1f8] sm:$0xff]
  %v2967 = vld [vmem:[%s9 + $0x200] sm:$0xff]
  %v2968 = vld [vmem:[%s9 + $0x208] sm:$0xff]
  %v2969 = vld [vmem:[%s9 + $0x210] sm:$0xff]
  %v2970 = vld [vmem:[%s9 + $0x218] sm:$0xff]
  %v2971 = vld [vmem:[%s9 + $0x220] sm:$0xff]
  %v2972 = vld [vmem:[%s9 + $0x228] sm:$0xff]
  %v2973 = vld [vmem:[%s9 + $0x230] sm:$0xff]
  %v2974 = vld [vmem:[%s9 + $0x238] sm:$0xff]
  %v2975 = vld [vmem:[%s9 + $0x240] sm:$0xff]
  %v2976 = vld [vmem:[%s9 + $0x248] sm:$0xff]
  %v2977 = vld [vmem:[%s9 + $0x250] sm:$0xff]
  %v2978 = vld [vmem:[%s9 + $0x258] sm:$0xff]
  %v2979 = vld [vmem:[%s9 + $0x260] sm:$0xff]
  %v2980 = vld [vmem:[%s9 + $0x268] sm:$0xff]
  %v2981 = vld [vmem:[%s9 + $0x270] sm:$0xff]
  %v2982 = vld [vmem:[%s9 + $0x278] sm:$0xff]
  %v2983 = vld [vmem:[%s9 + $0x280] sm:$0xff]
  %v2984 = vld [vmem:[%s9 + $0x288] sm:$0xff]
  %v2985 = vld [vmem:[%s9 + $0x290] sm:$0xff]
  %v2986 = vld [vmem:[%s9 + $0x298] sm:$0xff]
  %v2987 = vld [vmem:[%s9 + $0x2a0] sm:$0xff]
  %v2988 = vld [vmem:[%s9 + $0x2a8] sm:$0xff]
  %v2989 = vld [vmem:[%s9 + $0x2b0] sm:$0xff]
  %v2990 = vld [vmem:[%s9 + $0x2b8] sm:$0xff]
  %v2991 = vld [vmem:[%s9 + $0x2c0] sm:$0xff]
  %v2992 = vld [vmem:[%s9 + $0x2c8] sm:$0xff]
  %v2993 = vld [vmem:[%s9 + $0x2d0] sm:$0xff]
  %v2994 = vld [vmem:[%s9 + $0x2d8] sm:$0xff]
  %v2995 = vld [vmem:[%s9 + $0x2e0] sm:$0xff]
  %v2996 = vld [vmem:[%s9 + $0x2e8] sm:$0xff]
  %v2997 = vld [vmem:[%s9 + $0x2f0] sm:$0xff]
  %v2998 = vld [vmem:[%s9 + $0x2f8] sm:$0xff]
  %v2999 = vld [vmem:[%s9 + $0x300] sm:$0xff]
  %v3000 = vld [vmem:[%s9 + $0x308] sm:$0xff]
  %v3001 = vld [vmem:[%s9 + $0x310] sm:$0xff]
  %v3002 = vld [vmem:[%s9 + $0x318] sm:$0xff]
  %v3003 = vld [vmem:[%s9 + $0x320] sm:$0xff]
  %v3004 = vld [vmem:[%s9 + $0x328] sm:$0xff]
  %v3005 = vld [vmem:[%s9 + $0x330] sm:$0xff]
  %v3006 = vld [vmem:[%s9 + $0x338] sm:$0xff]
  %v3007 = vld [vmem:[%s9 + $0x340] sm:$0xff]
  %v3008 = vld [vmem:[%s9 + $0x348] sm:$0xff]
  %v3009 = vld [vmem:[%s9 + $0x350] sm:$0xff]
  %v3010 = vld [vmem:[%s9 + $0x358] sm:$0xff]
  %v3011 = vld [vmem:[%s9 + $0x360] sm:$0xff]
  %v3012 = vld [vmem:[%s9 + $0x368] sm:$0xff]
  %v3013 = vld [vmem:[%s9 + $0x370] sm:$0xff]
  %v3014 = vld [vmem:[%s9 + $0x378] sm:$0xff]
  %v3015 = vld [vmem:[%s9 + $0x380] sm:$0xff]
  %v3016 = vld [vmem:[%s9 + $0x388] sm:$0xff]
  %v3017 = vld [vmem:[%s9 + $0x390] sm:$0xff]
  %v3018 = vld [vmem:[%s9 + $0x398] sm:$0xff]
  %v3019 = vld [vmem:[%s9 + $0x3a0] sm:$0xff]
  %v3020 = vld [vmem:[%s9 + $0x3a8] sm:$0xff]
  %v3021 = vld [vmem:[%s9 + $0x3b0] sm:$0xff]
  %v3022 = vld [vmem:[%s9 + $0x3b8] sm:$0xff]
  %v3023 = vld [vmem:[%s9 + $0x3c0] sm:$0xff]
  %v3024 = vld [vmem:[%s9 + $0x3c8] sm:$0xff]
  %v3025 = vld [vmem:[%s9 + $0x3d0] sm:$0xff]
  %v3026 = vld [vmem:[%s9 + $0x3d8] sm:$0xff]
  %v3027 = vld [vmem:[%s9 + $0x3e0] sm:$0xff]
  %v3028 = vld [vmem:[%s9 + $0x3e8] sm:$0xff]
  %v3029 = vld [vmem:[%s9 + $0x3f0] sm:$0xff]
  %v3030 = vld [vmem:[%s9 + $0x3f8] sm:$0xff]
  %v3031 = vld [vmem:[%s9 + $0x400] sm:$0xff]
  %v3032 = vld [vmem:[%s9 + $0x408] sm:$0xff]
  %v3033 = vld [vmem:[%s9 + $0x410] sm:$0xff]
  %v3034 = vld [vmem:[%s9 + $0x418] sm:$0xff]
  %v3035 = vld [vmem:[%s9 + $0x420] sm:$0xff]
  %v3036 = vld [vmem:[%s9 + $0x428] sm:$0xff]
  %v3037 = vld [vmem:[%s9 + $0x430] sm:$0xff]
  %v3038 = vld [vmem:[%s9 + $0x438] sm:$0xff]
  %v3039 = vld [vmem:[%s9 + $0x440] sm:$0xff]
  %v3040 = vld [vmem:[%s9 + $0x448] sm:$0xff]
  %v3041 = vld [vmem:[%s9 + $0x450] sm:$0xff]
  %v3042 = vld [vmem:[%s9 + $0x458] sm:$0xff]
  %v3043 = vld [vmem:[%s9 + $0x460] sm:$0xff]
  %v3044 = vld [vmem:[%s9 + $0x468] sm:$0xff]
  %v3045 = vld [vmem:[%s9 + $0x470] sm:$0xff]
  %v3046 = vld [vmem:[%s9 + $0x478] sm:$0xff]
  %v3047 = vld [vmem:[%s9 + $0x480] sm:$0xff]
  %v3048 = vld [vmem:[%s9 + $0x488] sm:$0xff]
  %v3049 = vld [vmem:[%s9 + $0x490] sm:$0xff]
  %v3050 = vld [vmem:[%s9 + $0x498] sm:$0xff]
  %v3051 = vld [vmem:[%s9 + $0x4a0] sm:$0xff]
  %v3052 = vld [vmem:[%s9 + $0x4a8] sm:$0xff]
  %v3053 = vld [vmem:[%s9 + $0x4b0] sm:$0xff]
  %v3054 = vld [vmem:[%s9 + $0x4b8] sm:$0xff]
  %v3055 = vld [vmem:[%s9 + $0x4c0] sm:$0xff]
  %v3056 = vld [vmem:[%s9 + $0x4c8] sm:$0xff]
  %v3057 = vld [vmem:[%s9 + $0x4d0] sm:$0xff]
  %v3058 = vld [vmem:[%s9 + $0x4d8] sm:$0xff]
  %v3059 = vld [vmem:[%s9 + $0x4e0] sm:$0xff]
  %v3060 = vld [vmem:[%s9 + $0x4e8] sm:$0xff]
  %v3061 = vld [vmem:[%s9 + $0x4f0] sm:$0xff]
  %v3062 = vld [vmem:[%s9 + $0x4f8] sm:$0xff]
  %v3063 = vld [vmem:[%s9 + $0x500] sm:$0xff]
  %v3064 = vld [vmem:[%s9 + $0x508] sm:$0xff]
  %v3065 = vld [vmem:[%s9 + $0x510] sm:$0xff]
  %v3066 = vld [vmem:[%s9 + $0x518] sm:$0xff]
  %v3067 = vld [vmem:[%s9 + $0x520] sm:$0xff]
  %v3068 = vld [vmem:[%s9 + $0x528] sm:$0xff]
  %v3069 = vld [vmem:[%s9 + $0x530] sm:$0xff]
  %v3070 = vld [vmem:[%s9 + $0x538] sm:$0xff]
  %v3071 = vld [vmem:[%s9 + $0x540] sm:$0xff]
  %v3072 = vld [vmem:[%s9 + $0x548] sm:$0xff]
  %v3073 = vld [vmem:[%s9 + $0x550] sm:$0xff]
  %v3074 = vld [vmem:[%s9 + $0x558] sm:$0xff]
  %v3075 = vld [vmem:[%s9 + $0x560] sm:$0xff]
  %v3076 = vld [vmem:[%s9 + $0x568] sm:$0xff]
  %v3077 = vld [vmem:[%s9 + $0x570] sm:$0xff]
  %v3078 = vld [vmem:[%s9 + $0x578] sm:$0xff]
  %v3079 = vld [vmem:[%s9 + $0x580] sm:$0xff]
  %v3080 = vld [vmem:[%s9 + $0x588] sm:$0xff]
  %v3081 = vld [vmem:[%s9 + $0x590] sm:$0xff]
  %v3082 = vld [vmem:[%s9 + $0x598] sm:$0xff]
  %v3083 = vld [vmem:[%s9 + $0x5a0] sm:$0xff]
  %v3084 = vld [vmem:[%s9 + $0x5a8] sm:$0xff]
  %v3085 = vld [vmem:[%s9 + $0x5b0] sm:$0xff]
  %v3086 = vld [vmem:[%s9 + $0x5b8] sm:$0xff]
  %v3087 = vld [vmem:[%s9 + $0x5c0] sm:$0xff]
  %v3088 = vld [vmem:[%s9 + $0x5c8] sm:$0xff]
  %v3089 = vld [vmem:[%s9 + $0x5d0] sm:$0xff]
  %v3090 = vld [vmem:[%s9 + $0x5d8] sm:$0xff]
  %v3091 = vld [vmem:[%s9 + $0x5e0] sm:$0xff]
  %v3092 = vld [vmem:[%s9 + $0x5e8] sm:$0xff]
  %v3093 = vld [vmem:[%s9 + $0x5f0] sm:$0xff]
  %v3094 = vld [vmem:[%s9 + $0x5f8] sm:$0xff]
  %v3287 = vunpack.c.l.b16 %v2903
  %v3288 = vunpack.c.h.b16 %v2903
  %v3289 = vunpack.c.l.b16 %v2904
  %v3290 = vunpack.c.h.b16 %v2904
  %v3291 = vunpack.c.l.b16 %v2905
  %v3292 = vunpack.c.h.b16 %v2905
  %v3293 = vunpack.c.l.b16 %v2906
  %v3294 = vunpack.c.h.b16 %v2906
  %v3295 = vunpack.c.l.b16 %v2907
  %v3296 = vunpack.c.h.b16 %v2907
  %v3297 = vunpack.c.l.b16 %v2908
  %v3298 = vunpack.c.h.b16 %v2908
  %v3299 = vunpack.c.l.b16 %v2909
  %v3300 = vunpack.c.h.b16 %v2909
  %v3301 = vunpack.c.l.b16 %v2910
  %v3302 = vunpack.c.h.b16 %v2910
  %v3303 = vunpack.c.l.b16 %v2911
  %v3304 = vunpack.c.h.b16 %v2911
  %v3305 = vunpack.c.l.b16 %v2912
  %v3306 = vunpack.c.h.b16 %v2912
  %v3307 = vunpack.c.l.b16 %v2913
  %v3308 = vunpack.c.h.b16 %v2913
  %v3309 = vunpack.c.l.b16 %v2914
  %v3310 = vunpack.c.h.b16 %v2914
  %v3311 = vunpack.c.l.b16 %v2915
  %v3312 = vunpack.c.h.b16 %v2915
  %v3313 = vunpack.c.l.b16 %v2916
  %v3314 = vunpack.c.h.b16 %v2916
  %v3315 = vunpack.c.l.b16 %v2917
  %v3316 = vunpack.c.h.b16 %v2917
  %v3317 = vunpack.c.l.b16 %v2918
  %v3318 = vunpack.c.h.b16 %v2918
  %v3319 = vunpack.c.l.b16 %v2919
  %v3320 = vunpack.c.h.b16 %v2919
  %v3321 = vunpack.c.l.b16 %v2920
  %v3322 = vunpack.c.h.b16 %v2920
  %v3323 = vunpack.c.l.b16 %v2921
  %v3324 = vunpack.c.h.b16 %v2921
  %v3325 = vunpack.c.l.b16 %v2922
  %v3326 = vunpack.c.h.b16 %v2922
  %v3327 = vunpack.c.l.b16 %v2923
  %v3328 = vunpack.c.h.b16 %v2923
  %v3329 = vunpack.c.l.b16 %v2924
  %v3330 = vunpack.c.h.b16 %v2924
  %v3331 = vunpack.c.l.b16 %v2925
  %v3332 = vunpack.c.h.b16 %v2925
  %v3333 = vunpack.c.l.b16 %v2926
  %v3334 = vunpack.c.h.b16 %v2926
  %v3335 = vunpack.c.l.b16 %v2927
  %v3336 = vunpack.c.h.b16 %v2927
  %v3337 = vunpack.c.l.b16 %v2928
  %v3338 = vunpack.c.h.b16 %v2928
  %v3339 = vunpack.c.l.b16 %v2929
  %v3340 = vunpack.c.h.b16 %v2929
  %v3341 = vunpack.c.l.b16 %v2930
  %v3342 = vunpack.c.h.b16 %v2930
  %v3343 = vunpack.c.l.b16 %v2931
  %v3344 = vunpack.c.h.b16 %v2931
  %v3345 = vunpack.c.l.b16 %v2932
  %v3346 = vunpack.c.h.b16 %v2932
  %v3347 = vunpack.c.l.b16 %v2933
  %v3348 = vunpack.c.h.b16 %v2933
  %v3349 = vunpack.c.l.b16 %v2934
  %v3350 = vunpack.c.h.b16 %v2934
  %v3351 = vunpack.c.l.b16 %v2935
  %v3352 = vunpack.c.h.b16 %v2935
  %v3353 = vunpack.c.l.b16 %v2936
  %v3354 = vunpack.c.h.b16 %v2936
  %v3355 = vunpack.c.l.b16 %v2937
  %v3356 = vunpack.c.h.b16 %v2937
  %v3357 = vunpack.c.l.b16 %v2938
  %v3358 = vunpack.c.h.b16 %v2938
  %v3359 = vunpack.c.l.b16 %v2939
  %v3360 = vunpack.c.h.b16 %v2939
  %v3361 = vunpack.c.l.b16 %v2940
  %v3362 = vunpack.c.h.b16 %v2940
  %v3363 = vunpack.c.l.b16 %v2941
  %v3364 = vunpack.c.h.b16 %v2941
  %v3365 = vunpack.c.l.b16 %v2942
  %v3366 = vunpack.c.h.b16 %v2942
  %v3367 = vunpack.c.l.b16 %v2943
  %v3368 = vunpack.c.h.b16 %v2943
  %v3369 = vunpack.c.l.b16 %v2944
  %v3370 = vunpack.c.h.b16 %v2944
  %v3371 = vunpack.c.l.b16 %v2945
  %v3372 = vunpack.c.h.b16 %v2945
  %v3373 = vunpack.c.l.b16 %v2946
  %v3374 = vunpack.c.h.b16 %v2946
  %v3375 = vunpack.c.l.b16 %v2947
  %v3376 = vunpack.c.h.b16 %v2947
  %v3377 = vunpack.c.l.b16 %v2948
  %v3378 = vunpack.c.h.b16 %v2948
  %v3379 = vunpack.c.l.b16 %v2949
  %v3380 = vunpack.c.h.b16 %v2949
  %v3381 = vunpack.c.l.b16 %v2950
  %v3382 = vunpack.c.h.b16 %v2950
  %v3383 = vunpack.c.l.b16 %v2951
  %v3384 = vunpack.c.h.b16 %v2951
  %v3385 = vunpack.c.l.b16 %v2952
  %v3386 = vunpack.c.h.b16 %v2952
  %v3387 = vunpack.c.l.b16 %v2953
  %v3388 = vunpack.c.h.b16 %v2953
  %v3389 = vunpack.c.l.b16 %v2954
  %v3390 = vunpack.c.h.b16 %v2954
  %v3391 = vunpack.c.l.b16 %v2955
  %v3392 = vunpack.c.h.b16 %v2955
  %v3393 = vunpack.c.l.b16 %v2956
  %v3394 = vunpack.c.h.b16 %v2956
  %v3395 = vunpack.c.l.b16 %v2957
  %v3396 = vunpack.c.h.b16 %v2957
  %v3397 = vunpack.c.l.b16 %v2958
  %v3398 = vunpack.c.h.b16 %v2958
  %v3399 = vunpack.c.l.b16 %v2959
  %v3400 = vunpack.c.h.b16 %v2959
  %v3401 = vunpack.c.l.b16 %v2960
  %v3402 = vunpack.c.h.b16 %v2960
  %v3403 = vunpack.c.l.b16 %v2961
  %v3404 = vunpack.c.h.b16 %v2961
  %v3405 = vunpack.c.l.b16 %v2962
  %v3406 = vunpack.c.h.b16 %v2962
  %v3407 = vunpack.c.l.b16 %v2963
  %v3408 = vunpack.c.h.b16 %v2963
  %v3409 = vunpack.c.l.b16 %v2964
  %v3410 = vunpack.c.h.b16 %v2964
  %v3411 = vunpack.c.l.b16 %v2965
  %v3412 = vunpack.c.h.b16 %v2965
  %v3413 = vunpack.c.l.b16 %v2966
  %v3414 = vunpack.c.h.b16 %v2966
  %v3415 = vunpack.c.l.b16 %v2967
  %v3416 = vunpack.c.h.b16 %v2967
  %v3417 = vunpack.c.l.b16 %v2968
  %v3418 = vunpack.c.h.b16 %v2968
  %v3419 = vunpack.c.l.b16 %v2969
  %v3420 = vunpack.c.h.b16 %v2969
  %v3421 = vunpack.c.l.b16 %v2970
  %v3422 = vunpack.c.h.b16 %v2970
  %v3423 = vunpack.c.l.b16 %v2971
  %v3424 = vunpack.c.h.b16 %v2971
  %v3425 = vunpack.c.l.b16 %v2972
  %v3426 = vunpack.c.h.b16 %v2972
  %v3427 = vunpack.c.l.b16 %v2973
  %v3428 = vunpack.c.h.b16 %v2973
  %v3429 = vunpack.c.l.b16 %v2974
  %v3430 = vunpack.c.h.b16 %v2974
  %v3431 = vunpack.c.l.b16 %v2975
  %v3432 = vunpack.c.h.b16 %v2975
  %v3433 = vunpack.c.l.b16 %v2976
  %v3434 = vunpack.c.h.b16 %v2976
  %v3435 = vunpack.c.l.b16 %v2977
  %v3436 = vunpack.c.h.b16 %v2977
  %v3437 = vunpack.c.l.b16 %v2978
  %v3438 = vunpack.c.h.b16 %v2978
  %v3439 = vunpack.c.l.b16 %v2979
  %v3440 = vunpack.c.h.b16 %v2979
  %v3441 = vunpack.c.l.b16 %v2980
  %v3442 = vunpack.c.h.b16 %v2980
  %v3443 = vunpack.c.l.b16 %v2981
  %v3444 = vunpack.c.h.b16 %v2981
  %v3445 = vunpack.c.l.b16 %v2982
  %v3446 = vunpack.c.h.b16 %v2982
  %v3447 = vunpack.c.l.b16 %v2983
  %v3448 = vunpack.c.h.b16 %v2983
  %v3449 = vunpack.c.l.b16 %v2984
  %v3450 = vunpack.c.h.b16 %v2984
  %v3451 = vunpack.c.l.b16 %v2985
  %v3452 = vunpack.c.h.b16 %v2985
  %v3453 = vunpack.c.l.b16 %v2986
  %v3454 = vunpack.c.h.b16 %v2986
  %v3455 = vunpack.c.l.b16 %v2987
  %v3456 = vunpack.c.h.b16 %v2987
  %v3457 = vunpack.c.l.b16 %v2988
  %v3458 = vunpack.c.h.b16 %v2988
  %v3459 = vunpack.c.l.b16 %v2989
  %v3460 = vunpack.c.h.b16 %v2989
  %v3461 = vunpack.c.l.b16 %v2990
  %v3462 = vunpack.c.h.b16 %v2990
  %v3463 = vunpack.c.l.b16 %v2991
  %v3464 = vunpack.c.h.b16 %v2991
  %v3465 = vunpack.c.l.b16 %v2992
  %v3466 = vunpack.c.h.b16 %v2992
  %v3467 = vunpack.c.l.b16 %v2993
  %v3468 = vunpack.c.h.b16 %v2993
  %v3469 = vunpack.c.l.b16 %v2994
  %v3470 = vunpack.c.h.b16 %v2994
  %v3471 = vunpack.c.l.b16 %v2995
  %v3472 = vunpack.c.h.b16 %v2995
  %v3473 = vunpack.c.l.b16 %v2996
  %v3474 = vunpack.c.h.b16 %v2996
  %v3475 = vunpack.c.l.b16 %v2997
  %v3476 = vunpack.c.h.b16 %v2997
  %v3477 = vunpack.c.l.b16 %v2998
  %v3478 = vunpack.c.h.b16 %v2998
  %v3479 = vunpack.c.l.b16 %v2999
  %v3480 = vunpack.c.h.b16 %v2999
  %v3481 = vunpack.c.l.b16 %v3000
  %v3482 = vunpack.c.h.b16 %v3000
  %v3483 = vunpack.c.l.b16 %v3001
  %v3484 = vunpack.c.h.b16 %v3001
  %v3485 = vunpack.c.l.b16 %v3002
  %v3486 = vunpack.c.h.b16 %v3002
  %v3487 = vunpack.c.l.b16 %v3003
  %v3488 = vunpack.c.h.b16 %v3003
  %v3489 = vunpack.c.l.b16 %v3004
  %v3490 = vunpack.c.h.b16 %v3004
  %v3491 = vunpack.c.l.b16 %v3005
  %v3492 = vunpack.c.h.b16 %v3005
  %v3493 = vunpack.c.l.b16 %v3006
  %v3494 = vunpack.c.h.b16 %v3006
  %v3495 = vunpack.c.l.b16 %v3007
  %v3496 = vunpack.c.h.b16 %v3007
  %v3497 = vunpack.c.l.b16 %v3008
  %v3498 = vunpack.c.h.b16 %v3008
  %v3499 = vunpack.c.l.b16 %v3009
  %v3500 = vunpack.c.h.b16 %v3009
  %v3501 = vunpack.c.l.b16 %v3010
  %v3502 = vunpack.c.h.b16 %v3010
  %v3503 = vunpack.c.l.b16 %v3011
  %v3504 = vunpack.c.h.b16 %v3011
  %v3505 = vunpack.c.l.b16 %v3012
  %v3506 = vunpack.c.h.b16 %v3012
  %v3507 = vunpack.c.l.b16 %v3013
  %v3508 = vunpack.c.h.b16 %v3013
  %v3509 = vunpack.c.l.b16 %v3014
  %v3510 = vunpack.c.h.b16 %v3014
  %v3511 = vunpack.c.l.b16 %v3015
  %v3512 = vunpack.c.h.b16 %v3015
  %v3513 = vunpack.c.l.b16 %v3016
  %v3514 = vunpack.c.h.b16 %v3016
  %v3515 = vunpack.c.l.b16 %v3017
  %v3516 = vunpack.c.h.b16 %v3017
  %v3517 = vunpack.c.l.b16 %v3018
  %v3518 = vunpack.c.h.b16 %v3018
  %v3519 = vunpack.c.l.b16 %v3019
  %v3520 = vunpack.c.h.b16 %v3019
  %v3521 = vunpack.c.l.b16 %v3020
  %v3522 = vunpack.c.h.b16 %v3020
  %v3523 = vunpack.c.l.b16 %v3021
  %v3524 = vunpack.c.h.b16 %v3021
  %v3525 = vunpack.c.l.b16 %v3022
  %v3526 = vunpack.c.h.b16 %v3022
  %v3527 = vunpack.c.l.b16 %v3023
  %v3528 = vunpack.c.h.b16 %v3023
  %v3529 = vunpack.c.l.b16 %v3024
  %v3530 = vunpack.c.h.b16 %v3024
  %v3531 = vunpack.c.l.b16 %v3025
  %v3532 = vunpack.c.h.b16 %v3025
  %v3533 = vunpack.c.l.b16 %v3026
  %v3534 = vunpack.c.h.b16 %v3026
  %v3535 = vunpack.c.l.b16 %v3027
  %v3536 = vunpack.c.h.b16 %v3027
  %v3537 = vunpack.c.l.b16 %v3028
  %v3538 = vunpack.c.h.b16 %v3028
  %v3539 = vunpack.c.l.b16 %v3029
  %v3540 = vunpack.c.h.b16 %v3029
  %v3541 = vunpack.c.l.b16 %v3030
  %v3542 = vunpack.c.h.b16 %v3030
  %v3543 = vunpack.c.l.b16 %v3031
  %v3544 = vunpack.c.h.b16 %v3031
  %v3545 = vunpack.c.l.b16 %v3032
  %v3546 = vunpack.c.h.b16 %v3032
  %v3547 = vunpack.c.l.b16 %v3033
  %v3548 = vunpack.c.h.b16 %v3033
  %v3549 = vunpack.c.l.b16 %v3034
  %v3550 = vunpack.c.h.b16 %v3034
  %v3551 = vunpack.c.l.b16 %v3035
  %v3552 = vunpack.c.h.b16 %v3035
  %v3553 = vunpack.c.l.b16 %v3036
  %v3554 = vunpack.c.h.b16 %v3036
  %v3555 = vunpack.c.l.b16 %v3037
  %v3556 = vunpack.c.h.b16 %v3037
  %v3557 = vunpack.c.l.b16 %v3038
  %v3558 = vunpack.c.h.b16 %v3038
  %v3559 = vunpack.c.l.b16 %v3039
  %v3560 = vunpack.c.h.b16 %v3039
  %v3561 = vunpack.c.l.b16 %v3040
  %v3562 = vunpack.c.h.b16 %v3040
  %v3563 = vunpack.c.l.b16 %v3041
  %v3564 = vunpack.c.h.b16 %v3041
  %v3565 = vunpack.c.l.b16 %v3042
  %v3566 = vunpack.c.h.b16 %v3042
  %v3567 = vunpack.c.l.b16 %v3043
  %v3568 = vunpack.c.h.b16 %v3043
  %v3569 = vunpack.c.l.b16 %v3044
  %v3570 = vunpack.c.h.b16 %v3044
  %v3571 = vunpack.c.l.b16 %v3045
  %v3572 = vunpack.c.h.b16 %v3045
  %v3573 = vunpack.c.l.b16 %v3046
  %v3574 = vunpack.c.h.b16 %v3046
  %v3575 = vunpack.c.l.b16 %v3047
  %v3576 = vunpack.c.h.b16 %v3047
  %v3577 = vunpack.c.l.b16 %v3048
  %v3578 = vunpack.c.h.b16 %v3048
  %v3579 = vunpack.c.l.b16 %v3049
  %v3580 = vunpack.c.h.b16 %v3049
  %v3581 = vunpack.c.l.b16 %v3050
  %v3582 = vunpack.c.h.b16 %v3050
  %v3583 = vunpack.c.l.b16 %v3051
  %v3584 = vunpack.c.h.b16 %v3051
  %v3585 = vunpack.c.l.b16 %v3052
  %v3586 = vunpack.c.h.b16 %v3052
  %v3587 = vunpack.c.l.b16 %v3053
  %v3588 = vunpack.c.h.b16 %v3053
  %v3589 = vunpack.c.l.b16 %v3054
  %v3590 = vunpack.c.h.b16 %v3054
  %v3591 = vunpack.c.l.b16 %v3055
  %v3592 = vunpack.c.h.b16 %v3055
  %v3593 = vunpack.c.l.b16 %v3056
  %v3594 = vunpack.c.h.b16 %v3056
  %v3595 = vunpack.c.l.b16 %v3057
  %v3596 = vunpack.c.h.b16 %v3057
  %v3597 = vunpack.c.l.b16 %v3058
  %v3598 = vunpack.c.h.b16 %v3058
  %v3599 = vunpack.c.l.b16 %v3059
  %v3600 = vunpack.c.h.b16 %v3059
  %v3601 = vunpack.c.l.b16 %v3060
  %v3602 = vunpack.c.h.b16 %v3060
  %v3603 = vunpack.c.l.b16 %v3061
  %v3604 = vunpack.c.h.b16 %v3061
  %v3605 = vunpack.c.l.b16 %v3062
  %v3606 = vunpack.c.h.b16 %v3062
  %v3607 = vunpack.c.l.b16 %v3063
  %v3608 = vunpack.c.h.b16 %v3063
  %v3609 = vunpack.c.l.b16 %v3064
  %v3610 = vunpack.c.h.b16 %v3064
  %v3611 = vunpack.c.l.b16 %v3065
  %v3612 = vunpack.c.h.b16 %v3065
  %v3613 = vunpack.c.l.b16 %v3066
  %v3614 = vunpack.c.h.b16 %v3066
  %v3615 = vunpack.c.l.b16 %v3067
  %v3616 = vunpack.c.h.b16 %v3067
  %v3617 = vunpack.c.l.b16 %v3068
  %v3618 = vunpack.c.h.b16 %v3068
  %v3619 = vunpack.c.l.b16 %v3069
  %v3620 = vunpack.c.h.b16 %v3069
  %v3621 = vunpack.c.l.b16 %v3070
  %v3622 = vunpack.c.h.b16 %v3070
  %v3623 = vunpack.c.l.b16 %v3071
  %v3624 = vunpack.c.h.b16 %v3071
  %v3625 = vunpack.c.l.b16 %v3072
  %v3626 = vunpack.c.h.b16 %v3072
  %v3627 = vunpack.c.l.b16 %v3073
  %v3628 = vunpack.c.h.b16 %v3073
  %v3629 = vunpack.c.l.b16 %v3074
  %v3630 = vunpack.c.h.b16 %v3074
  %v3631 = vunpack.c.l.b16 %v3075
  %v3632 = vunpack.c.h.b16 %v3075
  %v3633 = vunpack.c.l.b16 %v3076
  %v3634 = vunpack.c.h.b16 %v3076
  %v3635 = vunpack.c.l.b16 %v3077
  %v3636 = vunpack.c.h.b16 %v3077
  %v3637 = vunpack.c.l.b16 %v3078
  %v3638 = vunpack.c.h.b16 %v3078
  %v3639 = vunpack.c.l.b16 %v3079
  %v3640 = vunpack.c.h.b16 %v3079
  %v3641 = vunpack.c.l.b16 %v3080
  %v3642 = vunpack.c.h.b16 %v3080
  %v3643 = vunpack.c.l.b16 %v3081
  %v3644 = vunpack.c.h.b16 %v3081
  %v3645 = vunpack.c.l.b16 %v3082
  %v3646 = vunpack.c.h.b16 %v3082
  %v3647 = vunpack.c.l.b16 %v3083
  %v3648 = vunpack.c.h.b16 %v3083
  %v3649 = vunpack.c.l.b16 %v3084
  %v3650 = vunpack.c.h.b16 %v3084
  %v3651 = vunpack.c.l.b16 %v3085
  %v3652 = vunpack.c.h.b16 %v3085
  %v3653 = vunpack.c.l.b16 %v3086
  %v3654 = vunpack.c.h.b16 %v3086
  %v3655 = vunpack.c.l.b16 %v3087
  %v3656 = vunpack.c.h.b16 %v3087
  %v3657 = vunpack.c.l.b16 %v3088
  %v3658 = vunpack.c.h.b16 %v3088
  %v3659 = vunpack.c.l.b16 %v3089
  %v3660 = vunpack.c.h.b16 %v3089
  %v3661 = vunpack.c.l.b16 %v3090
  %v3662 = vunpack.c.h.b16 %v3090
  %v3663 = vunpack.c.l.b16 %v3091
  %v3664 = vunpack.c.h.b16 %v3091
  %v3665 = vunpack.c.l.b16 %v3092
  %v3666 = vunpack.c.h.b16 %v3092
  %v3667 = vunpack.c.l.b16 %v3093
  %v3668 = vunpack.c.h.b16 %v3093
  %v3669 = vunpack.c.l.b16 %v3094
  %v3670 = vunpack.c.h.b16 %v3094
  %v3671 = vpack.c.b16 %v3291, %v3287
  %v3672 = vpack.c.b16 %v3292, %v3288
  %v3673 = vpack.c.b16 %v3293, %v3289
  %v3674 = vpack.c.b16 %v3294, %v3290
  %v3675 = vpack.c.b16 %v3299, %v3295
  %v3676 = vpack.c.b16 %v3300, %v3296
  %v3677 = vpack.c.b16 %v3301, %v3297
  %v3678 = vpack.c.b16 %v3302, %v3298
  %v3679 = vpack.c.b16 %v3307, %v3303
  %v3680 = vpack.c.b16 %v3308, %v3304
  %v3681 = vpack.c.b16 %v3309, %v3305
  %v3682 = vpack.c.b16 %v3310, %v3306
  %v3683 = vpack.c.b16 %v3315, %v3311
  %v3684 = vpack.c.b16 %v3316, %v3312
  %v3685 = vpack.c.b16 %v3317, %v3313
  %v3686 = vpack.c.b16 %v3318, %v3314
  %v3687 = vpack.c.b16 %v3323, %v3319
  %v3688 = vpack.c.b16 %v3324, %v3320
  %v3689 = vpack.c.b16 %v3325, %v3321
  %v3690 = vpack.c.b16 %v3326, %v3322
  %v3691 = vpack.c.b16 %v3331, %v3327
  %v3692 = vpack.c.b16 %v3332, %v3328
  %v3693 = vpack.c.b16 %v3333, %v3329
  %v3694 = vpack.c.b16 %v3334, %v3330
  %v3695 = vpack.c.b16 %v3339, %v3335
  %v3696 = vpack.c.b16 %v3340, %v3336
  %v3697 = vpack.c.b16 %v3341, %v3337
  %v3698 = vpack.c.b16 %v3342, %v3338
  %v3699 = vpack.c.b16 %v3347, %v3343
  %v3700 = vpack.c.b16 %v3348, %v3344
  %v3701 = vpack.c.b16 %v3349, %v3345
  %v3702 = vpack.c.b16 %v3350, %v3346
  %v3703 = vpack.c.b16 %v3355, %v3351
  %v3704 = vpack.c.b16 %v3356, %v3352
  %v3705 = vpack.c.b16 %v3357, %v3353
  %v3706 = vpack.c.b16 %v3358, %v3354
  %v3707 = vpack.c.b16 %v3363, %v3359
  %v3708 = vpack.c.b16 %v3364, %v3360
  %v3709 = vpack.c.b16 %v3365, %v3361
  %v3710 = vpack.c.b16 %v3366, %v3362
  %v3711 = vpack.c.b16 %v3371, %v3367
  %v3712 = vpack.c.b16 %v3372, %v3368
  %v3713 = vpack.c.b16 %v3373, %v3369
  %v3714 = vpack.c.b16 %v3374, %v3370
  %v3715 = vpack.c.b16 %v3379, %v3375
  %v3716 = vpack.c.b16 %v3380, %v3376
  %v3717 = vpack.c.b16 %v3381, %v3377
  %v3718 = vpack.c.b16 %v3382, %v3378
  %v3719 = vpack.c.b16 %v3387, %v3383
  %v3720 = vpack.c.b16 %v3388, %v3384
  %v3721 = vpack.c.b16 %v3389, %v3385
  %v3722 = vpack.c.b16 %v3390, %v3386
  %v3723 = vpack.c.b16 %v3395, %v3391
  %v3724 = vpack.c.b16 %v3396, %v3392
  %v3725 = vpack.c.b16 %v3397, %v3393
  %v3726 = vpack.c.b16 %v3398, %v3394
  %v3727 = vpack.c.b16 %v3403, %v3399
  %v3728 = vpack.c.b16 %v3404, %v3400
  %v3729 = vpack.c.b16 %v3405, %v3401
  %v3730 = vpack.c.b16 %v3406, %v3402
  %v3731 = vpack.c.b16 %v3411, %v3407
  %v3732 = vpack.c.b16 %v3412, %v3408
  %v3733 = vpack.c.b16 %v3413, %v3409
  %v3734 = vpack.c.b16 %v3414, %v3410
  %v3735 = vpack.c.b16 %v3419, %v3415
  %v3736 = vpack.c.b16 %v3420, %v3416
  %v3737 = vpack.c.b16 %v3421, %v3417
  %v3738 = vpack.c.b16 %v3422, %v3418
  %v3739 = vpack.c.b16 %v3427, %v3423
  %v3740 = vpack.c.b16 %v3428, %v3424
  %v3741 = vpack.c.b16 %v3429, %v3425
  %v3742 = vpack.c.b16 %v3430, %v3426
  %v3743 = vpack.c.b16 %v3435, %v3431
  %v3744 = vpack.c.b16 %v3436, %v3432
  %v3745 = vpack.c.b16 %v3437, %v3433
  %v3746 = vpack.c.b16 %v3438, %v3434
  %v3747 = vpack.c.b16 %v3443, %v3439
  %v3748 = vpack.c.b16 %v3444, %v3440
  %v3749 = vpack.c.b16 %v3445, %v3441
  %v3750 = vpack.c.b16 %v3446, %v3442
  %v3751 = vpack.c.b16 %v3451, %v3447
  %v3752 = vpack.c.b16 %v3452, %v3448
  %v3753 = vpack.c.b16 %v3453, %v3449
  %v3754 = vpack.c.b16 %v3454, %v3450
  %v3755 = vpack.c.b16 %v3459, %v3455
  %v3756 = vpack.c.b16 %v3460, %v3456
  %v3757 = vpack.c.b16 %v3461, %v3457
  %v3758 = vpack.c.b16 %v3462, %v3458
  %v3759 = vpack.c.b16 %v3467, %v3463
  %v3760 = vpack.c.b16 %v3468, %v3464
  %v3761 = vpack.c.b16 %v3469, %v3465
  %v3762 = vpack.c.b16 %v3470, %v3466
  %v3763 = vpack.c.b16 %v3475, %v3471
  %v3764 = vpack.c.b16 %v3476, %v3472
  %v3765 = vpack.c.b16 %v3477, %v3473
  %v3766 = vpack.c.b16 %v3478, %v3474
  %v3767 = vpack.c.b16 %v3483, %v3479
  %v3768 = vpack.c.b16 %v3484, %v3480
  %v3769 = vpack.c.b16 %v3485, %v3481
  %v3770 = vpack.c.b16 %v3486, %v3482
  %v3771 = vpack.c.b16 %v3491, %v3487
  %v3772 = vpack.c.b16 %v3492, %v3488
  %v3773 = vpack.c.b16 %v3493, %v3489
  %v3774 = vpack.c.b16 %v3494, %v3490
  %v3775 = vpack.c.b16 %v3499, %v3495
  %v3776 = vpack.c.b16 %v3500, %v3496
  %v3777 = vpack.c.b16 %v3501, %v3497
  %v3778 = vpack.c.b16 %v3502, %v3498
  %v3779 = vpack.c.b16 %v3507, %v3503
  %v3780 = vpack.c.b16 %v3508, %v3504
  %v3781 = vpack.c.b16 %v3509, %v3505
  %v3782 = vpack.c.b16 %v3510, %v3506
  %v3783 = vpack.c.b16 %v3515, %v3511
  %v3784 = vpack.c.b16 %v3516, %v3512
  %v3785 = vpack.c.b16 %v3517, %v3513
  %v3786 = vpack.c.b16 %v3518, %v3514
  %v3787 = vpack.c.b16 %v3523, %v3519
  %v3788 = vpack.c.b16 %v3524, %v3520
  %v3789 = vpack.c.b16 %v3525, %v3521
  %v3790 = vpack.c.b16 %v3526, %v3522
  %v3791 = vpack.c.b16 %v3531, %v3527
  %v3792 = vpack.c.b16 %v3532, %v3528
  %v3793 = vpack.c.b16 %v3533, %v3529
  %v3794 = vpack.c.b16 %v3534, %v3530
  %v3795 = vpack.c.b16 %v3539, %v3535
  %v3796 = vpack.c.b16 %v3540, %v3536
  %v3797 = vpack.c.b16 %v3541, %v3537
  %v3798 = vpack.c.b16 %v3542, %v3538
  %v3799 = vpack.c.b16 %v3547, %v3543
  %v3800 = vpack.c.b16 %v3548, %v3544
  %v3801 = vpack.c.b16 %v3549, %v3545
  %v3802 = vpack.c.b16 %v3550, %v3546
  %v3803 = vpack.c.b16 %v3555, %v3551
  %v3804 = vpack.c.b16 %v3556, %v3552
  %v3805 = vpack.c.b16 %v3557, %v3553
  %v3806 = vpack.c.b16 %v3558, %v3554
  %v3807 = vpack.c.b16 %v3563, %v3559
  %v3808 = vpack.c.b16 %v3564, %v3560
  %v3809 = vpack.c.b16 %v3565, %v3561
  %v3810 = vpack.c.b16 %v3566, %v3562
  %v3811 = vpack.c.b16 %v3571, %v3567
  %v3812 = vpack.c.b16 %v3572, %v3568
  %v3813 = vpack.c.b16 %v3573, %v3569
  %v3814 = vpack.c.b16 %v3574, %v3570
  %v3815 = vpack.c.b16 %v3579, %v3575
  %v3816 = vpack.c.b16 %v3580, %v3576
  %v3817 = vpack.c.b16 %v3581, %v3577
  %v3818 = vpack.c.b16 %v3582, %v3578
  %v3819 = vpack.c.b16 %v3587, %v3583
  %v3820 = vpack.c.b16 %v3588, %v3584
  %v3821 = vpack.c.b16 %v3589, %v3585
  %v3822 = vpack.c.b16 %v3590, %v3586
  %v3823 = vpack.c.b16 %v3595, %v3591
  %v3824 = vpack.c.b16 %v3596, %v3592
  %v3825 = vpack.c.b16 %v3597, %v3593
  %v3826 = vpack.c.b16 %v3598, %v3594
  %v3827 = vpack.c.b16 %v3603, %v3599
  %v3828 = vpack.c.b16 %v3604, %v3600
  %v3829 = vpack.c.b16 %v3605, %v3601
  %v3830 = vpack.c.b16 %v3606, %v3602
  %v3831 = vpack.c.b16 %v3611, %v3607
  %v3832 = vpack.c.b16 %v3612, %v3608
  %v3833 = vpack.c.b16 %v3613, %v3609
  %v3834 = vpack.c.b16 %v3614, %v3610
  %v3835 = vpack.c.b16 %v3619, %v3615
  %v3836 = vpack.c.b16 %v3620, %v3616
  %v3837 = vpack.c.b16 %v3621, %v3617
  %v3838 = vpack.c.b16 %v3622, %v3618
  %v3839 = vpack.c.b16 %v3627, %v3623
  %v3840 = vpack.c.b16 %v3628, %v3624
  %v3841 = vpack.c.b16 %v3629, %v3625
  %v3842 = vpack.c.b16 %v3630, %v3626
  %v3843 = vpack.c.b16 %v3635, %v3631
  %v3844 = vpack.c.b16 %v3636, %v3632
  %v3845 = vpack.c.b16 %v3637, %v3633
  %v3846 = vpack.c.b16 %v3638, %v3634
  %v3847 = vpack.c.b16 %v3643, %v3639
  %v3848 = vpack.c.b16 %v3644, %v3640
  %v3849 = vpack.c.b16 %v3645, %v3641
  %v3850 = vpack.c.b16 %v3646, %v3642
  %v3851 = vpack.c.b16 %v3651, %v3647
  %v3852 = vpack.c.b16 %v3652, %v3648
  %v3853 = vpack.c.b16 %v3653, %v3649
  %v3854 = vpack.c.b16 %v3654, %v3650
  %v3855 = vpack.c.b16 %v3659, %v3655
  %v3856 = vpack.c.b16 %v3660, %v3656
  %v3857 = vpack.c.b16 %v3661, %v3657
  %v3858 = vpack.c.b16 %v3662, %v3658
  %v3859 = vpack.c.b16 %v3667, %v3663
  %v3860 = vpack.c.b16 %v3668, %v3664
  %v3861 = vpack.c.b16 %v3669, %v3665
  %v3862 = vpack.c.b16 %v3670, %v3666
  %4055 = vmatprep.subr.bf16.mxu0 %v3672
  %4056 = vmatpush1.bf16.msra.mxu0 %v3671
  %4057 = vmatprep.subr.bf16.mxu0 %v3676
  %4058 = vmatpush1.bf16.msra.mxu0 %v3675
  %4059 = vmatprep.subr.bf16.mxu0 %v3680
  %4060 = vmatpush1.bf16.msra.mxu0 %v3679
  %4061 = vmatprep.subr.bf16.mxu0 %v3684
  %4062 = vmatpush1.bf16.msra.mxu0 %v3683
  %4063 = vmatprep.subr.bf16.mxu0 %v3688
  %4064 = vmatpush1.bf16.msra.mxu0 %v3687
  %4065 = vmatprep.subr.bf16.mxu0 %v3692
  %4066 = vmatpush1.bf16.msra.mxu0 %v3691
  %4067 = vmatprep.subr.bf16.mxu0 %v3696
  %4068 = vmatpush1.bf16.msra.mxu0 %v3695
  %4069 = vmatprep.subr.bf16.mxu0 %v3700
  %4070 = vmatpush1.bf16.msra.mxu0 %v3699
  %4071 = vmatprep.subr.bf16.mxu0 %v3704
  %4072 = vmatpush1.bf16.msra.mxu0 %v3703
  %4073 = vmatprep.subr.bf16.mxu0 %v3708
  %4074 = vmatpush1.bf16.msra.mxu0 %v3707
  %4075 = vmatprep.subr.bf16.mxu0 %v3712
  %4076 = vmatpush1.bf16.msra.mxu0 %v3711
  %4077 = vmatprep.subr.bf16.mxu0 %v3716
  %4078 = vmatpush1.bf16.msra.mxu0 %v3715
  %4079 = vmatprep.subr.bf16.mxu0 %v3720
  %4080 = vmatpush1.bf16.msra.mxu0 %v3719
  %4081 = vmatprep.subr.bf16.mxu0 %v3724
  %4082 = vmatpush1.bf16.msra.mxu0 %v3723
  %4083 = vmatprep.subr.bf16.mxu0 %v3728
  %4084 = vmatpush1.bf16.msra.mxu0 %v3727
  %4085 = vmatprep.subr.bf16.mxu0 %v3732
  %4086 = vmatpush1.bf16.msra.mxu0 %v3731
  %4087 = vmatprep.mubr.bf16.mxu0 %v2898
  %4088 = vmatmul.mubr.bf16.gmra.mrb[0].mxu0 %v2897
  %v4089 = vpop.f32.mrb[0].mxu0
  %v4090 = vadd.f32 0.0, %v4089
  %v4091 = vpop.f32.mrb[0].mxu0
  %v4092 = vadd.f32 0.0, %v4091
  %v4093 = vpop.f32.mrb[0].mxu0
  %v4094 = vpop.f32.mrb[0].mxu0
  %4095 = vdwg.mxu0
  %4096 = vmatprep.subr.bf16.mxu0 %v3736
  %4097 = vmatpush1.bf16.msra.mxu0 %v3735
  %4098 = vmatprep.subr.bf16.mxu0 %v3740
  %4099 = vmatpush1.bf16.msra.mxu0 %v3739
  %4100 = vmatprep.subr.bf16.mxu0 %v3744
  %4101 = vmatpush1.bf16.msra.mxu0 %v3743
  %4102 = vmatprep.subr.bf16.mxu0 %v3748
  %4103 = vmatpush1.bf16.msra.mxu0 %v3747
  %4104 = vmatprep.subr.bf16.mxu0 %v3752
  %4105 = vmatpush1.bf16.msra.mxu0 %v3751
  %4106 = vmatprep.subr.bf16.mxu0 %v3756
  %4107 = vmatpush1.bf16.msra.mxu0 %v3755
  %4108 = vmatprep.subr.bf16.mxu0 %v3760
  %4109 = vmatpush1.bf16.msra.mxu0 %v3759
  %4110 = vmatprep.subr.bf16.mxu0 %v3764
  %4111 = vmatpush1.bf16.msra.mxu0 %v3763
  %4112 = vmatprep.subr.bf16.mxu0 %v3768
  %4113 = vmatpush1.bf16.msra.mxu0 %v3767
  %4114 = vmatprep.subr.bf16.mxu0 %v3772
  %4115 = vmatpush1.bf16.msra.mxu0 %v3771
  %4116 = vmatprep.subr.bf16.mxu0 %v3776
  %4117 = vmatpush1.bf16.msra.mxu0 %v3775
  %4118 = vmatprep.subr.bf16.mxu0 %v3780
  %4119 = vmatpush1.bf16.msra.mxu0 %v3779
  %4120 = vmatprep.subr.bf16.mxu0 %v3784
  %4121 = vmatpush1.bf16.msra.mxu0 %v3783
  %4122 = vmatprep.subr.bf16.mxu0 %v3788
  %4123 = vmatpush1.bf16.msra.mxu0 %v3787
  %4124 = vmatprep.subr.bf16.mxu0 %v3792
  %4125 = vmatpush1.bf16.msra.mxu0 %v3791
  %4126 = vmatprep.subr.bf16.mxu0 %v3796
  %4127 = vmatpush1.bf16.msra.mxu0 %v3795
  %4128 = vmatprep.mubr.bf16.mxu0 %v2900
  %4129 = vmatmul.mubr.bf16.gmra.mrb[0].mxu0 %v2899
  %v4130 = vpop.f32.mrb[0].mxu0
  %v4131 = vadd.f32 %v4090, %v4130
  %v4132 = vpop.f32.mrb[0].mxu0
  %v4133 = vadd.f32 %v4092, %v4132
  %v4134 = vpop.f32.mrb[0].mxu0
  %v4135 = vpop.f32.mrb[0].mxu0
  %4136 = vdwg.mxu0
  %4137 = vmatprep.subr.bf16.mxu0 %v3800
  %4138 = vmatpush1.bf16.msra.mxu0 %v3799
  %4139 = vmatprep.subr.bf16.mxu0 %v3804
  %4140 = vmatpush1.bf16.msra.mxu0 %v3803
  %4141 = vmatprep.subr.bf16.mxu0 %v3808
  %4142 = vmatpush1.bf16.msra.mxu0 %v3807
  %4143 = vmatprep.subr.bf16.mxu0 %v3812
  %4144 = vmatpush1.bf16.msra.mxu0 %v3811
  %4145 = vmatprep.subr.bf16.mxu0 %v3816
  %4146 = vmatpush1.bf16.msra.mxu0 %v3815
  %4147 = vmatprep.subr.bf16.mxu0 %v3820
  %4148 = vmatpush1.bf16.msra.mxu0 %v3819
  %4149 = vmatprep.subr.bf16.mxu0 %v3824
  %4150 = vmatpush1.bf16.msra.mxu0 %v3823
  %4151 = vmatprep.subr.bf16.mxu0 %v3828
  %4152 = vmatpush1.bf16.msra.mxu0 %v3827
  %4153 = vmatprep.subr.bf16.mxu0 %v3832
  %4154 = vmatpush1.bf16.msra.mxu0 %v3831
  %4155 = vmatprep.subr.bf16.mxu0 %v3836
  %4156 = vmatpush1.bf16.msra.mxu0 %v3835
  %4157 = vmatprep.subr.bf16.mxu0 %v3840
  %4158 = vmatpush1.bf16.msra.mxu0 %v3839
  %4159 = vmatprep.subr.bf16.mxu0 %v3844
  %4160 = vmatpush1.bf16.msra.mxu0 %v3843
  %4161 = vmatprep.subr.bf16.mxu0 %v3848
  %4162 = vmatpush1.bf16.msra.mxu0 %v3847
  %4163 = vmatprep.subr.bf16.mxu0 %v3852
  %4164 = vmatpush1.bf16.msra.mxu0 %v3851
  %4165 = vmatprep.subr.bf16.mxu0 %v3856
  %4166 = vmatpush1.bf16.msra.mxu0 %v3855
  %4167 = vmatprep.subr.bf16.mxu0 %v3860
  %4168 = vmatpush1.bf16.msra.mxu0 %v3859
  %4169 = vmatprep.mubr.bf16.mxu0 %v2902
  %4170 = vmatmul.mubr.bf16.gmra.mrb[0].mxu0 %v2901
  %v4171 = vpop.f32.mrb[0].mxu0
  %v4172 = vadd.f32 %v4131, %v4171
  %v4173 = vpop.f32.mrb[0].mxu0
  %v4174 = vadd.f32 %v4133, %v4173
  %v4175 = vpop.f32.mrb[0].mxu0
  %v4176 = vpop.f32.mrb[0].mxu0
  %4177 = vdwg.mxu0
  %4178 = vmatprep.subr.bf16.mxu0 %v3674
  %4179 = vmatpush1.bf16.msra.mxu0 %v3673
  %4180 = vmatprep.subr.bf16.mxu0 %v3678
  %4181 = vmatpush1.bf16.msra.mxu0 %v3677
  %4182 = vmatprep.subr.bf16.mxu0 %v3682
  %4183 = vmatpush1.bf16.msra.mxu0 %v3681
  %4184 = vmatprep.subr.bf16.mxu0 %v3686
  %4185 = vmatpush1.bf16.msra.mxu0 %v3685
  %4186 = vmatprep.subr.bf16.mxu0 %v3690
  %4187 = vmatpush1.bf16.msra.mxu0 %v3689
  %4188 = vmatprep.subr.bf16.mxu0 %v3694
  %4189 = vmatpush1.bf16.msra.mxu0 %v3693
  %4190 = vmatprep.subr.bf16.mxu0 %v3698
  %4191 = vmatpush1.bf16.msra.mxu0 %v3697
  %4192 = vmatprep.subr.bf16.mxu0 %v3702
  %4193 = vmatpush1.bf16.msra.mxu0 %v3701
  %4194 = vmatprep.subr.bf16.mxu0 %v3706
  %4195 = vmatpush1.bf16.msra.mxu0 %v3705
  %4196 = vmatprep.subr.bf16.mxu0 %v3710
  %4197 = vmatpush1.bf16.msra.mxu0 %v3709
  %4198 = vmatprep.subr.bf16.mxu0 %v3714
  %4199 = vmatpush1.bf16.msra.mxu0 %v3713
  %4200 = vmatprep.subr.bf16.mxu0 %v3718
  %4201 = vmatpush1.bf16.msra.mxu0 %v3717
  %4202 = vmatprep.subr.bf16.mxu0 %v3722
  %4203 = vmatpush1.bf16.msra.mxu0 %v3721
  %4204 = vmatprep.subr.bf16.mxu0 %v3726
  %4205 = vmatpush1.bf16.msra.mxu0 %v3725
  %4206 = vmatprep.subr.bf16.mxu0 %v3730
  %4207 = vmatpush1.bf16.msra.mxu0 %v3729
  %4208 = vmatprep.subr.bf16.mxu0 %v3734
  %4209 = vmatpush1.bf16.msra.mxu0 %v3733
  %4210 = vmatprep.mubr.bf16.mxu0 %v2898
  %4211 = vmatmul.mubr.bf16.gmra.mrb[0].mxu0 %v2897
  %v4212 = vpop.f32.mrb[0].mxu0
  %v4213 = vadd.f32 0.0, %v4212
  %v4214 = vpop.f32.mrb[0].mxu0
  %v4215 = vadd.f32 0.0, %v4214
  %v4216 = vpop.f32.mrb[0].mxu0
  %v4217 = vpop.f32.mrb[0].mxu0
  %4218 = vdwg.mxu0
  %4219 = vmatprep.subr.bf16.mxu0 %v3738
  %4220 = vmatpush1.bf16.msra.mxu0 %v3737
  %4221 = vmatprep.subr.bf16.mxu0 %v3742
  %4222 = vmatpush1.bf16.msra.mxu0 %v3741
  %4223 = vmatprep.subr.bf16.mxu0 %v3746
  %4224 = vmatpush1.bf16.msra.mxu0 %v3745
  %4225 = vmatprep.subr.bf16.mxu0 %v3750
  %4226 = vmatpush1.bf16.msra.mxu0 %v3749
  %4227 = vmatprep.subr.bf16.mxu0 %v3754
  %4228 = vmatpush1.bf16.msra.mxu0 %v3753
  %4229 = vmatprep.subr.bf16.mxu0 %v3758
  %4230 = vmatpush1.bf16.msra.mxu0 %v3757
  %4231 = vmatprep.subr.bf16.mxu0 %v3762
  %4232 = vmatpush1.bf16.msra.mxu0 %v3761
  %4233 = vmatprep.subr.bf16.mxu0 %v3766
  %4234 = vmatpush1.bf16.msra.mxu0 %v3765
  %4235 = vmatprep.subr.bf16.mxu0 %v3770
  %4236 = vmatpush1.bf16.msra.mxu0 %v3769
  %4237 = vmatprep.subr.bf16.mxu0 %v3774
  %4238 = vmatpush1.bf16.msra.mxu0 %v3773
  %4239 = vmatprep.subr.bf16.mxu0 %v3778
  %4240 = vmatpush1.bf16.msra.mxu0 %v3777
  %4241 = vmatprep.subr.bf16.mxu0 %v3782
  %4242 = vmatpush1.bf16.msra.mxu0 %v3781
  %4243 = vmatprep.subr.bf16.mxu0 %v3786
  %4244 = vmatpush1.bf16.msra.mxu0 %v3785
  %4245 = vmatprep.subr.bf16.mxu0 %v3790
  %4246 = vmatpush1.bf16.msra.mxu0 %v3789
  %4247 = vmatprep.subr.bf16.mxu0 %v3794
  %4248 = vmatpush1.bf16.msra.mxu0 %v3793
  %4249 = vmatprep.subr.bf16.mxu0 %v3798
  %4250 = vmatpush1.bf16.msra.mxu0 %v3797
  %4251 = vmatprep.mubr.bf16.mxu0 %v2900
  %4252 = vmatmul.mubr.bf16.gmra.mrb[0].mxu0 %v2899
  %v4253 = vpop.f32.mrb[0].mxu0
  %v4254 = vadd.f32 %v4213, %v4253
  %v4255 = vpop.f32.mrb[0].mxu0
  %v4256 = vadd.f32 %v4215, %v4255
  %v4257 = vpop.f32.mrb[0].mxu0
  %v4258 = vpop.f32.mrb[0].mxu0
  %4259 = vdwg.mxu0
  %4260 = vmatprep.subr.bf16.mxu0 %v3802
  %4261 = vmatpush1.bf16.msra.mxu0 %v3801
  %4262 = vmatprep.subr.bf16.mxu0 %v3806
  %4263 = vmatpush1.bf16.msra.mxu0 %v3805
  %4264 = vmatprep.subr.bf16.mxu0 %v3810
  %4265 = vmatpush1.bf16.msra.mxu0 %v3809
  %4266 = vmatprep.subr.bf16.mxu0 %v3814
  %4267 = vmatpush1.bf16.msra.mxu0 %v3813
  %4268 = vmatprep.subr.bf16.mxu0 %v3818
  %4269 = vmatpush1.bf16.msra.mxu0 %v3817
  %4270 = vmatprep.subr.bf16.mxu0 %v3822
  %4271 = vmatpush1.bf16.msra.mxu0 %v3821
  %4272 = vmatprep.subr.bf16.mxu0 %v3826
  %4273 = vmatpush1.bf16.msra.mxu0 %v3825
  %4274 = vmatprep.subr.bf16.mxu0 %v3830
  %4275 = vmatpush1.bf16.msra.mxu0 %v3829
  %4276 = vmatprep.subr.bf16.mxu0 %v3834
  %4277 = vmatpush1.bf16.msra.mxu0 %v3833
  %4278 = vmatprep.subr.bf16.mxu0 %v3838
  %4279 = vmatpush1.bf16.msra.mxu0 %v3837
  %4280 = vmatprep.subr.bf16.mxu0 %v3842
  %4281 = vmatpush1.bf16.msra.mxu0 %v3841
  %4282 = vmatprep.subr.bf16.mxu0 %v3846
  %4283 = vmatpush1.bf16.msra.mxu0 %v3845
  %4284 = vmatprep.subr.bf16.mxu0 %v3850
  %4285 = vmatpush1.bf16.msra.mxu0 %v3849
  %4286 = vmatprep.subr.bf16.mxu0 %v3854
  %4287 = vmatpush1.bf16.msra.mxu0 %v3853
  %4288 = vmatprep.subr.bf16.mxu0 %v3858
  %4289 = vmatpush1.bf16.msra.mxu0 %v3857
  %4290 = vmatprep.subr.bf16.mxu0 %v3862
  %4291 = vmatpush1.bf16.msra.mxu0 %v3861
  %4292 = vmatprep.mubr.bf16.mxu0 %v2902
  %4293 = vmatmul.mubr.bf16.gmra.mrb[0].mxu0 %v2901
  %v4294 = vpop.f32.mrb[0].mxu0
  %v4295 = vadd.f32 %v4254, %v4294
  %v4296 = vpop.f32.mrb[0].mxu0
  %v4297 = vadd.f32 %v4256, %v4296
  %v4298 = vpop.f32.mrb[0].mxu0
  %v4299 = vpop.f32.mrb[0].mxu0
  %4300 = vdwg.mxu0
  %v4493 = vunpack.c.l.b16 %v2705
  %v4494 = vunpack.c.h.b16 %v2705
  %v4495 = vunpack.c.l.b16 %v2706
  %v4496 = vunpack.c.h.b16 %v2706
  %v4497 = vunpack.c.l.b16 %v2707
  %v4498 = vunpack.c.h.b16 %v2707
  %v4499 = vunpack.c.l.b16 %v2708
  %v4500 = vunpack.c.h.b16 %v2708
  %v4501 = vunpack.c.l.b16 %v2709
  %v4502 = vunpack.c.h.b16 %v2709
  %v4503 = vunpack.c.l.b16 %v2710
  %v4504 = vunpack.c.h.b16 %v2710
  %v4505 = vunpack.c.l.b16 %v2711
  %v4506 = vunpack.c.h.b16 %v2711
  %v4507 = vunpack.c.l.b16 %v2712
  %v4508 = vunpack.c.h.b16 %v2712
  %v4509 = vunpack.c.l.b16 %v2713
  %v4510 = vunpack.c.h.b16 %v2713
  %v4511 = vunpack.c.l.b16 %v2714
  %v4512 = vunpack.c.h.b16 %v2714
  %v4513 = vunpack.c.l.b16 %v2715
  %v4514 = vunpack.c.h.b16 %v2715
  %v4515 = vunpack.c.l.b16 %v2716
  %v4516 = vunpack.c.h.b16 %v2716
  %v4517 = vunpack.c.l.b16 %v2717
  %v4518 = vunpack.c.h.b16 %v2717
  %v4519 = vunpack.c.l.b16 %v2718
  %v4520 = vunpack.c.h.b16 %v2718
  %v4521 = vunpack.c.l.b16 %v2719
  %v4522 = vunpack.c.h.b16 %v2719
  %v4523 = vunpack.c.l.b16 %v2720
  %v4524 = vunpack.c.h.b16 %v2720
  %v4525 = vunpack.c.l.b16 %v2721
  %v4526 = vunpack.c.h.b16 %v2721
  %v4527 = vunpack.c.l.b16 %v2722
  %v4528 = vunpack.c.h.b16 %v2722
  %v4529 = vunpack.c.l.b16 %v2723
  %v4530 = vunpack.c.h.b16 %v2723
  %v4531 = vunpack.c.l.b16 %v2724
  %v4532 = vunpack.c.h.b16 %v2724
  %v4533 = vunpack.c.l.b16 %v2725
  %v4534 = vunpack.c.h.b16 %v2725
  %v4535 = vunpack.c.l.b16 %v2726
  %v4536 = vunpack.c.h.b16 %v2726
  %v4537 = vunpack.c.l.b16 %v2727
  %v4538 = vunpack.c.h.b16 %v2727
  %v4539 = vunpack.c.l.b16 %v2728
  %v4540 = vunpack.c.h.b16 %v2728
  %v4541 = vunpack.c.l.b16 %v2729
  %v4542 = vunpack.c.h.b16 %v2729
  %v4543 = vunpack.c.l.b16 %v2730
  %v4544 = vunpack.c.h.b16 %v2730
  %v4545 = vunpack.c.l.b16 %v2731
  %v4546 = vunpack.c.h.b16 %v2731
  %v4547 = vunpack.c.l.b16 %v2732
  %v4548 = vunpack.c.h.b16 %v2732
  %v4549 = vunpack.c.l.b16 %v2733
  %v4550 = vunpack.c.h.b16 %v2733
  %v4551 = vunpack.c.l.b16 %v2734
  %v4552 = vunpack.c.h.b16 %v2734
  %v4553 = vunpack.c.l.b16 %v2735
  %v4554 = vunpack.c.h.b16 %v2735
  %v4555 = vunpack.c.l.b16 %v2736
  %v4556 = vunpack.c.h.b16 %v2736
  %v4557 = vunpack.c.l.b16 %v2737
  %v4558 = vunpack.c.h.b16 %v2737
  %v4559 = vunpack.c.l.b16 %v2738
  %v4560 = vunpack.c.h.b16 %v2738
  %v4561 = vunpack.c.l.b16 %v2739
  %v4562 = vunpack.c.h.b16 %v2739
  %v4563 = vunpack.c.l.b16 %v2740
  %v4564 = vunpack.c.h.b16 %v2740
  %v4565 = vunpack.c.l.b16 %v2741
  %v4566 = vunpack.c.h.b16 %v2741
  %v4567 = vunpack.c.l.b16 %v2742
  %v4568 = vunpack.c.h.b16 %v2742
  %v4569 = vunpack.c.l.b16 %v2743
  %v4570 = vunpack.c.h.b16 %v2743
  %v4571 = vunpack.c.l.b16 %v2744
  %v4572 = vunpack.c.h.b16 %v2744
  %v4573 = vunpack.c.l.b16 %v2745
  %v4574 = vunpack.c.h.b16 %v2745
  %v4575 = vunpack.c.l.b16 %v2746
  %v4576 = vunpack.c.h.b16 %v2746
  %v4577 = vunpack.c.l.b16 %v2747
  %v4578 = vunpack.c.h.b16 %v2747
  %v4579 = vunpack.c.l.b16 %v2748
  %v4580 = vunpack.c.h.b16 %v2748
  %v4581 = vunpack.c.l.b16 %v2749
  %v4582 = vunpack.c.h.b16 %v2749
  %v4583 = vunpack.c.l.b16 %v2750
  %v4584 = vunpack.c.h.b16 %v2750
  %v4585 = vunpack.c.l.b16 %v2751
  %v4586 = vunpack.c.h.b16 %v2751
  %v4587 = vunpack.c.l.b16 %v2752
  %v4588 = vunpack.c.h.b16 %v2752
  %v4589 = vunpack.c.l.b16 %v2753
  %v4590 = vunpack.c.h.b16 %v2753
  %v4591 = vunpack.c.l.b16 %v2754
  %v4592 = vunpack.c.h.b16 %v2754
  %v4593 = vunpack.c.l.b16 %v2755
  %v4594 = vunpack.c.h.b16 %v2755
  %v4595 = vunpack.c.l.b16 %v2756
  %v4596 = vunpack.c.h.b16 %v2756
  %v4597 = vunpack.c.l.b16 %v2757
  %v4598 = vunpack.c.h.b16 %v2757
  %v4599 = vunpack.c.l.b16 %v2758
  %v4600 = vunpack.c.h.b16 %v2758
  %v4601 = vunpack.c.l.b16 %v2759
  %v4602 = vunpack.c.h.b16 %v2759
  %v4603 = vunpack.c.l.b16 %v2760
  %v4604 = vunpack.c.h.b16 %v2760
  %v4605 = vunpack.c.l.b16 %v2761
  %v4606 = vunpack.c.h.b16 %v2761
  %v4607 = vunpack.c.l.b16 %v2762
  %v4608 = vunpack.c.h.b16 %v2762
  %v4609 = vunpack.c.l.b16 %v2763
  %v4610 = vunpack.c.h.b16 %v2763
  %v4611 = vunpack.c.l.b16 %v2764
  %v4612 = vunpack.c.h.b16 %v2764
  %v4613 = vunpack.c.l.b16 %v2765
  %v4614 = vunpack.c.h.b16 %v2765
  %v4615 = vunpack.c.l.b16 %v2766
  %v4616 = vunpack.c.h.b16 %v2766
  %v4617 = vunpack.c.l.b16 %v2767
  %v4618 = vunpack.c.h.b16 %v2767
  %v4619 = vunpack.c.l.b16 %v2768
  %v4620 = vunpack.c.h.b16 %v2768
  %v4621 = vunpack.c.l.b16 %v2769
  %v4622 = vunpack.c.h.b16 %v2769
  %v4623 = vunpack.c.l.b16 %v2770
  %v4624 = vunpack.c.h.b16 %v2770
  %v4625 = vunpack.c.l.b16 %v2771
  %v4626 = vunpack.c.h.b16 %v2771
  %v4627 = vunpack.c.l.b16 %v2772
  %v4628 = vunpack.c.h.b16 %v2772
  %v4629 = vunpack.c.l.b16 %v2773
  %v4630 = vunpack.c.h.b16 %v2773
  %v4631 = vunpack.c.l.b16 %v2774
  %v4632 = vunpack.c.h.b16 %v2774
  %v4633 = vunpack.c.l.b16 %v2775
  %v4634 = vunpack.c.h.b16 %v2775
  %v4635 = vunpack.c.l.b16 %v2776
  %v4636 = vunpack.c.h.b16 %v2776
  %v4637 = vunpack.c.l.b16 %v2777
  %v4638 = vunpack.c.h.b16 %v2777
  %v4639 = vunpack.c.l.b16 %v2778
  %v4640 = vunpack.c.h.b16 %v2778
  %v4641 = vunpack.c.l.b16 %v2779
  %v4642 = vunpack.c.h.b16 %v2779
  %v4643 = vunpack.c.l.b16 %v2780
  %v4644 = vunpack.c.h.b16 %v2780
  %v4645 = vunpack.c.l.b16 %v2781
  %v4646 = vunpack.c.h.b16 %v2781
  %v4647 = vunpack.c.l.b16 %v2782
  %v4648 = vunpack.c.h.b16 %v2782
  %v4649 = vunpack.c.l.b16 %v2783
  %v4650 = vunpack.c.h.b16 %v2783
  %v4651 = vunpack.c.l.b16 %v2784
  %v4652 = vunpack.c.h.b16 %v2784
  %v4653 = vunpack.c.l.b16 %v2785
  %v4654 = vunpack.c.h.b16 %v2785
  %v4655 = vunpack.c.l.b16 %v2786
  %v4656 = vunpack.c.h.b16 %v2786
  %v4657 = vunpack.c.l.b16 %v2787
  %v4658 = vunpack.c.h.b16 %v2787
  %v4659 = vunpack.c.l.b16 %v2788
  %v4660 = vunpack.c.h.b16 %v2788
  %v4661 = vunpack.c.l.b16 %v2789
  %v4662 = vunpack.c.h.b16 %v2789
  %v4663 = vunpack.c.l.b16 %v2790
  %v4664 = vunpack.c.h.b16 %v2790
  %v4665 = vunpack.c.l.b16 %v2791
  %v4666 = vunpack.c.h.b16 %v2791
  %v4667 = vunpack.c.l.b16 %v2792
  %v4668 = vunpack.c.h.b16 %v2792
  %v4669 = vunpack.c.l.b16 %v2793
  %v4670 = vunpack.c.h.b16 %v2793
  %v4671 = vunpack.c.l.b16 %v2794
  %v4672 = vunpack.c.h.b16 %v2794
  %v4673 = vunpack.c.l.b16 %v2795
  %v4674 = vunpack.c.h.b16 %v2795
  %v4675 = vunpack.c.l.b16 %v2796
  %v4676 = vunpack.c.h.b16 %v2796
  %v4677 = vunpack.c.l.b16 %v2797
  %v4678 = vunpack.c.h.b16 %v2797
  %v4679 = vunpack.c.l.b16 %v2798
  %v4680 = vunpack.c.h.b16 %v2798
  %v4681 = vunpack.c.l.b16 %v2799
  %v4682 = vunpack.c.h.b16 %v2799
  %v4683 = vunpack.c.l.b16 %v2800
  %v4684 = vunpack.c.h.b16 %v2800
  %v4685 = vunpack.c.l.b16 %v2801
  %v4686 = vunpack.c.h.b16 %v2801
  %v4687 = vunpack.c.l.b16 %v2802
  %v4688 = vunpack.c.h.b16 %v2802
  %v4689 = vunpack.c.l.b16 %v2803
  %v4690 = vunpack.c.h.b16 %v2803
  %v4691 = vunpack.c.l.b16 %v2804
  %v4692 = vunpack.c.h.b16 %v2804
  %v4693 = vunpack.c.l.b16 %v2805
  %v4694 = vunpack.c.h.b16 %v2805
  %v4695 = vunpack.c.l.b16 %v2806
  %v4696 = vunpack.c.h.b16 %v2806
  %v4697 = vunpack.c.l.b16 %v2807
  %v4698 = vunpack.c.h.b16 %v2807
  %v4699 = vunpack.c.l.b16 %v2808
  %v4700 = vunpack.c.h.b16 %v2808
  %v4701 = vunpack.c.l.b16 %v2809
  %v4702 = vunpack.c.h.b16 %v2809
  %v4703 = vunpack.c.l.b16 %v2810
  %v4704 = vunpack.c.h.b16 %v2810
  %v4705 = vunpack.c.l.b16 %v2811
  %v4706 = vunpack.c.h.b16 %v2811
  %v4707 = vunpack.c.l.b16 %v2812
  %v4708 = vunpack.c.h.b16 %v2812
  %v4709 = vunpack.c.l.b16 %v2813
  %v4710 = vunpack.c.h.b16 %v2813
  %v4711 = vunpack.c.l.b16 %v2814
  %v4712 = vunpack.c.h.b16 %v2814
  %v4713 = vunpack.c.l.b16 %v2815
  %v4714 = vunpack.c.h.b16 %v2815
  %v4715 = vunpack.c.l.b16 %v2816
  %v4716 = vunpack.c.h.b16 %v2816
  %v4717 = vunpack.c.l.b16 %v2817
  %v4718 = vunpack.c.h.b16 %v2817
  %v4719 = vunpack.c.l.b16 %v2818
  %v4720 = vunpack.c.h.b16 %v2818
  %v4721 = vunpack.c.l.b16 %v2819
  %v4722 = vunpack.c.h.b16 %v2819
  %v4723 = vunpack.c.l.b16 %v2820
  %v4724 = vunpack.c.h.b16 %v2820
  %v4725 = vunpack.c.l.b16 %v2821
  %v4726 = vunpack.c.h.b16 %v2821
  %v4727 = vunpack.c.l.b16 %v2822
  %v4728 = vunpack.c.h.b16 %v2822
  %v4729 = vunpack.c.l.b16 %v2823
  %v4730 = vunpack.c.h.b16 %v2823
  %v4731 = vunpack.c.l.b16 %v2824
  %v4732 = vunpack.c.h.b16 %v2824
  %v4733 = vunpack.c.l.b16 %v2825
  %v4734 = vunpack.c.h.b16 %v2825
  %v4735 = vunpack.c.l.b16 %v2826
  %v4736 = vunpack.c.h.b16 %v2826
  %v4737 = vunpack.c.l.b16 %v2827
  %v4738 = vunpack.c.h.b16 %v2827
  %v4739 = vunpack.c.l.b16 %v2828
  %v4740 = vunpack.c.h.b16 %v2828
  %v4741 = vunpack.c.l.b16 %v2829
  %v4742 = vunpack.c.h.b16 %v2829
  %v4743 = vunpack.c.l.b16 %v2830
  %v4744 = vunpack.c.h.b16 %v2830
  %v4745 = vunpack.c.l.b16 %v2831
  %v4746 = vunpack.c.h.b16 %v2831
  %v4747 = vunpack.c.l.b16 %v2832
  %v4748 = vunpack.c.h.b16 %v2832
  %v4749 = vunpack.c.l.b16 %v2833
  %v4750 = vunpack.c.h.b16 %v2833
  %v4751 = vunpack.c.l.b16 %v2834
  %v4752 = vunpack.c.h.b16 %v2834
  %v4753 = vunpack.c.l.b16 %v2835
  %v4754 = vunpack.c.h.b16 %v2835
  %v4755 = vunpack.c.l.b16 %v2836
  %v4756 = vunpack.c.h.b16 %v2836
  %v4757 = vunpack.c.l.b16 %v2837
  %v4758 = vunpack.c.h.b16 %v2837
  %v4759 = vunpack.c.l.b16 %v2838
  %v4760 = vunpack.c.h.b16 %v2838
  %v4761 = vunpack.c.l.b16 %v2839
  %v4762 = vunpack.c.h.b16 %v2839
  %v4763 = vunpack.c.l.b16 %v2840
  %v4764 = vunpack.c.h.b16 %v2840
  %v4765 = vunpack.c.l.b16 %v2841
  %v4766 = vunpack.c.h.b16 %v2841
  %v4767 = vunpack.c.l.b16 %v2842
  %v4768 = vunpack.c.h.b16 %v2842
  %v4769 = vunpack.c.l.b16 %v2843
  %v4770 = vunpack.c.h.b16 %v2843
  %v4771 = vunpack.c.l.b16 %v2844
  %v4772 = vunpack.c.h.b16 %v2844
  %v4773 = vunpack.c.l.b16 %v2845
  %v4774 = vunpack.c.h.b16 %v2845
  %v4775 = vunpack.c.l.b16 %v2846
  %v4776 = vunpack.c.h.b16 %v2846
  %v4777 = vunpack.c.l.b16 %v2847
  %v4778 = vunpack.c.h.b16 %v2847
  %v4779 = vunpack.c.l.b16 %v2848
  %v4780 = vunpack.c.h.b16 %v2848
  %v4781 = vunpack.c.l.b16 %v2849
  %v4782 = vunpack.c.h.b16 %v2849
  %v4783 = vunpack.c.l.b16 %v2850
  %v4784 = vunpack.c.h.b16 %v2850
  %v4785 = vunpack.c.l.b16 %v2851
  %v4786 = vunpack.c.h.b16 %v2851
  %v4787 = vunpack.c.l.b16 %v2852
  %v4788 = vunpack.c.h.b16 %v2852
  %v4789 = vunpack.c.l.b16 %v2853
  %v4790 = vunpack.c.h.b16 %v2853
  %v4791 = vunpack.c.l.b16 %v2854
  %v4792 = vunpack.c.h.b16 %v2854
  %v4793 = vunpack.c.l.b16 %v2855
  %v4794 = vunpack.c.h.b16 %v2855
  %v4795 = vunpack.c.l.b16 %v2856
  %v4796 = vunpack.c.h.b16 %v2856
  %v4797 = vunpack.c.l.b16 %v2857
  %v4798 = vunpack.c.h.b16 %v2857
  %v4799 = vunpack.c.l.b16 %v2858
  %v4800 = vunpack.c.h.b16 %v2858
  %v4801 = vunpack.c.l.b16 %v2859
  %v4802 = vunpack.c.h.b16 %v2859
  %v4803 = vunpack.c.l.b16 %v2860
  %v4804 = vunpack.c.h.b16 %v2860
  %v4805 = vunpack.c.l.b16 %v2861
  %v4806 = vunpack.c.h.b16 %v2861
  %v4807 = vunpack.c.l.b16 %v2862
  %v4808 = vunpack.c.h.b16 %v2862
  %v4809 = vunpack.c.l.b16 %v2863
  %v4810 = vunpack.c.h.b16 %v2863
  %v4811 = vunpack.c.l.b16 %v2864
  %v4812 = vunpack.c.h.b16 %v2864
  %v4813 = vunpack.c.l.b16 %v2865
  %v4814 = vunpack.c.h.b16 %v2865
  %v4815 = vunpack.c.l.b16 %v2866
  %v4816 = vunpack.c.h.b16 %v2866
  %v4817 = vunpack.c.l.b16 %v2867
  %v4818 = vunpack.c.h.b16 %v2867
  %v4819 = vunpack.c.l.b16 %v2868
  %v4820 = vunpack.c.h.b16 %v2868
  %v4821 = vunpack.c.l.b16 %v2869
  %v4822 = vunpack.c.h.b16 %v2869
  %v4823 = vunpack.c.l.b16 %v2870
  %v4824 = vunpack.c.h.b16 %v2870
  %v4825 = vunpack.c.l.b16 %v2871
  %v4826 = vunpack.c.h.b16 %v2871
  %v4827 = vunpack.c.l.b16 %v2872
  %v4828 = vunpack.c.h.b16 %v2872
  %v4829 = vunpack.c.l.b16 %v2873
  %v4830 = vunpack.c.h.b16 %v2873
  %v4831 = vunpack.c.l.b16 %v2874
  %v4832 = vunpack.c.h.b16 %v2874
  %v4833 = vunpack.c.l.b16 %v2875
  %v4834 = vunpack.c.h.b16 %v2875
  %v4835 = vunpack.c.l.b16 %v2876
  %v4836 = vunpack.c.h.b16 %v2876
  %v4837 = vunpack.c.l.b16 %v2877
  %v4838 = vunpack.c.h.b16 %v2877
  %v4839 = vunpack.c.l.b16 %v2878
  %v4840 = vunpack.c.h.b16 %v2878
  %v4841 = vunpack.c.l.b16 %v2879
  %v4842 = vunpack.c.h.b16 %v2879
  %v4843 = vunpack.c.l.b16 %v2880
  %v4844 = vunpack.c.h.b16 %v2880
  %v4845 = vunpack.c.l.b16 %v2881
  %v4846 = vunpack.c.h.b16 %v2881
  %v4847 = vunpack.c.l.b16 %v2882
  %v4848 = vunpack.c.h.b16 %v2882
  %v4849 = vunpack.c.l.b16 %v2883
  %v4850 = vunpack.c.h.b16 %v2883
  %v4851 = vunpack.c.l.b16 %v2884
  %v4852 = vunpack.c.h.b16 %v2884
  %v4853 = vunpack.c.l.b16 %v2885
  %v4854 = vunpack.c.h.b16 %v2885
  %v4855 = vunpack.c.l.b16 %v2886
  %v4856 = vunpack.c.h.b16 %v2886
  %v4857 = vunpack.c.l.b16 %v2887
  %v4858 = vunpack.c.h.b16 %v2887
  %v4859 = vunpack.c.l.b16 %v2888
  %v4860 = vunpack.c.h.b16 %v2888
  %v4861 = vunpack.c.l.b16 %v2889
  %v4862 = vunpack.c.h.b16 %v2889
  %v4863 = vunpack.c.l.b16 %v2890
  %v4864 = vunpack.c.h.b16 %v2890
  %v4865 = vunpack.c.l.b16 %v2891
  %v4866 = vunpack.c.h.b16 %v2891
  %v4867 = vunpack.c.l.b16 %v2892
  %v4868 = vunpack.c.h.b16 %v2892
  %v4869 = vunpack.c.l.b16 %v2893
  %v4870 = vunpack.c.h.b16 %v2893
  %v4871 = vunpack.c.l.b16 %v2894
  %v4872 = vunpack.c.h.b16 %v2894
  %v4873 = vunpack.c.l.b16 %v2895
  %v4874 = vunpack.c.h.b16 %v2895
  %v4875 = vunpack.c.l.b16 %v2896
  %v4876 = vunpack.c.h.b16 %v2896
  %v4877 = vpack.c.b16 %v4497, %v4493
  %v4878 = vpack.c.b16 %v4498, %v4494
  %v4879 = vpack.c.b16 %v4499, %v4495
  %v4880 = vpack.c.b16 %v4500, %v4496
  %v4881 = vpack.c.b16 %v4505, %v4501
  %v4882 = vpack.c.b16 %v4506, %v4502
  %v4883 = vpack.c.b16 %v4507, %v4503
  %v4884 = vpack.c.b16 %v4508, %v4504
  %v4885 = vpack.c.b16 %v4513, %v4509
  %v4886 = vpack.c.b16 %v4514, %v4510
  %v4887 = vpack.c.b16 %v4515, %v4511
  %v4888 = vpack.c.b16 %v4516, %v4512
  %v4889 = vpack.c.b16 %v4521, %v4517
  %v4890 = vpack.c.b16 %v4522, %v4518
  %v4891 = vpack.c.b16 %v4523, %v4519
  %v4892 = vpack.c.b16 %v4524, %v4520
  %v4893 = vpack.c.b16 %v4529, %v4525
  %v4894 = vpack.c.b16 %v4530, %v4526
  %v4895 = vpack.c.b16 %v4531, %v4527
  %v4896 = vpack.c.b16 %v4532, %v4528
  %v4897 = vpack.c.b16 %v4537, %v4533
  %v4898 = vpack.c.b16 %v4538, %v4534
  %v4899 = vpack.c.b16 %v4539, %v4535
  %v4900 = vpack.c.b16 %v4540, %v4536
  %v4901 = vpack.c.b16 %v4545, %v4541
  %v4902 = vpack.c.b16 %v4546, %v4542
  %v4903 = vpack.c.b16 %v4547, %v4543
  %v4904 = vpack.c.b16 %v4548, %v4544
  %v4905 = vpack.c.b16 %v4553, %v4549
  %v4906 = vpack.c.b16 %v4554, %v4550
  %v4907 = vpack.c.b16 %v4555, %v4551
  %v4908 = vpack.c.b16 %v4556, %v4552
  %v4909 = vpack.c.b16 %v4561, %v4557
  %v4910 = vpack.c.b16 %v4562, %v4558
  %v4911 = vpack.c.b16 %v4563, %v4559
  %v4912 = vpack.c.b16 %v4564, %v4560
  %v4913 = vpack.c.b16 %v4569, %v4565
  %v4914 = vpack.c.b16 %v4570, %v4566
  %v4915 = vpack.c.b16 %v4571, %v4567
  %v4916 = vpack.c.b16 %v4572, %v4568
  %v4917 = vpack.c.b16 %v4577, %v4573
  %v4918 = vpack.c.b16 %v4578, %v4574
  %v4919 = vpack.c.b16 %v4579, %v4575
  %v4920 = vpack.c.b16 %v4580, %v4576
  %v4921 = vpack.c.b16 %v4585, %v4581
  %v4922 = vpack.c.b16 %v4586, %v4582
  %v4923 = vpack.c.b16 %v4587, %v4583
  %v4924 = vpack.c.b16 %v4588, %v4584
  %v4925 = vpack.c.b16 %v4593, %v4589
  %v4926 = vpack.c.b16 %v4594, %v4590
  %v4927 = vpack.c.b16 %v4595, %v4591
  %v4928 = vpack.c.b16 %v4596, %v4592
  %v4929 = vpack.c.b16 %v4601, %v4597
  %v4930 = vpack.c.b16 %v4602, %v4598
  %v4931 = vpack.c.b16 %v4603, %v4599
  %v4932 = vpack.c.b16 %v4604, %v4600
  %v4933 = vpack.c.b16 %v4609, %v4605
  %v4934 = vpack.c.b16 %v4610, %v4606
  %v4935 = vpack.c.b16 %v4611, %v4607
  %v4936 = vpack.c.b16 %v4612, %v4608
  %v4937 = vpack.c.b16 %v4617, %v4613
  %v4938 = vpack.c.b16 %v4618, %v4614
  %v4939 = vpack.c.b16 %v4619, %v4615
  %v4940 = vpack.c.b16 %v4620, %v4616
  %v4941 = vpack.c.b16 %v4625, %v4621
  %v4942 = vpack.c.b16 %v4626, %v4622
  %v4943 = vpack.c.b16 %v4627, %v4623
  %v4944 = vpack.c.b16 %v4628, %v4624
  %v4945 = vpack.c.b16 %v4633, %v4629
  %v4946 = vpack.c.b16 %v4634, %v4630
  %v4947 = vpack.c.b16 %v4635, %v4631
  %v4948 = vpack.c.b16 %v4636, %v4632
  %v4949 = vpack.c.b16 %v4641, %v4637
  %v4950 = vpack.c.b16 %v4642, %v4638
  %v4951 = vpack.c.b16 %v4643, %v4639
  %v4952 = vpack.c.b16 %v4644, %v4640
  %v4953 = vpack.c.b16 %v4649, %v4645
  %v4954 = vpack.c.b16 %v4650, %v4646
  %v4955 = vpack.c.b16 %v4651, %v4647
  %v4956 = vpack.c.b16 %v4652, %v4648
  %v4957 = vpack.c.b16 %v4657, %v4653
  %v4958 = vpack.c.b16 %v4658, %v4654
  %v4959 = vpack.c.b16 %v4659, %v4655
  %v4960 = vpack.c.b16 %v4660, %v4656
  %v4961 = vpack.c.b16 %v4665, %v4661
  %v4962 = vpack.c.b16 %v4666, %v4662
  %v4963 = vpack.c.b16 %v4667, %v4663
  %v4964 = vpack.c.b16 %v4668, %v4664
  %v4965 = vpack.c.b16 %v4673, %v4669
  %v4966 = vpack.c.b16 %v4674, %v4670
  %v4967 = vpack.c.b16 %v4675, %v4671
  %v4968 = vpack.c.b16 %v4676, %v4672
  %v4969 = vpack.c.b16 %v4681, %v4677
  %v4970 = vpack.c.b16 %v4682, %v4678
  %v4971 = vpack.c.b16 %v4683, %v4679
  %v4972 = vpack.c.b16 %v4684, %v4680
  %v4973 = vpack.c.b16 %v4689, %v4685
  %v4974 = vpack.c.b16 %v4690, %v4686
  %v4975 = vpack.c.b16 %v4691, %v4687
  %v4976 = vpack.c.b16 %v4692, %v4688
  %v4977 = vpack.c.b16 %v4697, %v4693
  %v4978 = vpack.c.b16 %v4698, %v4694
  %v4979 = vpack.c.b16 %v4699, %v4695
  %v4980 = vpack.c.b16 %v4700, %v4696
  %v4981 = vpack.c.b16 %v4705, %v4701
  %v4982 = vpack.c.b16 %v4706, %v4702
  %v4983 = vpack.c.b16 %v4707, %v4703
  %v4984 = vpack.c.b16 %v4708, %v4704
  %v4985 = vpack.c.b16 %v4713, %v4709
  %v4986 = vpack.c.b16 %v4714, %v4710
  %v4987 = vpack.c.b16 %v4715, %v4711
  %v4988 = vpack.c.b16 %v4716, %v4712
  %v4989 = vpack.c.b16 %v4721, %v4717
  %v4990 = vpack.c.b16 %v4722, %v4718
  %v4991 = vpack.c.b16 %v4723, %v4719
  %v4992 = vpack.c.b16 %v4724, %v4720
  %v4993 = vpack.c.b16 %v4729, %v4725
  %v4994 = vpack.c.b16 %v4730, %v4726
  %v4995 = vpack.c.b16 %v4731, %v4727
  %v4996 = vpack.c.b16 %v4732, %v4728
  %v4997 = vpack.c.b16 %v4737, %v4733
  %v4998 = vpack.c.b16 %v4738, %v4734
  %v4999 = vpack.c.b16 %v4739, %v4735
  %v5000 = vpack.c.b16 %v4740, %v4736
  %v5001 = vpack.c.b16 %v4745, %v4741
  %v5002 = vpack.c.b16 %v4746, %v4742
  %v5003 = vpack.c.b16 %v4747, %v4743
  %v5004 = vpack.c.b16 %v4748, %v4744
  %v5005 = vpack.c.b16 %v4753, %v4749
  %v5006 = vpack.c.b16 %v4754, %v4750
  %v5007 = vpack.c.b16 %v4755, %v4751
  %v5008 = vpack.c.b16 %v4756, %v4752
  %v5009 = vpack.c.b16 %v4761, %v4757
  %v5010 = vpack.c.b16 %v4762, %v4758
  %v5011 = vpack.c.b16 %v4763, %v4759
  %v5012 = vpack.c.b16 %v4764, %v4760
  %v5013 = vpack.c.b16 %v4769, %v4765
  %v5014 = vpack.c.b16 %v4770, %v4766
  %v5015 = vpack.c.b16 %v4771, %v4767
  %v5016 = vpack.c.b16 %v4772, %v4768
  %v5017 = vpack.c.b16 %v4777, %v4773
  %v5018 = vpack.c.b16 %v4778, %v4774
  %v5019 = vpack.c.b16 %v4779, %v4775
  %v5020 = vpack.c.b16 %v4780, %v4776
  %v5021 = vpack.c.b16 %v4785, %v4781
  %v5022 = vpack.c.b16 %v4786, %v4782
  %v5023 = vpack.c.b16 %v4787, %v4783
  %v5024 = vpack.c.b16 %v4788, %v4784
  %v5025 = vpack.c.b16 %v4793, %v4789
  %v5026 = vpack.c.b16 %v4794, %v4790
  %v5027 = vpack.c.b16 %v4795, %v4791
  %v5028 = vpack.c.b16 %v4796, %v4792
  %v5029 = vpack.c.b16 %v4801, %v4797
  %v5030 = vpack.c.b16 %v4802, %v4798
  %v5031 = vpack.c.b16 %v4803, %v4799
  %v5032 = vpack.c.b16 %v4804, %v4800
  %v5033 = vpack.c.b16 %v4809, %v4805
  %v5034 = vpack.c.b16 %v4810, %v4806
  %v5035 = vpack.c.b16 %v4811, %v4807
  %v5036 = vpack.c.b16 %v4812, %v4808
  %v5037 = vpack.c.b16 %v4817, %v4813
  %v5038 = vpack.c.b16 %v4818, %v4814
  %v5039 = vpack.c.b16 %v4819, %v4815
  %v5040 = vpack.c.b16 %v4820, %v4816
  %v5041 = vpack.c.b16 %v4825, %v4821
  %v5042 = vpack.c.b16 %v4826, %v4822
  %v5043 = vpack.c.b16 %v4827, %v4823
  %v5044 = vpack.c.b16 %v4828, %v4824
  %v5045 = vpack.c.b16 %v4833, %v4829
  %v5046 = vpack.c.b16 %v4834, %v4830
  %v5047 = vpack.c.b16 %v4835, %v4831
  %v5048 = vpack.c.b16 %v4836, %v4832
  %v5049 = vpack.c.b16 %v4841, %v4837
  %v5050 = vpack.c.b16 %v4842, %v4838
  %v5051 = vpack.c.b16 %v4843, %v4839
  %v5052 = vpack.c.b16 %v4844, %v4840
  %v5053 = vpack.c.b16 %v4849, %v4845
  %v5054 = vpack.c.b16 %v4850, %v4846
  %v5055 = vpack.c.b16 %v4851, %v4847
  %v5056 = vpack.c.b16 %v4852, %v4848
  %v5057 = vpack.c.b16 %v4857, %v4853
  %v5058 = vpack.c.b16 %v4858, %v4854
  %v5059 = vpack.c.b16 %v4859, %v4855
  %v5060 = vpack.c.b16 %v4860, %v4856
  %v5061 = vpack.c.b16 %v4865, %v4861
  %v5062 = vpack.c.b16 %v4866, %v4862
  %v5063 = vpack.c.b16 %v4867, %v4863
  %v5064 = vpack.c.b16 %v4868, %v4864
  %v5065 = vpack.c.b16 %v4873, %v4869
  %v5066 = vpack.c.b16 %v4874, %v4870
  %v5067 = vpack.c.b16 %v4875, %v4871
  %v5068 = vpack.c.b16 %v4876, %v4872
  %5261 = vmatprep.subr.bf16.mxu0 %v4878
  %5262 = vmatpush1.bf16.msra.mxu0 %v4877
  %5263 = vmatprep.subr.bf16.mxu0 %v4882
  %5264 = vmatpush1.bf16.msra.mxu0 %v4881
  %5265 = vmatprep.subr.bf16.mxu0 %v4886
  %5266 = vmatpush1.bf16.msra.mxu0 %v4885
  %5267 = vmatprep.subr.bf16.mxu0 %v4890
  %5268 = vmatpush1.bf16.msra.mxu0 %v4889
  %5269 = vmatprep.subr.bf16.mxu0 %v4894
  %5270 = vmatpush1.bf16.msra.mxu0 %v4893
  %5271 = vmatprep.subr.bf16.mxu0 %v4898
  %5272 = vmatpush1.bf16.msra.mxu0 %v4897
  %5273 = vmatprep.subr.bf16.mxu0 %v4902
  %5274 = vmatpush1.bf16.msra.mxu0 %v4901
  %5275 = vmatprep.subr.bf16.mxu0 %v4906
  %5276 = vmatpush1.bf16.msra.mxu0 %v4905
  %5277 = vmatprep.subr.bf16.mxu0 %v4910
  %5278 = vmatpush1.bf16.msra.mxu0 %v4909
  %5279 = vmatprep.subr.bf16.mxu0 %v4914
  %5280 = vmatpush1.bf16.msra.mxu0 %v4913
  %5281 = vmatprep.subr.bf16.mxu0 %v4918
  %5282 = vmatpush1.bf16.msra.mxu0 %v4917
  %5283 = vmatprep.subr.bf16.mxu0 %v4922
  %5284 = vmatpush1.bf16.msra.mxu0 %v4921
  %5285 = vmatprep.subr.bf16.mxu0 %v4926
  %5286 = vmatpush1.bf16.msra.mxu0 %v4925
  %5287 = vmatprep.subr.bf16.mxu0 %v4930
  %5288 = vmatpush1.bf16.msra.mxu0 %v4929
  %5289 = vmatprep.subr.bf16.mxu0 %v4934
  %5290 = vmatpush1.bf16.msra.mxu0 %v4933
  %5291 = vmatprep.subr.bf16.mxu0 %v4938
  %5292 = vmatpush1.bf16.msra.mxu0 %v4937
  %5293 = vmatprep.mubr.bf16.mxu0 %v2205
  %5294 = vmatmul.mubr.bf16.gmra.mrb[0].mxu0 %v2204
  %v5295 = vpop.f32.mrb[0].mxu0
  %v5296 = vadd.f32 %v4172, %v5295
  %v5297 = vpop.f32.mrb[0].mxu0
  %v5298 = vadd.f32 %v4174, %v5297
  %v5299 = vpop.f32.mrb[0].mxu0
  %v5300 = vpop.f32.mrb[0].mxu0
  %5301 = vdwg.mxu0
  %5302 = vmatprep.subr.bf16.mxu0 %v4942
  %5303 = vmatpush1.bf16.msra.mxu0 %v4941
  %5304 = vmatprep.subr.bf16.mxu0 %v4946
  %5305 = vmatpush1.bf16.msra.mxu0 %v4945
  %5306 = vmatprep.subr.bf16.mxu0 %v4950
  %5307 = vmatpush1.bf16.msra.mxu0 %v4949
  %5308 = vmatprep.subr.bf16.mxu0 %v4954
  %5309 = vmatpush1.bf16.msra.mxu0 %v4953
  %5310 = vmatprep.subr.bf16.mxu0 %v4958
  %5311 = vmatpush1.bf16.msra.mxu0 %v4957
  %5312 = vmatprep.subr.bf16.mxu0 %v4962
  %5313 = vmatpush1.bf16.msra.mxu0 %v4961
  %5314 = vmatprep.subr.bf16.mxu0 %v4966
  %5315 = vmatpush1.bf16.msra.mxu0 %v4965
  %5316 = vmatprep.subr.bf16.mxu0 %v4970
  %5317 = vmatpush1.bf16.msra.mxu0 %v4969
  %5318 = vmatprep.subr.bf16.mxu0 %v4974
  %5319 = vmatpush1.bf16.msra.mxu0 %v4973
  %5320 = vmatprep.subr.bf16.mxu0 %v4978
  %5321 = vmatpush1.bf16.msra.mxu0 %v4977
  %5322 = vmatprep.subr.bf16.mxu0 %v4982
  %5323 = vmatpush1.bf16.msra.mxu0 %v4981
  %5324 = vmatprep.subr.bf16.mxu0 %v4986
  %5325 = vmatpush1.bf16.msra.mxu0 %v4985
  %5326 = vmatprep.subr.bf16.mxu0 %v4990
  %5327 = vmatpush1.bf16.msra.mxu0 %v4989
  %5328 = vmatprep.subr.bf16.mxu0 %v4994
  %5329 = vmatpush1.bf16.msra.mxu0 %v4993
  %5330 = vmatprep.subr.bf16.mxu0 %v4998
  %5331 = vmatpush1.bf16.msra.mxu0 %v4997
  %5332 = vmatprep.subr.bf16.mxu0 %v5002
  %5333 = vmatpush1.bf16.msra.mxu0 %v5001
  %5334 = vmatprep.mubr.bf16.mxu0 %v2207
  %5335 = vmatmul.mubr.bf16.gmra.mrb[0].mxu0 %v2206
  %v5336 = vpop.f32.mrb[0].mxu0
  %v5337 = vadd.f32 %v5296, %v5336
  %v5338 = vpop.f32.mrb[0].mxu0
  %v5339 = vadd.f32 %v5298, %v5338
  %v5340 = vpop.f32.mrb[0].mxu0
  %v5341 = vpop.f32.mrb[0].mxu0
  %5342 = vdwg.mxu0
  %5343 = vmatprep.subr.bf16.mxu0 %v5006
  %5344 = vmatpush1.bf16.msra.mxu0 %v5005
  %5345 = vmatprep.subr.bf16.mxu0 %v5010
  %5346 = vmatpush1.bf16.msra.mxu0 %v5009
  %5347 = vmatprep.subr.bf16.mxu0 %v5014
  %5348 = vmatpush1.bf16.msra.mxu0 %v5013
  %5349 = vmatprep.subr.bf16.mxu0 %v5018
  %5350 = vmatpush1.bf16.msra.mxu0 %v5017
  %5351 = vmatprep.subr.bf16.mxu0 %v5022
  %5352 = vmatpush1.bf16.msra.mxu0 %v5021
  %5353 = vmatprep.subr.bf16.mxu0 %v5026
  %5354 = vmatpush1.bf16.msra.mxu0 %v5025
  %5355 = vmatprep.subr.bf16.mxu0 %v5030
  %5356 = vmatpush1.bf16.msra.mxu0 %v5029
  %5357 = vmatprep.subr.bf16.mxu0 %v5034
  %5358 = vmatpush1.bf16.msra.mxu0 %v5033
  %5359 = vmatprep.subr.bf16.mxu0 %v5038
  %5360 = vmatpush1.bf16.msra.mxu0 %v5037
  %5361 = vmatprep.subr.bf16.mxu0 %v5042
  %5362 = vmatpush1.bf16.msra.mxu0 %v5041
  %5363 = vmatprep.subr.bf16.mxu0 %v5046
  %5364 = vmatpush1.bf16.msra.mxu0 %v5045
  %5365 = vmatprep.subr.bf16.mxu0 %v5050
  %5366 = vmatpush1.bf16.msra.mxu0 %v5049
  %5367 = vmatprep.subr.bf16.mxu0 %v5054
  %5368 = vmatpush1.bf16.msra.mxu0 %v5053
  %5369 = vmatprep.subr.bf16.mxu0 %v5058
  %5370 = vmatpush1.bf16.msra.mxu0 %v5057
  %5371 = vmatprep.subr.bf16.mxu0 %v5062
  %5372 = vmatpush1.bf16.msra.mxu0 %v5061
  %5373 = vmatprep.subr.bf16.mxu0 %v5066
  %5374 = vmatpush1.bf16.msra.mxu0 %v5065
  %5375 = vmatprep.mubr.bf16.mxu0 %v2209
  %5376 = vmatmul.mubr.bf16.gmra.mrb[0].mxu0 %v2208
  %v5377 = vpop.f32.mrb[0].mxu0
  %v5378 = vadd.f32 %v5337, %v5377
  %v5379 = vpop.f32.mrb[0].mxu0
  %v5380 = vadd.f32 %v5339, %v5379
  %v5381 = vpop.f32.mrb[0].mxu0
  %v5382 = vpop.f32.mrb[0].mxu0
  %5383 = vdwg.mxu0
  %5384 = vmatprep.subr.bf16.mxu0 %v4880
  %5385 = vmatpush1.bf16.msra.mxu0 %v4879
  %5386 = vmatprep.subr.bf16.mxu0 %v4884
  %5387 = vmatpush1.bf16.msra.mxu0 %v4883
  %5388 = vmatprep.subr.bf16.mxu0 %v4888
  %5389 = vmatpush1.bf16.msra.mxu0 %v4887
  %5390 = vmatprep.subr.bf16.mxu0 %v4892
  %5391 = vmatpush1.bf16.msra.mxu0 %v4891
  %5392 = vmatprep.subr.bf16.mxu0 %v4896
  %5393 = vmatpush1.bf16.msra.mxu0 %v4895
  %5394 = vmatprep.subr.bf16.mxu0 %v4900
  %5395 = vmatpush1.bf16.msra.mxu0 %v4899
  %5396 = vmatprep.subr.bf16.mxu0 %v4904
  %5397 = vmatpush1.bf16.msra.mxu0 %v4903
  %5398 = vmatprep.subr.bf16.mxu0 %v4908
  %5399 = vmatpush1.bf16.msra.mxu0 %v4907
  %5400 = vmatprep.subr.bf16.mxu0 %v4912
  %5401 = vmatpush1.bf16.msra.mxu0 %v4911
  %5402 = vmatprep.subr.bf16.mxu0 %v4916
  %5403 = vmatpush1.bf16.msra.mxu0 %v4915
  %5404 = vmatprep.subr.bf16.mxu0 %v4920
  %5405 = vmatpush1.bf16.msra.mxu0 %v4919
  %5406 = vmatprep.subr.bf16.mxu0 %v4924
  %5407 = vmatpush1.bf16.msra.mxu0 %v4923
  %5408 = vmatprep.subr.bf16.mxu0 %v4928
  %5409 = vmatpush1.bf16.msra.mxu0 %v4927
  %5410 = vmatprep.subr.bf16.mxu0 %v4932
  %5411 = vmatpush1.bf16.msra.mxu0 %v4931
  %5412 = vmatprep.subr.bf16.mxu0 %v4936
  %5413 = vmatpush1.bf16.msra.mxu0 %v4935
  %5414 = vmatprep.subr.bf16.mxu0 %v4940
  %5415 = vmatpush1.bf16.msra.mxu0 %v4939
  %5416 = vmatprep.mubr.bf16.mxu0 %v2205
  %5417 = vmatmul.mubr.bf16.gmra.mrb[0].mxu0 %v2204
  %v5418 = vpop.f32.mrb[0].mxu0
  %v5419 = vadd.f32 %v4295, %v5418
  %v5420 = vpop.f32.mrb[0].mxu0
  %v5421 = vadd.f32 %v4297, %v5420
  %v5422 = vpop.f32.mrb[0].mxu0
  %v5423 = vpop.f32.mrb[0].mxu0
  %5424 = vdwg.mxu0
  %5425 = vmatprep.subr.bf16.mxu0 %v4944
  %5426 = vmatpush1.bf16.msra.mxu0 %v4943
  %5427 = vmatprep.subr.bf16.mxu0 %v4948
  %5428 = vmatpush1.bf16.msra.mxu0 %v4947
  %5429 = vmatprep.subr.bf16.mxu0 %v4952
  %5430 = vmatpush1.bf16.msra.mxu0 %v4951
  %5431 = vmatprep.subr.bf16.mxu0 %v4956
  %5432 = vmatpush1.bf16.msra.mxu0 %v4955
  %5433 = vmatprep.subr.bf16.mxu0 %v4960
  %5434 = vmatpush1.bf16.msra.mxu0 %v4959
  %5435 = vmatprep.subr.bf16.mxu0 %v4964
  %5436 = vmatpush1.bf16.msra.mxu0 %v4963
  %5437 = vmatprep.subr.bf16.mxu0 %v4968
  %5438 = vmatpush1.bf16.msra.mxu0 %v4967
  %5439 = vmatprep.subr.bf16.mxu0 %v4972
  %5440 = vmatpush1.bf16.msra.mxu0 %v4971
  %5441 = vmatprep.subr.bf16.mxu0 %v4976
  %5442 = vmatpush1.bf16.msra.mxu0 %v4975
  %5443 = vmatprep.subr.bf16.mxu0 %v4980
  %5444 = vmatpush1.bf16.msra.mxu0 %v4979
  %5445 = vmatprep.subr.bf16.mxu0 %v4984
  %5446 = vmatpush1.bf16.msra.mxu0 %v4983
  %5447 = vmatprep.subr.bf16.mxu0 %v4988
  %5448 = vmatpush1.bf16.msra.mxu0 %v4987
  %5449 = vmatprep.subr.bf16.mxu0 %v4992
  %5450 = vmatpush1.bf16.msra.mxu0 %v4991
  %5451 = vmatprep.subr.bf16.mxu0 %v4996
  %5452 = vmatpush1.bf16.msra.mxu0 %v4995
  %5453 = vmatprep.subr.bf16.mxu0 %v5000
  %5454 = vmatpush1.bf16.msra.mxu0 %v4999
  %5455 = vmatprep.subr.bf16.mxu0 %v5004
  %5456 = vmatpush1.bf16.msra.mxu0 %v5003
  %5457 = vmatprep.mubr.bf16.mxu0 %v2207
  %5458 = vmatmul.mubr.bf16.gmra.mrb[0].mxu0 %v2206
  %v5459 = vpop.f32.mrb[0].mxu0
  %v5460 = vadd.f32 %v5419, %v5459
  %v5461 = vpop.f32.mrb[0].mxu0
  %v5462 = vadd.f32 %v5421, %v5461
  %v5463 = vpop.f32.mrb[0].mxu0
  %v5464 = vpop.f32.mrb[0].mxu0
  %5465 = vdwg.mxu0
  %5466 = vmatprep.subr.bf16.mxu0 %v5008
  %5467 = vmatpush1.bf16.msra.mxu0 %v5007
  %5468 = vmatprep.subr.bf16.mxu0 %v5012
  %5469 = vmatpush1.bf16.msra.mxu0 %v5011
  %5470 = vmatprep.subr.bf16.mxu0 %v5016
  %5471 = vmatpush1.bf16.msra.mxu0 %v5015
  %5472 = vmatprep.subr.bf16.mxu0 %v5020
  %5473 = vmatpush1.bf16.msra.mxu0 %v5019
  %5474 = vmatprep.subr.bf16.mxu0 %v5024
  %5475 = vmatpush1.bf16.msra.mxu0 %v5023
  %5476 = vmatprep.subr.bf16.mxu0 %v5028
  %5477 = vmatpush1.bf16.msra.mxu0 %v5027
  %5478 = vmatprep.subr.bf16.mxu0 %v5032
  %5479 = vmatpush1.bf16.msra.mxu0 %v5031
  %5480 = vmatprep.subr.bf16.mxu0 %v5036
  %5481 = vmatpush1.bf16.msra.mxu0 %v5035
  %5482 = vmatprep.subr.bf16.mxu0 %v5040
  %5483 = vmatpush1.bf16.msra.mxu0 %v5039
  %5484 = vmatprep.subr.bf16.mxu0 %v5044
  %5485 = vmatpush1.bf16.msra.mxu0 %v5043
  %5486 = vmatprep.subr.bf16.mxu0 %v5048
  %5487 = vmatpush1.bf16.msra.mxu0 %v5047
  %5488 = vmatprep.subr.bf16.mxu0 %v5052
  %5489 = vmatpush1.bf16.msra.mxu0 %v5051
  %5490 = vmatprep.subr.bf16.mxu0 %v5056
  %5491 = vmatpush1.bf16.msra.mxu0 %v5055
  %5492 = vmatprep.subr.bf16.mxu0 %v5060
  %5493 = vmatpush1.bf16.msra.mxu0 %v5059
  %5494 = vmatprep.subr.bf16.mxu0 %v5064
  %5495 = vmatpush1.bf16.msra.mxu0 %v5063
  %5496 = vmatprep.subr.bf16.mxu0 %v5068
  %5497 = vmatpush1.bf16.msra.mxu0 %v5067
  %5498 = vmatprep.mubr.bf16.mxu0 %v2209
  %5499 = vmatmul.mubr.bf16.gmra.mrb[0].mxu0 %v2208
  %v5500 = vpop.f32.mrb[0].mxu0
  %v5501 = vadd.f32 %v5460, %v5500
  %v5502 = vpop.f32.mrb[0].mxu0
  %v5503 = vadd.f32 %v5462, %v5502
  %v5504 = vpop.f32.mrb[0].mxu0
  %v5505 = vpop.f32.mrb[0].mxu0
  %5506 = vdwg.mxu0
  %v5507 = vld [vmem:[%s10] sm:$0xf]
  %v5509 = vlaneseq
  %v5510 = vshrl.u32 %v5509, 7
  %v5511 = vsub.s32 0, %v5510
  %v5512 = vrot.slane %v5507, %v5511
  %v5513 = vlaneseq
  %v5514 = vshrl.u32 %v5513, 7
  %v5515 = vsub.s32 1, %v5514
  %v5516 = vrot.slane %v5507, %v5515
  %v5517 = vlaneseq
  %v5518 = vshrl.u32 %v5517, 7
  %v5519 = vsub.s32 2, %v5518
  %v5520 = vrot.slane %v5507, %v5519
  %v5521 = vlaneseq
  %v5522 = vshrl.u32 %v5521, 7
  %v5523 = vsub.s32 3, %v5522
  %v5524 = vrot.slane %v5507, %v5523
  %v5529 = vadd.f32 %v5378, %v5512
  %v5530 = vadd.f32 %v5380, %v5516
  %v5531 = vadd.f32 %v5501, %v5520
  %v5532 = vadd.f32 %v5503, %v5524
  %v5533 = vmax.f32 %v5529, 0.0
  %v5534 = vmax.f32 %v5530, 0.0
  %v5535 = vmax.f32 %v5531, 0.0
  %v5536 = vmax.f32 %v5532, 0.0
  %v5537 = vpack.c.bf16 %v5533, %v5533
  %v5538 = vpack.c.bf16 %v5534, %v5534
  %v5539 = vpack.c.bf16 %v5535, %v5535
  %v5540 = vpack.c.bf16 %v5536, %v5536
  %v5541 = vld [vmem:[%s11] sm:$0xf]
  %v5542 = vld [vmem:[%s11 + $0x4] sm:$0xf]
  %v5543 = vld [vmem:[%s11 + $0x8] sm:$0xf]
  %v5544 = vld [vmem:[%s11 + $0xc] sm:$0xf]
  %v5545 = vld [vmem:[%s11 + $0x10] sm:$0xf]
  %v5546 = vld [vmem:[%s11 + $0x14] sm:$0xf]
  %v5547 = vld [vmem:[%s11 + $0x18] sm:$0xf]
  %v5548 = vld [vmem:[%s11 + $0x1c] sm:$0xf]
  %v5549 = vld [vmem:[%s11 + $0x20] sm:$0xf]
  %v5550 = vld [vmem:[%s11 + $0x24] sm:$0xf]
  %v5551 = vld [vmem:[%s11 + $0x28] sm:$0xf]
  %v5552 = vld [vmem:[%s11 + $0x2c] sm:$0xf]
  %v5553 = vld [vmem:[%s11 + $0x30] sm:$0xf]
  %v5554 = vld [vmem:[%s11 + $0x34] sm:$0xf]
  %v5555 = vld [vmem:[%s11 + $0x38] sm:$0xf]
  %v5556 = vld [vmem:[%s11 + $0x3c] sm:$0xf]
  %v5557 = vld [vmem:[%s11 + $0x40] sm:$0xf]
  %v5558 = vld [vmem:[%s11 + $0x44] sm:$0xf]
  %v5559 = vld [vmem:[%s11 + $0x48] sm:$0xf]
  %v5560 = vld [vmem:[%s11 + $0x4c] sm:$0xf]
  %v5561 = vld [vmem:[%s11 + $0x50] sm:$0xf]
  %v5562 = vld [vmem:[%s11 + $0x54] sm:$0xf]
  %v5563 = vld [vmem:[%s11 + $0x58] sm:$0xf]
  %v5564 = vld [vmem:[%s11 + $0x5c] sm:$0xf]
  %v5565 = vld [vmem:[%s11 + $0x60] sm:$0xf]
  %v5566 = vld [vmem:[%s11 + $0x64] sm:$0xf]
  %v5567 = vld [vmem:[%s11 + $0x68] sm:$0xf]
  %v5568 = vld [vmem:[%s11 + $0x6c] sm:$0xf]
  %v5569 = vld [vmem:[%s11 + $0x70] sm:$0xf]
  %v5570 = vld [vmem:[%s11 + $0x74] sm:$0xf]
  %v5571 = vld [vmem:[%s11 + $0x78] sm:$0xf]
  %v5572 = vld [vmem:[%s11 + $0x7c] sm:$0xf]
  %v5573 = vld [vmem:[%s11 + $0x80] sm:$0xf]
  %v5574 = vld [vmem:[%s11 + $0x84] sm:$0xf]
  %v5575 = vld [vmem:[%s11 + $0x88] sm:$0xf]
  %v5576 = vld [vmem:[%s11 + $0x8c] sm:$0xf]
  %v5577 = vld [vmem:[%s11 + $0x90] sm:$0xf]
  %v5578 = vld [vmem:[%s11 + $0x94] sm:$0xf]
  %v5579 = vld [vmem:[%s11 + $0x98] sm:$0xf]
  %v5580 = vld [vmem:[%s11 + $0x9c] sm:$0xf]
  %v5581 = vld [vmem:[%s11 + $0xa0] sm:$0xf]
  %v5582 = vld [vmem:[%s11 + $0xa4] sm:$0xf]
  %v5583 = vld [vmem:[%s11 + $0xa8] sm:$0xf]
  %v5584 = vld [vmem:[%s11 + $0xac] sm:$0xf]
  %v5585 = vld [vmem:[%s11 + $0xb0] sm:$0xf]
  %v5586 = vld [vmem:[%s11 + $0xb4] sm:$0xf]
  %v5587 = vld [vmem:[%s11 + $0xb8] sm:$0xf]
  %v5588 = vld [vmem:[%s11 + $0xbc] sm:$0xf]
  %v5589 = vld [vmem:[%s11 + $0xc0] sm:$0xf]
  %v5590 = vld [vmem:[%s11 + $0xc4] sm:$0xf]
  %v5591 = vld [vmem:[%s11 + $0xc8] sm:$0xf]
  %v5592 = vld [vmem:[%s11 + $0xcc] sm:$0xf]
  %v5593 = vld [vmem:[%s11 + $0xd0] sm:$0xf]
  %v5594 = vld [vmem:[%s11 + $0xd4] sm:$0xf]
  %v5595 = vld [vmem:[%s11 + $0xd8] sm:$0xf]
  %v5596 = vld [vmem:[%s11 + $0xdc] sm:$0xf]
  %v5597 = vld [vmem:[%s11 + $0xe0] sm:$0xf]
  %v5598 = vld [vmem:[%s11 + $0xe4] sm:$0xf]
  %v5599 = vld [vmem:[%s11 + $0xe8] sm:$0xf]
  %v5600 = vld [vmem:[%s11 + $0xec] sm:$0xf]
  %v5601 = vld [vmem:[%s11 + $0xf0] sm:$0xf]
  %v5602 = vld [vmem:[%s11 + $0xf4] sm:$0xf]
  %v5603 = vld [vmem:[%s11 + $0xf8] sm:$0xf]
  %v5604 = vld [vmem:[%s11 + $0xfc] sm:$0xf]
  %v5605 = vld [vmem:[%s12] sm:$0x1]
  %v5607 = vlaneseq
  %v5608 = vshrl.u32 %v5607, 7
  %v5609 = vsub.s32 0, %v5608
  %v5610 = vrot.slane %v5605, %v5609
  %v5676 = vunpack.c.l.b16 %v5541
  %v5677 = vunpack.c.l.b16 %v5542
  %v5678 = vunpack.c.l.b16 %v5543
  %v5679 = vunpack.c.l.b16 %v5544
  %v5680 = vunpack.c.l.b16 %v5545
  %v5681 = vunpack.c.l.b16 %v5546
  %v5682 = vunpack.c.l.b16 %v5547
  %v5683 = vunpack.c.l.b16 %v5548
  %v5684 = vunpack.c.l.b16 %v5549
  %v5685 = vunpack.c.l.b16 %v5550
  %v5686 = vunpack.c.l.b16 %v5551
  %v5687 = vunpack.c.l.b16 %v5552
  %v5688 = vunpack.c.l.b16 %v5553
  %v5689 = vunpack.c.l.b16 %v5554
  %v5690 = vunpack.c.l.b16 %v5555
  %v5691 = vunpack.c.l.b16 %v5556
  %v5692 = vunpack.c.l.b16 %v5557
  %v5693 = vunpack.c.l.b16 %v5558
  %v5694 = vunpack.c.l.b16 %v5559
  %v5695 = vunpack.c.l.b16 %v5560
  %v5696 = vunpack.c.l.b16 %v5561
  %v5697 = vunpack.c.l.b16 %v5562
  %v5698 = vunpack.c.l.b16 %v5563
  %v5699 = vunpack.c.l.b16 %v5564
  %v5700 = vunpack.c.l.b16 %v5565
  %v5701 = vunpack.c.l.b16 %v5566
  %v5702 = vunpack.c.l.b16 %v5567
  %v5703 = vunpack.c.l.b16 %v5568
  %v5704 = vunpack.c.l.b16 %v5569
  %v5705 = vunpack.c.l.b16 %v5570
  %v5706 = vunpack.c.l.b16 %v5571
  %v5707 = vunpack.c.l.b16 %v5572
  %v5708 = vunpack.c.l.b16 %v5573
  %v5709 = vunpack.c.l.b16 %v5574
  %v5710 = vunpack.c.l.b16 %v5575
  %v5711 = vunpack.c.l.b16 %v5576
  %v5712 = vunpack.c.l.b16 %v5577
  %v5713 = vunpack.c.l.b16 %v5578
  %v5714 = vunpack.c.l.b16 %v5579
  %v5715 = vunpack.c.l.b16 %v5580
  %v5716 = vunpack.c.l.b16 %v5581
  %v5717 = vunpack.c.l.b16 %v5582
  %v5718 = vunpack.c.l.b16 %v5583
  %v5719 = vunpack.c.l.b16 %v5584
  %v5720 = vunpack.c.l.b16 %v5585
  %v5721 = vunpack.c.l.b16 %v5586
  %v5722 = vunpack.c.l.b16 %v5587
  %v5723 = vunpack.c.l.b16 %v5588
  %v5724 = vunpack.c.l.b16 %v5589
  %v5725 = vunpack.c.l.b16 %v5590
  %v5726 = vunpack.c.l.b16 %v5591
  %v5727 = vunpack.c.l.b16 %v5592
  %v5728 = vunpack.c.l.b16 %v5593
  %v5729 = vunpack.c.l.b16 %v5594
  %v5730 = vunpack.c.l.b16 %v5595
  %v5731 = vunpack.c.l.b16 %v5596
  %v5732 = vunpack.c.l.b16 %v5597
  %v5733 = vunpack.c.l.b16 %v5598
  %v5734 = vunpack.c.l.b16 %v5599
  %v5735 = vunpack.c.l.b16 %v5600
  %v5736 = vunpack.c.l.b16 %v5601
  %v5737 = vunpack.c.l.b16 %v5602
  %v5738 = vunpack.c.l.b16 %v5603
  %v5739 = vunpack.c.l.b16 %v5604
  %v5740 = vpack.c.b16 %v5677, %v5676
  %v5741 = vpack.c.b16 %v5679, %v5678
  %v5742 = vpack.c.b16 %v5681, %v5680
  %v5743 = vpack.c.b16 %v5683, %v5682
  %v5744 = vpack.c.b16 %v5685, %v5684
  %v5745 = vpack.c.b16 %v5687, %v5686
  %v5746 = vpack.c.b16 %v5689, %v5688
  %v5747 = vpack.c.b16 %v5691, %v5690
  %v5748 = vpack.c.b16 %v5693, %v5692
  %v5749 = vpack.c.b16 %v5695, %v5694
  %v5750 = vpack.c.b16 %v5697, %v5696
  %v5751 = vpack.c.b16 %v5699, %v5698
  %v5752 = vpack.c.b16 %v5701, %v5700
  %v5753 = vpack.c.b16 %v5703, %v5702
  %v5754 = vpack.c.b16 %v5705, %v5704
  %v5755 = vpack.c.b16 %v5707, %v5706
  %v5756 = vpack.c.b16 %v5709, %v5708
  %v5757 = vpack.c.b16 %v5711, %v5710
  %v5758 = vpack.c.b16 %v5713, %v5712
  %v5759 = vpack.c.b16 %v5715, %v5714
  %v5760 = vpack.c.b16 %v5717, %v5716
  %v5761 = vpack.c.b16 %v5719, %v5718
  %v5762 = vpack.c.b16 %v5721, %v5720
  %v5763 = vpack.c.b16 %v5723, %v5722
  %v5764 = vpack.c.b16 %v5725, %v5724
  %v5765 = vpack.c.b16 %v5727, %v5726
  %v5766 = vpack.c.b16 %v5729, %v5728
  %v5767 = vpack.c.b16 %v5731, %v5730
  %v5768 = vpack.c.b16 %v5733, %v5732
  %v5769 = vpack.c.b16 %v5735, %v5734
  %v5770 = vpack.c.b16 %v5737, %v5736
  %v5771 = vpack.c.b16 %v5739, %v5738
  %5804 = vmatprep.subr.bf16.mxu0 0
  %5805 = vmatpush1.bf16.msra.mxu0 %v5740
  %5806 = vmatprep.subr.bf16.mxu0 0
  %5807 = vmatpush1.bf16.msra.mxu0 %v5741
  %5808 = vmatprep.subr.bf16.mxu0 0
  %5809 = vmatpush1.bf16.msra.mxu0 %v5742
  %5810 = vmatprep.subr.bf16.mxu0 0
  %5811 = vmatpush1.bf16.msra.mxu0 %v5743
  %5812 = vmatprep.subr.bf16.mxu0 0
  %5813 = vmatpush1.bf16.msra.mxu0 %v5744
  %5814 = vmatprep.subr.bf16.mxu0 0
  %5815 = vmatpush1.bf16.msra.mxu0 %v5745
  %5816 = vmatprep.subr.bf16.mxu0 0
  %5817 = vmatpush1.bf16.msra.mxu0 %v5746
  %5818 = vmatprep.subr.bf16.mxu0 0
  %5819 = vmatpush1.bf16.msra.mxu0 %v5747
  %5820 = vmatprep.subr.bf16.mxu0 0
  %5821 = vmatpush1.bf16.msra.mxu0 %v5748
  %5822 = vmatprep.subr.bf16.mxu0 0
  %5823 = vmatpush1.bf16.msra.mxu0 %v5749
  %5824 = vmatprep.subr.bf16.mxu0 0
  %5825 = vmatpush1.bf16.msra.mxu0 %v5750
  %5826 = vmatprep.subr.bf16.mxu0 0
  %5827 = vmatpush1.bf16.msra.mxu0 %v5751
  %5828 = vmatprep.subr.bf16.mxu0 0
  %5829 = vmatpush1.bf16.msra.mxu0 %v5752
  %5830 = vmatprep.subr.bf16.mxu0 0
  %5831 = vmatpush1.bf16.msra.mxu0 %v5753
  %5832 = vmatprep.subr.bf16.mxu0 0
  %5833 = vmatpush1.bf16.msra.mxu0 %v5754
  %5834 = vmatprep.subr.bf16.mxu0 0
  %5835 = vmatpush1.bf16.msra.mxu0 %v5755
  %5836 = vmatprep.mubr.bf16.mxu0 %v5538
  %5837 = vmatmul.mubr.bf16.gmra.mrb[0].mxu0 %v5537
  %v5838 = vpop.f32.mrb[0].mxu0
  %v5839 = vadd.f32 %v5610, %v5838
  %v5840 = vpop.f32.mrb[0].mxu0
  %v5841 = vpop.f32.mrb[0].mxu0
  %v5842 = vpop.f32.mrb[0].mxu0
  %5843 = vdwg.mxu0
  %5844 = vmatprep.subr.bf16.mxu0 0
  %5845 = vmatpush1.bf16.msra.mxu0 %v5756
  %5846 = vmatprep.subr.bf16.mxu0 0
  %5847 = vmatpush1.bf16.msra.mxu0 %v5757
  %5848 = vmatprep.subr.bf16.mxu0 0
  %5849 = vmatpush1.bf16.msra.mxu0 %v5758
  %5850 = vmatprep.subr.bf16.mxu0 0
  %5851 = vmatpush1.bf16.msra.mxu0 %v5759
  %5852 = vmatprep.subr.bf16.mxu0 0
  %5853 = vmatpush1.bf16.msra.mxu0 %v5760
  %5854 = vmatprep.subr.bf16.mxu0 0
  %5855 = vmatpush1.bf16.msra.mxu0 %v5761
  %5856 = vmatprep.subr.bf16.mxu0 0
  %5857 = vmatpush1.bf16.msra.mxu0 %v5762
  %5858 = vmatprep.subr.bf16.mxu0 0
  %5859 = vmatpush1.bf16.msra.mxu0 %v5763
  %5860 = vmatprep.subr.bf16.mxu0 0
  %5861 = vmatpush1.bf16.msra.mxu0 %v5764
  %5862 = vmatprep.subr.bf16.mxu0 0
  %5863 = vmatpush1.bf16.msra.mxu0 %v5765
  %5864 = vmatprep.subr.bf16.mxu0 0
  %5865 = vmatpush1.bf16.msra.mxu0 %v5766
  %5866 = vmatprep.subr.bf16.mxu0 0
  %5867 = vmatpush1.bf16.msra.mxu0 %v5767
  %5868 = vmatprep.subr.bf16.mxu0 0
  %5869 = vmatpush1.bf16.msra.mxu0 %v5768
  %5870 = vmatprep.subr.bf16.mxu0 0
  %5871 = vmatpush1.bf16.msra.mxu0 %v5769
  %5872 = vmatprep.subr.bf16.mxu0 0
  %5873 = vmatpush1.bf16.msra.mxu0 %v5770
  %5874 = vmatprep.subr.bf16.mxu0 0
  %5875 = vmatpush1.bf16.msra.mxu0 %v5771
  %5876 = vmatprep.mubr.bf16.mxu0 %v5540
  %5877 = vmatmul.mubr.bf16.gmra.mrb[0].mxu0 %v5539
  %v5878 = vpop.f32.mrb[0].mxu0
  %v5879 = vadd.f32 %v5839, %v5878
  %v5880 = vpop.f32.mrb[0].mxu0
  %v5881 = vpop.f32.mrb[0].mxu0
  %v5882 = vpop.f32.mrb[0].mxu0
  %5883 = vdwg.mxu0
  %5884 = vst [vmem:[%s13] sm:$0xff] %v5879
  // Predicated region
  $region54: #{roberta_with_numerical_forward.1} parent=0 // pred_check
    _
  $region55: #{roberta_with_numerical_forward.1} parent=0 // pred_check_branch
    %5886 = sbr.rel (0) target = $region57
  $region56: #{roberta_with_numerical_forward.1} parent=0 // pred_region
    _
  $region57: #{roberta_with_numerical_forward.1} parent=0 // pred_fallthru
    _
  // Predicated region
  $region58: #{roberta_with_numerical_forward.1} parent=0 // pred_check
    _
  $region59: #{roberta_with_numerical_forward.1} parent=0 // pred_check_branch
    %5888 = sbr.rel (0) target = $region61
  $region60: #{roberta_with_numerical_forward.1} parent=0 // pred_region
    _
  $region61: #{roberta_with_numerical_forward.1} parent=0 // pred_fallthru
    _

</llo_original>
